<compile_context>
chip_gen: v5e
topology: v5e:2x2
jax: 0.10.0
libtpu: 0.0.40
codegen_flags: <defaults>
</compile_context>

<pallas_src>
import functools

import jax
import jax.numpy as jnp
from jax.experimental import pallas as pl
from jax.experimental.pallas import tpu as pltpu

_LN_EPS = 1e-5
_BN_EPS = 1e-5
_BF16 = jnp.bfloat16
_F32 = jnp.float32


# --------------------------------------------------------------------------
# The single fused kernel (one grid step per batch block)
# --------------------------------------------------------------------------
def _transformer_kernel(
    x_ref,                                   # (Bblk, T, Cin)          f32
    c1w_ref, c1b_ref,                        # (Cin, Cout) bf16, (1, Cout) f32
    g1_ref, be1_ref,                         # (T, Cout) f32 x2
    c2w_ref, c2b_ref,                        # (F, T) bf16, (F, 1) f32
    g2_ref, be2_ref,                         # (F, Cout) f32 x2
    pe_ref,                                  # (F, D) f32
    wqkv_ref, bqkv_ref,                      # (L, D, 3D) bf16, (L, 1, 3D) f32
    wo_ref, bo_ref,                          # (L, D, D) bf16, (L, 1, D) f32
    eg1_ref, eb1_ref,                        # (L, 1, D) f32 x2
    w1_ref, b1_ref,                          # (L, D, Fh) bf16, (L, 1, Fh) f32
    w2_ref, b2_ref,                          # (L, Fh, D) bf16, (L, 1, D) f32
    eg2_ref, eb2_ref,                        # (L, 1, D) f32 x2
    mw1_ref, mb1_ref,                        # (D, hid) bf16 [BN folded], (1, hid) f32
    mw2_ref, mb2_ref,                        # (hid, LANE) bf16 [padded], (1, LANE) f32
    o_ref,                                   # (Bblk, F, LANE) f32
    *, n_layers, n_head):

    Bblk, T, Cin = x_ref.shape
    F, D = pe_ref.shape
    dk = D // n_head
    scale = 1.0 / float(dk) ** 0.5
    M = Bblk * F                             # encoder tokens in this block

    def mm(a, w):
        # bf16 MXU matmul with f32 accumulation (weights already bf16).
        return jnp.dot(a.astype(_BF16), w.astype(_BF16),
                       preferred_element_type=_F32)

    def slab_ln_relu(t, g, b):
        # nn.LayerNorm over the per-sample [rows, cols] slab + ReLU (f32).
        mu = jnp.mean(jnp.mean(t, axis=2, keepdims=True), axis=1, keepdims=True)
        d = t - mu
        var = jnp.mean(jnp.mean(d * d, axis=2, keepdims=True), axis=1,
                       keepdims=True)
        y = d * jax.lax.rsqrt(var + _LN_EPS)
        return jnp.maximum(y * g + b, 0.0)

    def token_ln(t, g, b):
        # LayerNorm(d_model) per token (residual add fused by the caller).
        mu = jnp.mean(t, axis=-1, keepdims=True)
        var = jnp.mean((t - mu) ** 2, axis=-1, keepdims=True)
        return (t - mu) * jax.lax.rsqrt(var + _LN_EPS) * g + b

    # --- front end: conv1d(k=1) over channels, batch flattened into M dim
    x2 = x_ref[...].reshape(Bblk * T, Cin)
    y = mm(x2, c1w_ref[...]) + c1b_ref[...]                 # (Bblk*T, Cout)
    y3 = slab_ln_relu(y.reshape(Bblk, T, D), g1_ref[...], be1_ref[...])

    # --- conv1d over frames (contracts the per-sample T axis) + LN + ReLU
    z = [mm(c2w_ref[...], y3[b]) + c2b_ref[...] for b in range(Bblk)]
    h3 = slab_ln_relu(jnp.stack(z, axis=0), g2_ref[...], be2_ref[...])

    # --- encoder: sinusoidal PE; identity (all-ones) mask is dead work
    h3 = h3 + pe_ref[...]
    h = h3.reshape(M, D)                                    # flat tokens (M, D)

    # NOTE: at realistic L / d_model, move this loop onto an "arbitrary" grid
    # axis so only one layer's weights are resident in VMEM at a time.
    for l in range(n_layers):
        # fused QKV projection on the flattened token axis: one (M, 3D) matmul
        qkv = mm(h, wqkv_ref[l]) + bqkv_ref[l]              # (M, 3D) f32
        qkv3 = qkv.reshape(Bblk, F, 3 * D)

        # multi-head attention, batched over the sample block per head.
        # (head-batched dot_general would need lane->sublane reshapes at
        #  dk=8, which is riskier/slower than these in-vreg lane slices.)
        ctx = []
        for hd in range(n_head):
            lo = hd * dk
            qh = qkv3[:, :, lo:lo + dk]
            kh = qkv3[:, :, D + lo:D + lo + dk]
            vh = qkv3[:, :, 2 * D + lo:2 * D + lo + dk]
            s = jnp.einsum('bqd,bkd->bqk', qh.astype(_BF16), kh.astype(_BF16),
                           preferred_element_type=_F32) * scale
            s = s - jnp.max(s, axis=-1, keepdims=True)
            p = jnp.exp(s)
            p = p / jnp.sum(p, axis=-1, keepdims=True)      # exact softmax
            ctx.append(jnp.einsum('bqk,bkd->bqd',
                                  p.astype(_BF16), vh.astype(_BF16),
                                  preferred_element_type=_F32))
        # lane-concat the heads (in-vreg at D=32), single output projection
        ctx2 = jnp.concatenate(ctx, axis=-1).reshape(M, D)
        attn = mm(ctx2, wo_ref[l]) + bo_ref[l]              # one (M,D)@(D,D)

        # dropout is a no-op at inference; residual adds fused into the norms
        x1 = token_ln(h + attn, eg1_ref[l], eb1_ref[l])
        ff = jnp.maximum(mm(x1, w1_ref[l]) + b1_ref[l], 0.0)
        ff = mm(ff, w2_ref[l]) + b2_ref[l]
        h = token_ln(x1 + ff, eg2_ref[l], eb2_ref[l])

    # --- MLP head: Linear -> (folded eval BatchNorm) -> ReLU -> Linear
    m1 = jnp.maximum(mm(h, mw1_ref[...]) + mb1_ref[...], 0.0)
    # lane-dense (128-wide, zero-padded) class output; wrapper slices classes
    out = mm(m1, mw2_ref[...]) + mb2_ref[...]               # (M, LANE)
    o_ref[...] = out.reshape(o_ref.shape)


# --------------------------------------------------------------------------
# Wrapper glue (plain JAX): weight folding/padding, PE table, pallas_call
# --------------------------------------------------------------------------
def sinusoidal_positional_encoding(max_len, d_model):
    pos = jnp.arange(max_len, dtype=jnp.float32)[:, None]
    i = jnp.arange(0, d_model, 2, dtype=jnp.float32)[None, :]
    angle = pos / jnp.power(10000.0, i / d_model)
    pe = jnp.zeros((max_len, d_model), jnp.float32)
    pe = pe.at[:, 0::2].set(jnp.sin(angle))
    pe = pe.at[:, 1::2].set(jnp.cos(angle))
    return pe


def _bcast(arr):
    """BlockSpec for a weight broadcast across the batch grid (full block,
    constant index map -> DMA'd only once)."""
    zeros = (0,) * arr.ndim
    return pl.BlockSpec(arr.shape, lambda b, _z=zeros: _z)


def transformer_forward(x, params, *, n_head, n_layers, num_class, max_len,
                        batch_block=8):
    # x: (B, C_in, T)  -- PyTorch Conv1d NCT layout
    B, Cin, T = x.shape
    Cout = params["conv1_w"].shape[1]
    F = params["conv2_w"].shape[0]
    D = Cout
    Fh = params["w1"].shape[2]
    hid = params["mlp_w1"].shape[1]
    lane = max(128, ((num_class + 127) // 128) * 128)

    # Batch blocking: amortize the ~0.35us per-grid-step overhead, while
    # keeping >= 2 grid steps (when B >= 2) so v7x shards across both TCs.
    n_steps = 1 if B == 1 else max(2, -(-B // batch_block))
    b_blk = -(-B // n_steps)
    Bpad = n_steps * b_blk

    bf = jnp.bfloat16

    # Fold eval-mode BatchNorm1d into the first MLP-head linear.
    # TODO(synk): training-mode BatchNorm1d (batch statistics) not implemented;
    # eval-mode running-stat normalization is folded into the weights instead.
    bn_scale = params["bn_g"] * jax.lax.rsqrt(params["bn_rv"] + _BN_EPS)
    mw1 = (params["mlp_w1"] * bn_scale).astype(bf)
    mb1 = (params["mlp_b1"] - params["bn_rm"]) * bn_scale + params["bn_b"]

    # Pad the class head to a lane-dense 128-wide output slab (unmasked stores).
    mw2 = (jnp.zeros((hid, lane), jnp.float32)
           .at[:, :num_class].set(params["mlp_w2"])).astype(bf)
    mb2 = jnp.zeros((1, lane), jnp.float32).at[:, :num_class].set(params["mlp_b2"])

    # Sinusoidal positional encoding slice (trace-time table).
    # TODO(synk): the reference Encoder class is not provided; a standard
    # sinusoidal-PE + post-norm encoder stack is implemented here.
    pe = sinusoidal_positional_encoding(max_len, D)[:F]

    # One tiny NCT -> NTC relayout of the raw input; pad batch to the block.
    xt = jnp.transpose(x, (0, 2, 1))                       # (B, T, Cin)
    if Bpad != B:
        xt = jnp.pad(xt, ((0, Bpad - B), (0, 0), (0, 0)))

    inputs = (
        xt,
        params["conv1_w"].astype(bf), params["conv1_b"],
        params["ln1_g"], params["ln1_b"],
        params["conv2_w"].astype(bf), params["conv2_b"],
        params["ln2_g"], params["ln2_b"],
        pe,
        params["wqkv"].astype(bf), params["bqkv"],
        params["wo"].astype(bf), params["bo"],
        params["eln1_g"], params["eln1_b"],
        params["w1"].astype(bf), params["b1"],
        params["w2"].astype(bf), params["b2"],
        params["eln2_g"], params["eln2_b"],
        mw1, mb1, mw2, mb2,
    )

    in_specs = [pl.BlockSpec((b_blk, T, Cin), lambda b: (b, 0, 0))]
    in_specs += [_bcast(a) for a in inputs[1:]]

    # Advisory cost estimate so XLA overlaps the surrounding transpose/slice.
    tokens = Bpad * F
    dk = D // n_head
    flops = 2 * Bpad * T * Cin * Cout + 2 * Bpad * F * T * Cout
    flops += n_layers * (2 * tokens * D * 3 * D
                         + 4 * Bpad * n_head * F * F * dk
                         + 2 * tokens * D * D
                         + 4 * tokens * D * Fh)
    flops += 2 * tokens * D * hid + 2 * tokens * hid * lane
    transcendentals = n_layers * Bpad * n_head * F * F
    bytes_accessed = sum(int(a.size) * a.dtype.itemsize for a in inputs)
    bytes_accessed += Bpad * F * lane * 4

    out = pl.pallas_call(
        functools.partial(_transformer_kernel, n_layers=n_layers, n_head=n_head),
        out_shape=jax.ShapeDtypeStruct((Bpad, F, lane), jnp.float32),
        grid=(n_steps,),
        in_specs=in_specs,
        out_specs=pl.BlockSpec((b_blk, F, lane), lambda b: (b, 0, 0)),
        compiler_params=pltpu.CompilerParams(
            dimension_semantics=("parallel",),
            vmem_limit_bytes=48 * 1024 * 1024),
        cost_estimate=pl.CostEstimate(
            flops=int(flops),
            transcendentals=int(transcendentals),
            bytes_accessed=int(bytes_accessed)),
    )(*inputs)

    return out[:B, :, :num_class]


# --------------------------------------------------------------------------
# Deterministic parameter initialization (shapes from the module __init__)
# --------------------------------------------------------------------------
def init_params(key, in_channels, out_channels, in_frames, out_frames,
                d_model, ffn_hidden, n_layers, num_class):
    keys = iter(jax.random.split(key, 16))

    def w(shape):
        return 0.02 * jax.random.normal(next(keys), shape, jnp.float32)

    hid = out_channels // 2
    L = n_layers
    p = {
        # front end
        "conv1_w": w((in_channels, out_channels)),
        "conv1_b": jnp.zeros((1, out_channels), jnp.float32),
        "ln1_g": jnp.ones((in_frames, out_channels), jnp.float32),
        "ln1_b": jnp.zeros((in_frames, out_channels), jnp.float32),
        "conv2_w": w((out_frames, in_frames)),          # PyTorch (out, in) layout
        "conv2_b": jnp.zeros((out_frames, 1), jnp.float32),
        "ln2_g": jnp.ones((out_frames, out_channels), jnp.float32),
        "ln2_b": jnp.zeros((out_frames, out_channels), jnp.float32),
        # encoder layers, stacked along a leading layer axis (fused QKV)
        "wqkv": w((L, d_model, 3 * d_model)),
        "bqkv": jnp.zeros((L, 1, 3 * d_model), jnp.float32),
        "wo": w((L, d_model, d_model)),
        "bo": jnp.zeros((L, 1, d_model), jnp.float32),
        "eln1_g": jnp.ones((L, 1, d_model), jnp.float32),
        "eln1_b": jnp.zeros((L, 1, d_model), jnp.float32),
        "w1": w((L, d_model, ffn_hidden)),
        "b1": jnp.zeros((L, 1, ffn_hidden), jnp.float32),
        "w2": w((L, ffn_hidden, d_model)),
        "b2": jnp.zeros((L, 1, d_model), jnp.float32),
        "eln2_g": jnp.ones((L, 1, d_model), jnp.float32),
        "eln2_b": jnp.zeros((L, 1, d_model), jnp.float32),
        # MLP head + eval-mode BatchNorm running statistics
        "mlp_w1": w((d_model, hid)),
        "mlp_b1": jnp.zeros((1, hid), jnp.float32),
        "bn_g": jnp.ones((1, hid), jnp.float32),
        "bn_b": jnp.zeros((1, hid), jnp.float32),
        "bn_rm": jnp.zeros((1, hid), jnp.float32),
        "bn_rv": jnp.ones((1, hid), jnp.float32),
        "mlp_w2": w((hid, num_class)),
        "mlp_b2": jnp.zeros((1, num_class), jnp.float32),
    }
    return p


# --------------------------------------------------------------------------
if __name__ == "__main__":
    # Module hyperparameters (small, consistent with the forward pass):
    B = 2
    in_channels, out_channels = 4, 32
    in_frames, out_frames = 16, 8
    d_model, n_head = 32, 4            # d_model must equal out_channels
    max_len, ffn_hidden = 64, 64
    n_layers, num_class = 2, 5

    key = jax.random.PRNGKey(0)
    kx, kp = jax.random.split(key)
    x = jax.random.normal(kx, (B, in_channels, in_frames), jnp.float32)

    params = init_params(kp, in_channels, out_channels, in_frames, out_frames,
                         d_model, ffn_hidden, n_layers, num_class)

    out = transformer_forward(x, params, n_head=n_head, n_layers=n_layers,
                              num_class=num_class, max_len=max_len)
    out = jax.block_until_ready(out)

    assert out.shape == (B, out_frames, num_class), out.shape
    assert bool(jnp.all(jnp.isfinite(out)))
    print("KERNEL_OK")
</pallas_src>

<mosaic_0001>
module attributes {stable_mosaic.version = 11 : i64} {
  func.func @_transformer_kernel(%arg0: i32, %arg1: memref<1x16x4xf32, #tpu.memory_space<vmem>>, %arg2: memref<4x32xbf16, #tpu.memory_space<vmem>>, %arg3: memref<1x32xf32, #tpu.memory_space<vmem>>, %arg4: memref<16x32xf32, #tpu.memory_space<vmem>>, %arg5: memref<16x32xf32, #tpu.memory_space<vmem>>, %arg6: memref<8x16xbf16, #tpu.memory_space<vmem>>, %arg7: memref<8x1xf32, #tpu.memory_space<vmem>>, %arg8: memref<8x32xf32, #tpu.memory_space<vmem>>, %arg9: memref<8x32xf32, #tpu.memory_space<vmem>>, %arg10: memref<8x32xf32, #tpu.memory_space<vmem>>, %arg11: memref<2x32x96xbf16, #tpu.memory_space<vmem>>, %arg12: memref<2x1x96xf32, #tpu.memory_space<vmem>>, %arg13: memref<2x32x32xbf16, #tpu.memory_space<vmem>>, %arg14: memref<2x1x32xf32, #tpu.memory_space<vmem>>, %arg15: memref<2x1x32xf32, #tpu.memory_space<vmem>>, %arg16: memref<2x1x32xf32, #tpu.memory_space<vmem>>, %arg17: memref<2x32x64xbf16, #tpu.memory_space<vmem>>, %arg18: memref<2x1x64xf32, #tpu.memory_space<vmem>>, %arg19: memref<2x64x32xbf16, #tpu.memory_space<vmem>>, %arg20: memref<2x1x32xf32, #tpu.memory_space<vmem>>, %arg21: memref<2x1x32xf32, #tpu.memory_space<vmem>>, %arg22: memref<2x1x32xf32, #tpu.memory_space<vmem>>, %arg23: memref<32x16xbf16, #tpu.memory_space<vmem>>, %arg24: memref<1x16xf32, #tpu.memory_space<vmem>>, %arg25: memref<16x128xbf16, #tpu.memory_space<vmem>>, %arg26: memref<1x128xf32, #tpu.memory_space<vmem>>, %arg27: memref<1x8x128xf32, #tpu.memory_space<vmem>>) attributes {dimension_semantics = [#tpu.dimension_semantics<parallel>], iteration_bounds = array<i64: 2>, scalar_prefetch = 0 : i64, scratch_operands = 0 : i64, tpu.core_type = #tpu.core_type<tc>, window_params = [{transform_indices = @transform_0, window_bounds = array<i64: 1, 16, 4>}, {pipeline_mode = #tpu.pipeline_mode<synchronous>, transform_indices = @transform_1, window_bounds = array<i64: 4, 32>}, {pipeline_mode = #tpu.pipeline_mode<synchronous>, transform_indices = @transform_2, window_bounds = array<i64: 1, 32>}, {pipeline_mode = #tpu.pipeline_mode<synchronous>, transform_indices = @transform_3, window_bounds = array<i64: 16, 32>}, {pipeline_mode = #tpu.pipeline_mode<synchronous>, transform_indices = @transform_4, window_bounds = array<i64: 16, 32>}, {pipeline_mode = #tpu.pipeline_mode<synchronous>, transform_indices = @transform_5, window_bounds = array<i64: 8, 16>}, {pipeline_mode = #tpu.pipeline_mode<synchronous>, transform_indices = @transform_6, window_bounds = array<i64: 8, 1>}, {pipeline_mode = #tpu.pipeline_mode<synchronous>, transform_indices = @transform_7, window_bounds = array<i64: 8, 32>}, {pipeline_mode = #tpu.pipeline_mode<synchronous>, transform_indices = @transform_8, window_bounds = array<i64: 8, 32>}, {pipeline_mode = #tpu.pipeline_mode<synchronous>, transform_indices = @transform_9, window_bounds = array<i64: 8, 32>}, {pipeline_mode = #tpu.pipeline_mode<synchronous>, transform_indices = @transform_10, window_bounds = array<i64: 2, 32, 96>}, {pipeline_mode = #tpu.pipeline_mode<synchronous>, transform_indices = @transform_11, window_bounds = array<i64: 2, 1, 96>}, {pipeline_mode = #tpu.pipeline_mode<synchronous>, transform_indices = @transform_12, window_bounds = array<i64: 2, 32, 32>}, {pipeline_mode = #tpu.pipeline_mode<synchronous>, transform_indices = @transform_13, window_bounds = array<i64: 2, 1, 32>}, {pipeline_mode = #tpu.pipeline_mode<synchronous>, transform_indices = @transform_14, window_bounds = array<i64: 2, 1, 32>}, {pipeline_mode = #tpu.pipeline_mode<synchronous>, transform_indices = @transform_15, window_bounds = array<i64: 2, 1, 32>}, {pipeline_mode = #tpu.pipeline_mode<synchronous>, transform_indices = @transform_16, window_bounds = array<i64: 2, 32, 64>}, {pipeline_mode = #tpu.pipeline_mode<synchronous>, transform_indices = @transform_17, window_bounds = array<i64: 2, 1, 64>}, {pipeline_mode = #tpu.pipeline_mode<synchronous>, transform_indices = @transform_18, window_bounds = array<i64: 2, 64, 32>}, {pipeline_mode = #tpu.pipeline_mode<synchronous>, transform_indices = @transform_19, window_bounds = array<i64: 2, 1, 32>}, {pipeline_mode = #tpu.pipeline_mode<synchronous>, transform_indices = @transform_20, window_bounds = array<i64: 2, 1, 32>}, {pipeline_mode = #tpu.pipeline_mode<synchronous>, transform_indices = @transform_21, window_bounds = array<i64: 2, 1, 32>}, {pipeline_mode = #tpu.pipeline_mode<synchronous>, transform_indices = @transform_22, window_bounds = array<i64: 32, 16>}, {pipeline_mode = #tpu.pipeline_mode<synchronous>, transform_indices = @transform_23, window_bounds = array<i64: 1, 16>}, {pipeline_mode = #tpu.pipeline_mode<synchronous>, transform_indices = @transform_24, window_bounds = array<i64: 16, 128>}, {pipeline_mode = #tpu.pipeline_mode<synchronous>, transform_indices = @transform_25, window_bounds = array<i64: 1, 128>}, {transform_indices = @transform_26, window_bounds = array<i64: 1, 8, 128>}]} {
    %c0 = arith.constant 0 : index
    %c0_0 = arith.constant 0 : index
    %c0_1 = arith.constant 0 : index
    %0 = vector.load %arg1[%c0, %c0_0, %c0_1] : memref<1x16x4xf32, #tpu.memory_space<vmem>>, vector<1x16x4xf32>
    %1 = vector.shape_cast %0 : vector<1x16x4xf32> to vector<16x4xf32>
    %c0_2 = arith.constant 0 : index
    %c0_3 = arith.constant 0 : index
    %2 = vector.load %arg2[%c0_2, %c0_3] : memref<4x32xbf16, #tpu.memory_space<vmem>>, vector<4x32xbf16>
    %3 = arith.truncf %1 : vector<16x4xf32> to vector<16x4xbf16>
    %cst = arith.constant dense<0.000000e+00> : vector<16x32xf32>
    %4 = tpu.matmul %3, %2, %cst {dimension_numbers = #tpu.dot_dimension_numbers<[1], [0], [0], [1], [0, 0, 1, 1], [], []>} : vector<16x4xbf16>, vector<4x32xbf16>, vector<16x32xf32> -> vector<16x32xf32>
    %c0_4 = arith.constant 0 : index
    %c0_5 = arith.constant 0 : index
    %5 = vector.load %arg3[%c0_4, %c0_5] : memref<1x32xf32, #tpu.memory_space<vmem>>, vector<1x32xf32>
    %6 = vector.broadcast %5 : vector<1x32xf32> to vector<16x32xf32>
    %7 = arith.addf %4, %6 : vector<16x32xf32>
    %8 = vector.shape_cast %7 : vector<16x32xf32> to vector<1x16x32xf32>
    %c0_6 = arith.constant 0 : index
    %c0_7 = arith.constant 0 : index
    %9 = vector.load %arg4[%c0_6, %c0_7] : memref<16x32xf32, #tpu.memory_space<vmem>>, vector<16x32xf32>
    %c0_8 = arith.constant 0 : index
    %c0_9 = arith.constant 0 : index
    %10 = vector.load %arg5[%c0_8, %c0_9] : memref<16x32xf32, #tpu.memory_space<vmem>>, vector<16x32xf32>
    %cst_10 = arith.constant dense<0.000000e+00> : vector<1x16xf32>
    %11 = vector.multi_reduction <add>, %8, %cst_10 [2] : vector<1x16x32xf32> to vector<1x16xf32>
    %12 = vector.shape_cast %11 : vector<1x16xf32> to vector<1x16x1xf32>
    %cst_11 = arith.constant 3.200000e+01 : f32
    %13 = vector.broadcast %cst_11 : f32 to vector<1x16x1xf32>
    %14 = arith.divf %12, %13 : vector<1x16x1xf32>
    %cst_12 = arith.constant dense<0.000000e+00> : vector<1x1xf32>
    %15 = vector.multi_reduction <add>, %14, %cst_12 [1] : vector<1x16x1xf32> to vector<1x1xf32>
    %16 = vector.shape_cast %15 : vector<1x1xf32> to vector<1x1x1xf32>
    %cst_13 = arith.constant 1.600000e+01 : f32
    %17 = vector.broadcast %cst_13 : f32 to vector<1x1x1xf32>
    %18 = arith.divf %16, %17 : vector<1x1x1xf32>
    %19 = vector.broadcast %18 : vector<1x1x1xf32> to vector<1x16x32xf32>
    %20 = arith.subf %8, %19 : vector<1x16x32xf32>
    %21 = arith.mulf %20, %20 : vector<1x16x32xf32>
    %cst_14 = arith.constant dense<0.000000e+00> : vector<1x16xf32>
    %22 = vector.multi_reduction <add>, %21, %cst_14 [2] : vector<1x16x32xf32> to vector<1x16xf32>
    %23 = vector.shape_cast %22 : vector<1x16xf32> to vector<1x16x1xf32>
    %cst_15 = arith.constant 3.200000e+01 : f32
    %24 = vector.broadcast %cst_15 : f32 to vector<1x16x1xf32>
    %25 = arith.divf %23, %24 : vector<1x16x1xf32>
    %cst_16 = arith.constant dense<0.000000e+00> : vector<1x1xf32>
    %26 = vector.multi_reduction <add>, %25, %cst_16 [1] : vector<1x16x1xf32> to vector<1x1xf32>
    %27 = vector.shape_cast %26 : vector<1x1xf32> to vector<1x1x1xf32>
    %cst_17 = arith.constant 1.600000e+01 : f32
    %28 = vector.broadcast %cst_17 : f32 to vector<1x1x1xf32>
    %29 = arith.divf %27, %28 : vector<1x1x1xf32>
    %cst_18 = arith.constant 9.99999974E-6 : f32
    %30 = vector.broadcast %cst_18 : f32 to vector<1x1x1xf32>
    %31 = arith.addf %29, %30 : vector<1x1x1xf32>
    %32 = math.rsqrt %31 : vector<1x1x1xf32>
    %33 = vector.broadcast %32 : vector<1x1x1xf32> to vector<1x16x32xf32>
    %34 = arith.mulf %20, %33 : vector<1x16x32xf32>
    %35 = vector.shape_cast %9 : vector<16x32xf32> to vector<1x16x32xf32>
    %36 = arith.mulf %34, %35 : vector<1x16x32xf32>
    %37 = vector.shape_cast %10 : vector<16x32xf32> to vector<1x16x32xf32>
    %38 = arith.addf %36, %37 : vector<1x16x32xf32>
    %cst_19 = arith.constant 0.000000e+00 : f32
    %39 = vector.broadcast %cst_19 : f32 to vector<1x16x32xf32>
    %40 = arith.maximumf %38, %39 : vector<1x16x32xf32>
    %c0_20 = arith.constant 0 : index
    %c0_21 = arith.constant 0 : index
    %41 = vector.load %arg6[%c0_20, %c0_21] : memref<8x16xbf16, #tpu.memory_space<vmem>>, vector<8x16xbf16>
    %42 = vector.shape_cast %40 : vector<1x16x32xf32> to vector<16x32xf32>
    %43 = arith.truncf %42 : vector<16x32xf32> to vector<16x32xbf16>
    %cst_22 = arith.constant dense<0.000000e+00> : vector<8x32xf32>
    %44 = tpu.matmul %41, %43, %cst_22 {dimension_numbers = #tpu.dot_dimension_numbers<[1], [0], [0], [1], [0, 0, 1, 1], [], []>} : vector<8x16xbf16>, vector<16x32xbf16>, vector<8x32xf32> -> vector<8x32xf32>
    %c0_23 = arith.constant 0 : index
    %c0_24 = arith.constant 0 : index
    %45 = vector.load %arg7[%c0_23, %c0_24] : memref<8x1xf32, #tpu.memory_space<vmem>>, vector<8x1xf32>
    %46 = vector.broadcast %45 : vector<8x1xf32> to vector<8x32xf32>
    %47 = arith.addf %44, %46 : vector<8x32xf32>
    %48 = vector.shape_cast %47 : vector<8x32xf32> to vector<1x8x32xf32>
    %c0_25 = arith.constant 0 : index
    %c0_26 = arith.constant 0 : index
    %49 = vector.load %arg8[%c0_25, %c0_26] : memref<8x32xf32, #tpu.memory_space<vmem>>, vector<8x32xf32>
    %c0_27 = arith.constant 0 : index
    %c0_28 = arith.constant 0 : index
    %50 = vector.load %arg9[%c0_27, %c0_28] : memref<8x32xf32, #tpu.memory_space<vmem>>, vector<8x32xf32>
    %cst_29 = arith.constant dense<0.000000e+00> : vector<1x8xf32>
    %51 = vector.multi_reduction <add>, %48, %cst_29 [2] : vector<1x8x32xf32> to vector<1x8xf32>
    %52 = vector.shape_cast %51 : vector<1x8xf32> to vector<1x8x1xf32>
    %cst_30 = arith.constant 3.200000e+01 : f32
    %53 = vector.broadcast %cst_30 : f32 to vector<1x8x1xf32>
    %54 = arith.divf %52, %53 : vector<1x8x1xf32>
    %cst_31 = arith.constant dense<0.000000e+00> : vector<1x1xf32>
    %55 = vector.multi_reduction <add>, %54, %cst_31 [1] : vector<1x8x1xf32> to vector<1x1xf32>
    %56 = vector.shape_cast %55 : vector<1x1xf32> to vector<1x1x1xf32>
    %cst_32 = arith.constant 8.000000e+00 : f32
    %57 = vector.broadcast %cst_32 : f32 to vector<1x1x1xf32>
    %58 = arith.divf %56, %57 : vector<1x1x1xf32>
    %59 = vector.broadcast %58 : vector<1x1x1xf32> to vector<1x8x32xf32>
    %60 = arith.subf %48, %59 : vector<1x8x32xf32>
    %61 = arith.mulf %60, %60 : vector<1x8x32xf32>
    %cst_33 = arith.constant dense<0.000000e+00> : vector<1x8xf32>
    %62 = vector.multi_reduction <add>, %61, %cst_33 [2] : vector<1x8x32xf32> to vector<1x8xf32>
    %63 = vector.shape_cast %62 : vector<1x8xf32> to vector<1x8x1xf32>
    %cst_34 = arith.constant 3.200000e+01 : f32
    %64 = vector.broadcast %cst_34 : f32 to vector<1x8x1xf32>
    %65 = arith.divf %63, %64 : vector<1x8x1xf32>
    %cst_35 = arith.constant dense<0.000000e+00> : vector<1x1xf32>
    %66 = vector.multi_reduction <add>, %65, %cst_35 [1] : vector<1x8x1xf32> to vector<1x1xf32>
    %67 = vector.shape_cast %66 : vector<1x1xf32> to vector<1x1x1xf32>
    %cst_36 = arith.constant 8.000000e+00 : f32
    %68 = vector.broadcast %cst_36 : f32 to vector<1x1x1xf32>
    %69 = arith.divf %67, %68 : vector<1x1x1xf32>
    %cst_37 = arith.constant 9.99999974E-6 : f32
    %70 = vector.broadcast %cst_37 : f32 to vector<1x1x1xf32>
    %71 = arith.addf %69, %70 : vector<1x1x1xf32>
    %72 = math.rsqrt %71 : vector<1x1x1xf32>
    %73 = vector.broadcast %72 : vector<1x1x1xf32> to vector<1x8x32xf32>
    %74 = arith.mulf %60, %73 : vector<1x8x32xf32>
    %75 = vector.shape_cast %49 : vector<8x32xf32> to vector<1x8x32xf32>
    %76 = arith.mulf %74, %75 : vector<1x8x32xf32>
    %77 = vector.shape_cast %50 : vector<8x32xf32> to vector<1x8x32xf32>
    %78 = arith.addf %76, %77 : vector<1x8x32xf32>
    %cst_38 = arith.constant 0.000000e+00 : f32
    %79 = vector.broadcast %cst_38 : f32 to vector<1x8x32xf32>
    %80 = arith.maximumf %78, %79 : vector<1x8x32xf32>
    %c0_39 = arith.constant 0 : index
    %c0_40 = arith.constant 0 : index
    %81 = vector.load %arg10[%c0_39, %c0_40] : memref<8x32xf32, #tpu.memory_space<vmem>>, vector<8x32xf32>
    %82 = vector.shape_cast %81 : vector<8x32xf32> to vector<1x8x32xf32>
    %83 = arith.addf %80, %82 : vector<1x8x32xf32>
    %84 = vector.shape_cast %83 : vector<1x8x32xf32> to vector<8x32xf32>
    %c0_41 = arith.constant 0 : index
    %c0_42 = arith.constant 0 : index
    %c0_43 = arith.constant 0 : index
    %85 = vector.load %arg11[%c0_41, %c0_42, %c0_43] : memref<2x32x96xbf16, #tpu.memory_space<vmem>>, vector<1x32x96xbf16>
    %86 = vector.shape_cast %85 : vector<1x32x96xbf16> to vector<32x96xbf16>
    %87 = arith.truncf %84 : vector<8x32xf32> to vector<8x32xbf16>
    %cst_44 = arith.constant dense<0.000000e+00> : vector<8x96xf32>
    %88 = tpu.matmul %87, %86, %cst_44 {dimension_numbers = #tpu.dot_dimension_numbers<[1], [0], [0], [1], [0, 0, 1, 1], [], []>} : vector<8x32xbf16>, vector<32x96xbf16>, vector<8x96xf32> -> vector<8x96xf32>
    %c0_45 = arith.constant 0 : index
    %c0_46 = arith.constant 0 : index
    %c0_47 = arith.constant 0 : index
    %89 = vector.load %arg12[%c0_45, %c0_46, %c0_47] : memref<2x1x96xf32, #tpu.memory_space<vmem>>, vector<1x1x96xf32>
    %90 = vector.shape_cast %89 : vector<1x1x96xf32> to vector<1x96xf32>
    %91 = vector.broadcast %90 : vector<1x96xf32> to vector<8x96xf32>
    %92 = arith.addf %88, %91 : vector<8x96xf32>
    %93 = vector.shape_cast %92 : vector<8x96xf32> to vector<1x8x96xf32>
    %94 = vector.extract_strided_slice %93 {offsets = [0, 0, 0], sizes = [1, 8, 8], strides = [1, 1, 1]} : vector<1x8x96xf32> to vector<1x8x8xf32>
    %95 = vector.extract_strided_slice %93 {offsets = [0, 0, 32], sizes = [1, 8, 8], strides = [1, 1, 1]} : vector<1x8x96xf32> to vector<1x8x8xf32>
    %96 = vector.extract_strided_slice %93 {offsets = [0, 0, 64], sizes = [1, 8, 8], strides = [1, 1, 1]} : vector<1x8x96xf32> to vector<1x8x8xf32>
    %97 = arith.truncf %94 : vector<1x8x8xf32> to vector<1x8x8xbf16>
    %98 = arith.truncf %95 : vector<1x8x8xf32> to vector<1x8x8xbf16>
    "tpu.trace_start"() <{level = 10 : i32, message = "bqd,bkd->bqk"}> : () -> ()
    %cst_48 = arith.constant dense<0.000000e+00> : vector<1x8x8xf32>
    %99 = tpu.matmul %97, %98, %cst_48 {dimension_numbers = #tpu.dot_dimension_numbers<[2], [2], [1], [1], [0, 0, 0, 1, 1, 1], [0], [0]>} : vector<1x8x8xbf16>, vector<1x8x8xbf16>, vector<1x8x8xf32> -> vector<1x8x8xf32>
    "tpu.trace_stop"() : () -> ()
    %cst_49 = arith.constant 0.353553385 : f32
    %100 = vector.broadcast %cst_49 : f32 to vector<1x8x8xf32>
    %101 = arith.mulf %99, %100 : vector<1x8x8xf32>
    %cst_50 = arith.constant dense<0xFF800000> : vector<1x8xf32>
    %102 = vector.multi_reduction <maximumf>, %101, %cst_50 [2] : vector<1x8x8xf32> to vector<1x8xf32>
    %103 = vector.shape_cast %102 : vector<1x8xf32> to vector<1x8x1xf32>
    %104 = vector.broadcast %103 : vector<1x8x1xf32> to vector<1x8x8xf32>
    %105 = arith.subf %101, %104 : vector<1x8x8xf32>
    %106 = math.exp %105 : vector<1x8x8xf32>
    %cst_51 = arith.constant dense<0.000000e+00> : vector<1x8xf32>
    %107 = vector.multi_reduction <add>, %106, %cst_51 [2] : vector<1x8x8xf32> to vector<1x8xf32>
    %108 = vector.shape_cast %107 : vector<1x8xf32> to vector<1x8x1xf32>
    %109 = vector.broadcast %108 : vector<1x8x1xf32> to vector<1x8x8xf32>
    %110 = arith.divf %106, %109 : vector<1x8x8xf32>
    %111 = arith.truncf %110 : vector<1x8x8xf32> to vector<1x8x8xbf16>
    %112 = arith.truncf %96 : vector<1x8x8xf32> to vector<1x8x8xbf16>
    "tpu.trace_start"() <{level = 10 : i32, message = "bqk,bkd->bqd"}> : () -> ()
    %cst_52 = arith.constant dense<0.000000e+00> : vector<1x8x8xf32>
    %113 = tpu.matmul %111, %112, %cst_52 {dimension_numbers = #tpu.dot_dimension_numbers<[2], [1], [1], [2], [0, 0, 0, 1, 1, 2], [0], [0]>} : vector<1x8x8xbf16>, vector<1x8x8xbf16>, vector<1x8x8xf32> -> vector<1x8x8xf32>
    "tpu.trace_stop"() : () -> ()
    %114 = vector.extract_strided_slice %93 {offsets = [0, 0, 8], sizes = [1, 8, 8], strides = [1, 1, 1]} : vector<1x8x96xf32> to vector<1x8x8xf32>
    %115 = vector.extract_strided_slice %93 {offsets = [0, 0, 40], sizes = [1, 8, 8], strides = [1, 1, 1]} : vector<1x8x96xf32> to vector<1x8x8xf32>
    %116 = vector.extract_strided_slice %93 {offsets = [0, 0, 72], sizes = [1, 8, 8], strides = [1, 1, 1]} : vector<1x8x96xf32> to vector<1x8x8xf32>
    %117 = arith.truncf %114 : vector<1x8x8xf32> to vector<1x8x8xbf16>
    %118 = arith.truncf %115 : vector<1x8x8xf32> to vector<1x8x8xbf16>
    "tpu.trace_start"() <{level = 10 : i32, message = "bqd,bkd->bqk"}> : () -> ()
    %cst_53 = arith.constant dense<0.000000e+00> : vector<1x8x8xf32>
    %119 = tpu.matmul %117, %118, %cst_53 {dimension_numbers = #tpu.dot_dimension_numbers<[2], [2], [1], [1], [0, 0, 0, 1, 1, 1], [0], [0]>} : vector<1x8x8xbf16>, vector<1x8x8xbf16>, vector<1x8x8xf32> -> vector<1x8x8xf32>
    "tpu.trace_stop"() : () -> ()
    %cst_54 = arith.constant 0.353553385 : f32
    %120 = vector.broadcast %cst_54 : f32 to vector<1x8x8xf32>
    %121 = arith.mulf %119, %120 : vector<1x8x8xf32>
    %cst_55 = arith.constant dense<0xFF800000> : vector<1x8xf32>
    %122 = vector.multi_reduction <maximumf>, %121, %cst_55 [2] : vector<1x8x8xf32> to vector<1x8xf32>
    %123 = vector.shape_cast %122 : vector<1x8xf32> to vector<1x8x1xf32>
    %124 = vector.broadcast %123 : vector<1x8x1xf32> to vector<1x8x8xf32>
    %125 = arith.subf %121, %124 : vector<1x8x8xf32>
    %126 = math.exp %125 : vector<1x8x8xf32>
    %cst_56 = arith.constant dense<0.000000e+00> : vector<1x8xf32>
    %127 = vector.multi_reduction <add>, %126, %cst_56 [2] : vector<1x8x8xf32> to vector<1x8xf32>
    %128 = vector.shape_cast %127 : vector<1x8xf32> to vector<1x8x1xf32>
    %129 = vector.broadcast %128 : vector<1x8x1xf32> to vector<1x8x8xf32>
    %130 = arith.divf %126, %129 : vector<1x8x8xf32>
    %131 = arith.truncf %130 : vector<1x8x8xf32> to vector<1x8x8xbf16>
    %132 = arith.truncf %116 : vector<1x8x8xf32> to vector<1x8x8xbf16>
    "tpu.trace_start"() <{level = 10 : i32, message = "bqk,bkd->bqd"}> : () -> ()
    %cst_57 = arith.constant dense<0.000000e+00> : vector<1x8x8xf32>
    %133 = tpu.matmul %131, %132, %cst_57 {dimension_numbers = #tpu.dot_dimension_numbers<[2], [1], [1], [2], [0, 0, 0, 1, 1, 2], [0], [0]>} : vector<1x8x8xbf16>, vector<1x8x8xbf16>, vector<1x8x8xf32> -> vector<1x8x8xf32>
    "tpu.trace_stop"() : () -> ()
    %134 = vector.extract_strided_slice %93 {offsets = [0, 0, 16], sizes = [1, 8, 8], strides = [1, 1, 1]} : vector<1x8x96xf32> to vector<1x8x8xf32>
    %135 = vector.extract_strided_slice %93 {offsets = [0, 0, 48], sizes = [1, 8, 8], strides = [1, 1, 1]} : vector<1x8x96xf32> to vector<1x8x8xf32>
    %136 = vector.extract_strided_slice %93 {offsets = [0, 0, 80], sizes = [1, 8, 8], strides = [1, 1, 1]} : vector<1x8x96xf32> to vector<1x8x8xf32>
    %137 = arith.truncf %134 : vector<1x8x8xf32> to vector<1x8x8xbf16>
    %138 = arith.truncf %135 : vector<1x8x8xf32> to vector<1x8x8xbf16>
    "tpu.trace_start"() <{level = 10 : i32, message = "bqd,bkd->bqk"}> : () -> ()
    %cst_58 = arith.constant dense<0.000000e+00> : vector<1x8x8xf32>
    %139 = tpu.matmul %137, %138, %cst_58 {dimension_numbers = #tpu.dot_dimension_numbers<[2], [2], [1], [1], [0, 0, 0, 1, 1, 1], [0], [0]>} : vector<1x8x8xbf16>, vector<1x8x8xbf16>, vector<1x8x8xf32> -> vector<1x8x8xf32>
    "tpu.trace_stop"() : () -> ()
    %cst_59 = arith.constant 0.353553385 : f32
    %140 = vector.broadcast %cst_59 : f32 to vector<1x8x8xf32>
    %141 = arith.mulf %139, %140 : vector<1x8x8xf32>
    %cst_60 = arith.constant dense<0xFF800000> : vector<1x8xf32>
    %142 = vector.multi_reduction <maximumf>, %141, %cst_60 [2] : vector<1x8x8xf32> to vector<1x8xf32>
    %143 = vector.shape_cast %142 : vector<1x8xf32> to vector<1x8x1xf32>
    %144 = vector.broadcast %143 : vector<1x8x1xf32> to vector<1x8x8xf32>
    %145 = arith.subf %141, %144 : vector<1x8x8xf32>
    %146 = math.exp %145 : vector<1x8x8xf32>
    %cst_61 = arith.constant dense<0.000000e+00> : vector<1x8xf32>
    %147 = vector.multi_reduction <add>, %146, %cst_61 [2] : vector<1x8x8xf32> to vector<1x8xf32>
    %148 = vector.shape_cast %147 : vector<1x8xf32> to vector<1x8x1xf32>
    %149 = vector.broadcast %148 : vector<1x8x1xf32> to vector<1x8x8xf32>
    %150 = arith.divf %146, %149 : vector<1x8x8xf32>
    %151 = arith.truncf %150 : vector<1x8x8xf32> to vector<1x8x8xbf16>
    %152 = arith.truncf %136 : vector<1x8x8xf32> to vector<1x8x8xbf16>
    "tpu.trace_start"() <{level = 10 : i32, message = "bqk,bkd->bqd"}> : () -> ()
    %cst_62 = arith.constant dense<0.000000e+00> : vector<1x8x8xf32>
    %153 = tpu.matmul %151, %152, %cst_62 {dimension_numbers = #tpu.dot_dimension_numbers<[2], [1], [1], [2], [0, 0, 0, 1, 1, 2], [0], [0]>} : vector<1x8x8xbf16>, vector<1x8x8xbf16>, vector<1x8x8xf32> -> vector<1x8x8xf32>
    "tpu.trace_stop"() : () -> ()
    %154 = vector.extract_strided_slice %93 {offsets = [0, 0, 24], sizes = [1, 8, 8], strides = [1, 1, 1]} : vector<1x8x96xf32> to vector<1x8x8xf32>
    %155 = vector.extract_strided_slice %93 {offsets = [0, 0, 56], sizes = [1, 8, 8], strides = [1, 1, 1]} : vector<1x8x96xf32> to vector<1x8x8xf32>
    %156 = vector.extract_strided_slice %93 {offsets = [0, 0, 88], sizes = [1, 8, 8], strides = [1, 1, 1]} : vector<1x8x96xf32> to vector<1x8x8xf32>
    %157 = arith.truncf %154 : vector<1x8x8xf32> to vector<1x8x8xbf16>
    %158 = arith.truncf %155 : vector<1x8x8xf32> to vector<1x8x8xbf16>
    "tpu.trace_start"() <{level = 10 : i32, message = "bqd,bkd->bqk"}> : () -> ()
    %cst_63 = arith.constant dense<0.000000e+00> : vector<1x8x8xf32>
    %159 = tpu.matmul %157, %158, %cst_63 {dimension_numbers = #tpu.dot_dimension_numbers<[2], [2], [1], [1], [0, 0, 0, 1, 1, 1], [0], [0]>} : vector<1x8x8xbf16>, vector<1x8x8xbf16>, vector<1x8x8xf32> -> vector<1x8x8xf32>
    "tpu.trace_stop"() : () -> ()
    %cst_64 = arith.constant 0.353553385 : f32
    %160 = vector.broadcast %cst_64 : f32 to vector<1x8x8xf32>
    %161 = arith.mulf %159, %160 : vector<1x8x8xf32>
    %cst_65 = arith.constant dense<0xFF800000> : vector<1x8xf32>
    %162 = vector.multi_reduction <maximumf>, %161, %cst_65 [2] : vector<1x8x8xf32> to vector<1x8xf32>
    %163 = vector.shape_cast %162 : vector<1x8xf32> to vector<1x8x1xf32>
    %164 = vector.broadcast %163 : vector<1x8x1xf32> to vector<1x8x8xf32>
    %165 = arith.subf %161, %164 : vector<1x8x8xf32>
    %166 = math.exp %165 : vector<1x8x8xf32>
    %cst_66 = arith.constant dense<0.000000e+00> : vector<1x8xf32>
    %167 = vector.multi_reduction <add>, %166, %cst_66 [2] : vector<1x8x8xf32> to vector<1x8xf32>
    %168 = vector.shape_cast %167 : vector<1x8xf32> to vector<1x8x1xf32>
    %169 = vector.broadcast %168 : vector<1x8x1xf32> to vector<1x8x8xf32>
    %170 = arith.divf %166, %169 : vector<1x8x8xf32>
    %171 = arith.truncf %170 : vector<1x8x8xf32> to vector<1x8x8xbf16>
    %172 = arith.truncf %156 : vector<1x8x8xf32> to vector<1x8x8xbf16>
    "tpu.trace_start"() <{level = 10 : i32, message = "bqk,bkd->bqd"}> : () -> ()
    %cst_67 = arith.constant dense<0.000000e+00> : vector<1x8x8xf32>
    %173 = tpu.matmul %171, %172, %cst_67 {dimension_numbers = #tpu.dot_dimension_numbers<[2], [1], [1], [2], [0, 0, 0, 1, 1, 2], [0], [0]>} : vector<1x8x8xbf16>, vector<1x8x8xbf16>, vector<1x8x8xf32> -> vector<1x8x8xf32>
    "tpu.trace_stop"() : () -> ()
    %174 = tpu.concatenate %113, %133, %153, %173 in 2 : vector<1x8x8xf32>, vector<1x8x8xf32>, vector<1x8x8xf32>, vector<1x8x8xf32> -> vector<1x8x32xf32>
    %175 = vector.shape_cast %174 : vector<1x8x32xf32> to vector<8x32xf32>
    %c0_68 = arith.constant 0 : index
    %c0_69 = arith.constant 0 : index
    %c0_70 = arith.constant 0 : index
    %176 = vector.load %arg13[%c0_68, %c0_69, %c0_70] : memref<2x32x32xbf16, #tpu.memory_space<vmem>>, vector<1x32x32xbf16>
    %177 = vector.shape_cast %176 : vector<1x32x32xbf16> to vector<32x32xbf16>
    %178 = arith.truncf %175 : vector<8x32xf32> to vector<8x32xbf16>
    %cst_71 = arith.constant dense<0.000000e+00> : vector<8x32xf32>
    %179 = tpu.matmul %178, %177, %cst_71 {dimension_numbers = #tpu.dot_dimension_numbers<[1], [0], [0], [1], [0, 0, 1, 1], [], []>} : vector<8x32xbf16>, vector<32x32xbf16>, vector<8x32xf32> -> vector<8x32xf32>
    %c0_72 = arith.constant 0 : index
    %c0_73 = arith.constant 0 : index
    %c0_74 = arith.constant 0 : index
    %180 = vector.load %arg14[%c0_72, %c0_73, %c0_74] : memref<2x1x32xf32, #tpu.memory_space<vmem>>, vector<1x1x32xf32>
    %181 = vector.shape_cast %180 : vector<1x1x32xf32> to vector<1x32xf32>
    %182 = vector.broadcast %181 : vector<1x32xf32> to vector<8x32xf32>
    %183 = arith.addf %179, %182 : vector<8x32xf32>
    %184 = arith.addf %84, %183 : vector<8x32xf32>
    %c0_75 = arith.constant 0 : index
    %c0_76 = arith.constant 0 : index
    %c0_77 = arith.constant 0 : index
    %185 = vector.load %arg15[%c0_75, %c0_76, %c0_77] : memref<2x1x32xf32, #tpu.memory_space<vmem>>, vector<1x1x32xf32>
    %186 = vector.shape_cast %185 : vector<1x1x32xf32> to vector<1x32xf32>
    %c0_78 = arith.constant 0 : index
    %c0_79 = arith.constant 0 : index
    %c0_80 = arith.constant 0 : index
    %187 = vector.load %arg16[%c0_78, %c0_79, %c0_80] : memref<2x1x32xf32, #tpu.memory_space<vmem>>, vector<1x1x32xf32>
    %188 = vector.shape_cast %187 : vector<1x1x32xf32> to vector<1x32xf32>
    %cst_81 = arith.constant dense<0.000000e+00> : vector<8xf32>
    %189 = vector.multi_reduction <add>, %184, %cst_81 [1] : vector<8x32xf32> to vector<8xf32>
    %190 = vector.shape_cast %189 : vector<8xf32> to vector<8x1xf32>
    %cst_82 = arith.constant 3.200000e+01 : f32
    %191 = vector.broadcast %cst_82 : f32 to vector<8x1xf32>
    %192 = arith.divf %190, %191 : vector<8x1xf32>
    %193 = vector.broadcast %192 : vector<8x1xf32> to vector<8x32xf32>
    %194 = arith.subf %184, %193 : vector<8x32xf32>
    %195 = arith.mulf %194, %194 : vector<8x32xf32>
    %cst_83 = arith.constant dense<0.000000e+00> : vector<8xf32>
    %196 = vector.multi_reduction <add>, %195, %cst_83 [1] : vector<8x32xf32> to vector<8xf32>
    %197 = vector.shape_cast %196 : vector<8xf32> to vector<8x1xf32>
    %cst_84 = arith.constant 3.200000e+01 : f32
    %198 = vector.broadcast %cst_84 : f32 to vector<8x1xf32>
    %199 = arith.divf %197, %198 : vector<8x1xf32>
    %200 = vector.broadcast %192 : vector<8x1xf32> to vector<8x32xf32>
    %201 = arith.subf %184, %200 : vector<8x32xf32>
    %cst_85 = arith.constant 9.99999974E-6 : f32
    %202 = vector.broadcast %cst_85 : f32 to vector<8x1xf32>
    %203 = arith.addf %199, %202 : vector<8x1xf32>
    %204 = math.rsqrt %203 : vector<8x1xf32>
    %205 = vector.broadcast %204 : vector<8x1xf32> to vector<8x32xf32>
    %206 = arith.mulf %201, %205 : vector<8x32xf32>
    %207 = vector.broadcast %186 : vector<1x32xf32> to vector<8x32xf32>
    %208 = arith.mulf %206, %207 : vector<8x32xf32>
    %209 = vector.broadcast %188 : vector<1x32xf32> to vector<8x32xf32>
    %210 = arith.addf %208, %209 : vector<8x32xf32>
    %c0_86 = arith.constant 0 : index
    %c0_87 = arith.constant 0 : index
    %c0_88 = arith.constant 0 : index
    %211 = vector.load %arg17[%c0_86, %c0_87, %c0_88] : memref<2x32x64xbf16, #tpu.memory_space<vmem>>, vector<1x32x64xbf16>
    %212 = vector.shape_cast %211 : vector<1x32x64xbf16> to vector<32x64xbf16>
    %213 = arith.truncf %210 : vector<8x32xf32> to vector<8x32xbf16>
    %cst_89 = arith.constant dense<0.000000e+00> : vector<8x64xf32>
    %214 = tpu.matmul %213, %212, %cst_89 {dimension_numbers = #tpu.dot_dimension_numbers<[1], [0], [0], [1], [0, 0, 1, 1], [], []>} : vector<8x32xbf16>, vector<32x64xbf16>, vector<8x64xf32> -> vector<8x64xf32>
    %c0_90 = arith.constant 0 : index
    %c0_91 = arith.constant 0 : index
    %c0_92 = arith.constant 0 : index
    %215 = vector.load %arg18[%c0_90, %c0_91, %c0_92] : memref<2x1x64xf32, #tpu.memory_space<vmem>>, vector<1x1x64xf32>
    %216 = vector.shape_cast %215 : vector<1x1x64xf32> to vector<1x64xf32>
    %217 = vector.broadcast %216 : vector<1x64xf32> to vector<8x64xf32>
    %218 = arith.addf %214, %217 : vector<8x64xf32>
    %cst_93 = arith.constant 0.000000e+00 : f32
    %219 = vector.broadcast %cst_93 : f32 to vector<8x64xf32>
    %220 = arith.maximumf %218, %219 : vector<8x64xf32>
    %c0_94 = arith.constant 0 : index
    %c0_95 = arith.constant 0 : index
    %c0_96 = arith.constant 0 : index
    %221 = vector.load %arg19[%c0_94, %c0_95, %c0_96] : memref<2x64x32xbf16, #tpu.memory_space<vmem>>, vector<1x64x32xbf16>
    %222 = vector.shape_cast %221 : vector<1x64x32xbf16> to vector<64x32xbf16>
    %223 = arith.truncf %220 : vector<8x64xf32> to vector<8x64xbf16>
    %cst_97 = arith.constant dense<0.000000e+00> : vector<8x32xf32>
    %224 = tpu.matmul %223, %222, %cst_97 {dimension_numbers = #tpu.dot_dimension_numbers<[1], [0], [0], [1], [0, 0, 1, 1], [], []>} : vector<8x64xbf16>, vector<64x32xbf16>, vector<8x32xf32> -> vector<8x32xf32>
    %c0_98 = arith.constant 0 : index
    %c0_99 = arith.constant 0 : index
    %c0_100 = arith.constant 0 : index
    %225 = vector.load %arg20[%c0_98, %c0_99, %c0_100] : memref<2x1x32xf32, #tpu.memory_space<vmem>>, vector<1x1x32xf32>
    %226 = vector.shape_cast %225 : vector<1x1x32xf32> to vector<1x32xf32>
    %227 = vector.broadcast %226 : vector<1x32xf32> to vector<8x32xf32>
    %228 = arith.addf %224, %227 : vector<8x32xf32>
    %229 = arith.addf %210, %228 : vector<8x32xf32>
    %c0_101 = arith.constant 0 : index
    %c0_102 = arith.constant 0 : index
    %c0_103 = arith.constant 0 : index
    %230 = vector.load %arg21[%c0_101, %c0_102, %c0_103] : memref<2x1x32xf32, #tpu.memory_space<vmem>>, vector<1x1x32xf32>
    %231 = vector.shape_cast %230 : vector<1x1x32xf32> to vector<1x32xf32>
    %c0_104 = arith.constant 0 : index
    %c0_105 = arith.constant 0 : index
    %c0_106 = arith.constant 0 : index
    %232 = vector.load %arg22[%c0_104, %c0_105, %c0_106] : memref<2x1x32xf32, #tpu.memory_space<vmem>>, vector<1x1x32xf32>
    %233 = vector.shape_cast %232 : vector<1x1x32xf32> to vector<1x32xf32>
    %cst_107 = arith.constant dense<0.000000e+00> : vector<8xf32>
    %234 = vector.multi_reduction <add>, %229, %cst_107 [1] : vector<8x32xf32> to vector<8xf32>
    %235 = vector.shape_cast %234 : vector<8xf32> to vector<8x1xf32>
    %cst_108 = arith.constant 3.200000e+01 : f32
    %236 = vector.broadcast %cst_108 : f32 to vector<8x1xf32>
    %237 = arith.divf %235, %236 : vector<8x1xf32>
    %238 = vector.broadcast %237 : vector<8x1xf32> to vector<8x32xf32>
    %239 = arith.subf %229, %238 : vector<8x32xf32>
    %240 = arith.mulf %239, %239 : vector<8x32xf32>
    %cst_109 = arith.constant dense<0.000000e+00> : vector<8xf32>
    %241 = vector.multi_reduction <add>, %240, %cst_109 [1] : vector<8x32xf32> to vector<8xf32>
    %242 = vector.shape_cast %241 : vector<8xf32> to vector<8x1xf32>
    %cst_110 = arith.constant 3.200000e+01 : f32
    %243 = vector.broadcast %cst_110 : f32 to vector<8x1xf32>
    %244 = arith.divf %242, %243 : vector<8x1xf32>
    %245 = vector.broadcast %237 : vector<8x1xf32> to vector<8x32xf32>
    %246 = arith.subf %229, %245 : vector<8x32xf32>
    %cst_111 = arith.constant 9.99999974E-6 : f32
    %247 = vector.broadcast %cst_111 : f32 to vector<8x1xf32>
    %248 = arith.addf %244, %247 : vector<8x1xf32>
    %249 = math.rsqrt %248 : vector<8x1xf32>
    %250 = vector.broadcast %249 : vector<8x1xf32> to vector<8x32xf32>
    %251 = arith.mulf %246, %250 : vector<8x32xf32>
    %252 = vector.broadcast %231 : vector<1x32xf32> to vector<8x32xf32>
    %253 = arith.mulf %251, %252 : vector<8x32xf32>
    %254 = vector.broadcast %233 : vector<1x32xf32> to vector<8x32xf32>
    %255 = arith.addf %253, %254 : vector<8x32xf32>
    %c1 = arith.constant 1 : index
    %c0_112 = arith.constant 0 : index
    %c0_113 = arith.constant 0 : index
    %256 = vector.load %arg11[%c1, %c0_112, %c0_113] : memref<2x32x96xbf16, #tpu.memory_space<vmem>>, vector<1x32x96xbf16>
    %257 = vector.shape_cast %256 : vector<1x32x96xbf16> to vector<32x96xbf16>
    %258 = arith.truncf %255 : vector<8x32xf32> to vector<8x32xbf16>
    %cst_114 = arith.constant dense<0.000000e+00> : vector<8x96xf32>
    %259 = tpu.matmul %258, %257, %cst_114 {dimension_numbers = #tpu.dot_dimension_numbers<[1], [0], [0], [1], [0, 0, 1, 1], [], []>} : vector<8x32xbf16>, vector<32x96xbf16>, vector<8x96xf32> -> vector<8x96xf32>
    %c1_115 = arith.constant 1 : index
    %c0_116 = arith.constant 0 : index
    %c0_117 = arith.constant 0 : index
    %260 = vector.load %arg12[%c1_115, %c0_116, %c0_117] : memref<2x1x96xf32, #tpu.memory_space<vmem>>, vector<1x1x96xf32>
    %261 = vector.shape_cast %260 : vector<1x1x96xf32> to vector<1x96xf32>
    %262 = vector.broadcast %261 : vector<1x96xf32> to vector<8x96xf32>
    %263 = arith.addf %259, %262 : vector<8x96xf32>
    %264 = vector.shape_cast %263 : vector<8x96xf32> to vector<1x8x96xf32>
    %265 = vector.extract_strided_slice %264 {offsets = [0, 0, 0], sizes = [1, 8, 8], strides = [1, 1, 1]} : vector<1x8x96xf32> to vector<1x8x8xf32>
    %266 = vector.extract_strided_slice %264 {offsets = [0, 0, 32], sizes = [1, 8, 8], strides = [1, 1, 1]} : vector<1x8x96xf32> to vector<1x8x8xf32>
    %267 = vector.extract_strided_slice %264 {offsets = [0, 0, 64], sizes = [1, 8, 8], strides = [1, 1, 1]} : vector<1x8x96xf32> to vector<1x8x8xf32>
    %268 = arith.truncf %265 : vector<1x8x8xf32> to vector<1x8x8xbf16>
    %269 = arith.truncf %266 : vector<1x8x8xf32> to vector<1x8x8xbf16>
    "tpu.trace_start"() <{level = 10 : i32, message = "bqd,bkd->bqk"}> : () -> ()
    %cst_118 = arith.constant dense<0.000000e+00> : vector<1x8x8xf32>
    %270 = tpu.matmul %268, %269, %cst_118 {dimension_numbers = #tpu.dot_dimension_numbers<[2], [2], [1], [1], [0, 0, 0, 1, 1, 1], [0], [0]>} : vector<1x8x8xbf16>, vector<1x8x8xbf16>, vector<1x8x8xf32> -> vector<1x8x8xf32>
    "tpu.trace_stop"() : () -> ()
    %cst_119 = arith.constant 0.353553385 : f32
    %271 = vector.broadcast %cst_119 : f32 to vector<1x8x8xf32>
    %272 = arith.mulf %270, %271 : vector<1x8x8xf32>
    %cst_120 = arith.constant dense<0xFF800000> : vector<1x8xf32>
    %273 = vector.multi_reduction <maximumf>, %272, %cst_120 [2] : vector<1x8x8xf32> to vector<1x8xf32>
    %274 = vector.shape_cast %273 : vector<1x8xf32> to vector<1x8x1xf32>
    %275 = vector.broadcast %274 : vector<1x8x1xf32> to vector<1x8x8xf32>
    %276 = arith.subf %272, %275 : vector<1x8x8xf32>
    %277 = math.exp %276 : vector<1x8x8xf32>
    %cst_121 = arith.constant dense<0.000000e+00> : vector<1x8xf32>
    %278 = vector.multi_reduction <add>, %277, %cst_121 [2] : vector<1x8x8xf32> to vector<1x8xf32>
    %279 = vector.shape_cast %278 : vector<1x8xf32> to vector<1x8x1xf32>
    %280 = vector.broadcast %279 : vector<1x8x1xf32> to vector<1x8x8xf32>
    %281 = arith.divf %277, %280 : vector<1x8x8xf32>
    %282 = arith.truncf %281 : vector<1x8x8xf32> to vector<1x8x8xbf16>
    %283 = arith.truncf %267 : vector<1x8x8xf32> to vector<1x8x8xbf16>
    "tpu.trace_start"() <{level = 10 : i32, message = "bqk,bkd->bqd"}> : () -> ()
    %cst_122 = arith.constant dense<0.000000e+00> : vector<1x8x8xf32>
    %284 = tpu.matmul %282, %283, %cst_122 {dimension_numbers = #tpu.dot_dimension_numbers<[2], [1], [1], [2], [0, 0, 0, 1, 1, 2], [0], [0]>} : vector<1x8x8xbf16>, vector<1x8x8xbf16>, vector<1x8x8xf32> -> vector<1x8x8xf32>
    "tpu.trace_stop"() : () -> ()
    %285 = vector.extract_strided_slice %264 {offsets = [0, 0, 8], sizes = [1, 8, 8], strides = [1, 1, 1]} : vector<1x8x96xf32> to vector<1x8x8xf32>
    %286 = vector.extract_strided_slice %264 {offsets = [0, 0, 40], sizes = [1, 8, 8], strides = [1, 1, 1]} : vector<1x8x96xf32> to vector<1x8x8xf32>
    %287 = vector.extract_strided_slice %264 {offsets = [0, 0, 72], sizes = [1, 8, 8], strides = [1, 1, 1]} : vector<1x8x96xf32> to vector<1x8x8xf32>
    %288 = arith.truncf %285 : vector<1x8x8xf32> to vector<1x8x8xbf16>
    %289 = arith.truncf %286 : vector<1x8x8xf32> to vector<1x8x8xbf16>
    "tpu.trace_start"() <{level = 10 : i32, message = "bqd,bkd->bqk"}> : () -> ()
    %cst_123 = arith.constant dense<0.000000e+00> : vector<1x8x8xf32>
    %290 = tpu.matmul %288, %289, %cst_123 {dimension_numbers = #tpu.dot_dimension_numbers<[2], [2], [1], [1], [0, 0, 0, 1, 1, 1], [0], [0]>} : vector<1x8x8xbf16>, vector<1x8x8xbf16>, vector<1x8x8xf32> -> vector<1x8x8xf32>
    "tpu.trace_stop"() : () -> ()
    %cst_124 = arith.constant 0.353553385 : f32
    %291 = vector.broadcast %cst_124 : f32 to vector<1x8x8xf32>
    %292 = arith.mulf %290, %291 : vector<1x8x8xf32>
    %cst_125 = arith.constant dense<0xFF800000> : vector<1x8xf32>
    %293 = vector.multi_reduction <maximumf>, %292, %cst_125 [2] : vector<1x8x8xf32> to vector<1x8xf32>
    %294 = vector.shape_cast %293 : vector<1x8xf32> to vector<1x8x1xf32>
    %295 = vector.broadcast %294 : vector<1x8x1xf32> to vector<1x8x8xf32>
    %296 = arith.subf %292, %295 : vector<1x8x8xf32>
    %297 = math.exp %296 : vector<1x8x8xf32>
    %cst_126 = arith.constant dense<0.000000e+00> : vector<1x8xf32>
    %298 = vector.multi_reduction <add>, %297, %cst_126 [2] : vector<1x8x8xf32> to vector<1x8xf32>
    %299 = vector.shape_cast %298 : vector<1x8xf32> to vector<1x8x1xf32>
    %300 = vector.broadcast %299 : vector<1x8x1xf32> to vector<1x8x8xf32>
    %301 = arith.divf %297, %300 : vector<1x8x8xf32>
    %302 = arith.truncf %301 : vector<1x8x8xf32> to vector<1x8x8xbf16>
    %303 = arith.truncf %287 : vector<1x8x8xf32> to vector<1x8x8xbf16>
    "tpu.trace_start"() <{level = 10 : i32, message = "bqk,bkd->bqd"}> : () -> ()
    %cst_127 = arith.constant dense<0.000000e+00> : vector<1x8x8xf32>
    %304 = tpu.matmul %302, %303, %cst_127 {dimension_numbers = #tpu.dot_dimension_numbers<[2], [1], [1], [2], [0, 0, 0, 1, 1, 2], [0], [0]>} : vector<1x8x8xbf16>, vector<1x8x8xbf16>, vector<1x8x8xf32> -> vector<1x8x8xf32>
    "tpu.trace_stop"() : () -> ()
    %305 = vector.extract_strided_slice %264 {offsets = [0, 0, 16], sizes = [1, 8, 8], strides = [1, 1, 1]} : vector<1x8x96xf32> to vector<1x8x8xf32>
    %306 = vector.extract_strided_slice %264 {offsets = [0, 0, 48], sizes = [1, 8, 8], strides = [1, 1, 1]} : vector<1x8x96xf32> to vector<1x8x8xf32>
    %307 = vector.extract_strided_slice %264 {offsets = [0, 0, 80], sizes = [1, 8, 8], strides = [1, 1, 1]} : vector<1x8x96xf32> to vector<1x8x8xf32>
    %308 = arith.truncf %305 : vector<1x8x8xf32> to vector<1x8x8xbf16>
    %309 = arith.truncf %306 : vector<1x8x8xf32> to vector<1x8x8xbf16>
    "tpu.trace_start"() <{level = 10 : i32, message = "bqd,bkd->bqk"}> : () -> ()
    %cst_128 = arith.constant dense<0.000000e+00> : vector<1x8x8xf32>
    %310 = tpu.matmul %308, %309, %cst_128 {dimension_numbers = #tpu.dot_dimension_numbers<[2], [2], [1], [1], [0, 0, 0, 1, 1, 1], [0], [0]>} : vector<1x8x8xbf16>, vector<1x8x8xbf16>, vector<1x8x8xf32> -> vector<1x8x8xf32>
    "tpu.trace_stop"() : () -> ()
    %cst_129 = arith.constant 0.353553385 : f32
    %311 = vector.broadcast %cst_129 : f32 to vector<1x8x8xf32>
    %312 = arith.mulf %310, %311 : vector<1x8x8xf32>
    %cst_130 = arith.constant dense<0xFF800000> : vector<1x8xf32>
    %313 = vector.multi_reduction <maximumf>, %312, %cst_130 [2] : vector<1x8x8xf32> to vector<1x8xf32>
    %314 = vector.shape_cast %313 : vector<1x8xf32> to vector<1x8x1xf32>
    %315 = vector.broadcast %314 : vector<1x8x1xf32> to vector<1x8x8xf32>
    %316 = arith.subf %312, %315 : vector<1x8x8xf32>
    %317 = math.exp %316 : vector<1x8x8xf32>
    %cst_131 = arith.constant dense<0.000000e+00> : vector<1x8xf32>
    %318 = vector.multi_reduction <add>, %317, %cst_131 [2] : vector<1x8x8xf32> to vector<1x8xf32>
    %319 = vector.shape_cast %318 : vector<1x8xf32> to vector<1x8x1xf32>
    %320 = vector.broadcast %319 : vector<1x8x1xf32> to vector<1x8x8xf32>
    %321 = arith.divf %317, %320 : vector<1x8x8xf32>
    %322 = arith.truncf %321 : vector<1x8x8xf32> to vector<1x8x8xbf16>
    %323 = arith.truncf %307 : vector<1x8x8xf32> to vector<1x8x8xbf16>
    "tpu.trace_start"() <{level = 10 : i32, message = "bqk,bkd->bqd"}> : () -> ()
    %cst_132 = arith.constant dense<0.000000e+00> : vector<1x8x8xf32>
    %324 = tpu.matmul %322, %323, %cst_132 {dimension_numbers = #tpu.dot_dimension_numbers<[2], [1], [1], [2], [0, 0, 0, 1, 1, 2], [0], [0]>} : vector<1x8x8xbf16>, vector<1x8x8xbf16>, vector<1x8x8xf32> -> vector<1x8x8xf32>
    "tpu.trace_stop"() : () -> ()
    %325 = vector.extract_strided_slice %264 {offsets = [0, 0, 24], sizes = [1, 8, 8], strides = [1, 1, 1]} : vector<1x8x96xf32> to vector<1x8x8xf32>
    %326 = vector.extract_strided_slice %264 {offsets = [0, 0, 56], sizes = [1, 8, 8], strides = [1, 1, 1]} : vector<1x8x96xf32> to vector<1x8x8xf32>
    %327 = vector.extract_strided_slice %264 {offsets = [0, 0, 88], sizes = [1, 8, 8], strides = [1, 1, 1]} : vector<1x8x96xf32> to vector<1x8x8xf32>
    %328 = arith.truncf %325 : vector<1x8x8xf32> to vector<1x8x8xbf16>
    %329 = arith.truncf %326 : vector<1x8x8xf32> to vector<1x8x8xbf16>
    "tpu.trace_start"() <{level = 10 : i32, message = "bqd,bkd->bqk"}> : () -> ()
    %cst_133 = arith.constant dense<0.000000e+00> : vector<1x8x8xf32>
    %330 = tpu.matmul %328, %329, %cst_133 {dimension_numbers = #tpu.dot_dimension_numbers<[2], [2], [1], [1], [0, 0, 0, 1, 1, 1], [0], [0]>} : vector<1x8x8xbf16>, vector<1x8x8xbf16>, vector<1x8x8xf32> -> vector<1x8x8xf32>
    "tpu.trace_stop"() : () -> ()
    %cst_134 = arith.constant 0.353553385 : f32
    %331 = vector.broadcast %cst_134 : f32 to vector<1x8x8xf32>
    %332 = arith.mulf %330, %331 : vector<1x8x8xf32>
    %cst_135 = arith.constant dense<0xFF800000> : vector<1x8xf32>
    %333 = vector.multi_reduction <maximumf>, %332, %cst_135 [2] : vector<1x8x8xf32> to vector<1x8xf32>
    %334 = vector.shape_cast %333 : vector<1x8xf32> to vector<1x8x1xf32>
    %335 = vector.broadcast %334 : vector<1x8x1xf32> to vector<1x8x8xf32>
    %336 = arith.subf %332, %335 : vector<1x8x8xf32>
    %337 = math.exp %336 : vector<1x8x8xf32>
    %cst_136 = arith.constant dense<0.000000e+00> : vector<1x8xf32>
    %338 = vector.multi_reduction <add>, %337, %cst_136 [2] : vector<1x8x8xf32> to vector<1x8xf32>
    %339 = vector.shape_cast %338 : vector<1x8xf32> to vector<1x8x1xf32>
    %340 = vector.broadcast %339 : vector<1x8x1xf32> to vector<1x8x8xf32>
    %341 = arith.divf %337, %340 : vector<1x8x8xf32>
    %342 = arith.truncf %341 : vector<1x8x8xf32> to vector<1x8x8xbf16>
    %343 = arith.truncf %327 : vector<1x8x8xf32> to vector<1x8x8xbf16>
    "tpu.trace_start"() <{level = 10 : i32, message = "bqk,bkd->bqd"}> : () -> ()
    %cst_137 = arith.constant dense<0.000000e+00> : vector<1x8x8xf32>
    %344 = tpu.matmul %342, %343, %cst_137 {dimension_numbers = #tpu.dot_dimension_numbers<[2], [1], [1], [2], [0, 0, 0, 1, 1, 2], [0], [0]>} : vector<1x8x8xbf16>, vector<1x8x8xbf16>, vector<1x8x8xf32> -> vector<1x8x8xf32>
    "tpu.trace_stop"() : () -> ()
    %345 = tpu.concatenate %284, %304, %324, %344 in 2 : vector<1x8x8xf32>, vector<1x8x8xf32>, vector<1x8x8xf32>, vector<1x8x8xf32> -> vector<1x8x32xf32>
    %346 = vector.shape_cast %345 : vector<1x8x32xf32> to vector<8x32xf32>
    %c1_138 = arith.constant 1 : index
    %c0_139 = arith.constant 0 : index
    %c0_140 = arith.constant 0 : index
    %347 = vector.load %arg13[%c1_138, %c0_139, %c0_140] : memref<2x32x32xbf16, #tpu.memory_space<vmem>>, vector<1x32x32xbf16>
    %348 = vector.shape_cast %347 : vector<1x32x32xbf16> to vector<32x32xbf16>
    %349 = arith.truncf %346 : vector<8x32xf32> to vector<8x32xbf16>
    %cst_141 = arith.constant dense<0.000000e+00> : vector<8x32xf32>
    %350 = tpu.matmul %349, %348, %cst_141 {dimension_numbers = #tpu.dot_dimension_numbers<[1], [0], [0], [1], [0, 0, 1, 1], [], []>} : vector<8x32xbf16>, vector<32x32xbf16>, vector<8x32xf32> -> vector<8x32xf32>
    %c1_142 = arith.constant 1 : index
    %c0_143 = arith.constant 0 : index
    %c0_144 = arith.constant 0 : index
    %351 = vector.load %arg14[%c1_142, %c0_143, %c0_144] : memref<2x1x32xf32, #tpu.memory_space<vmem>>, vector<1x1x32xf32>
    %352 = vector.shape_cast %351 : vector<1x1x32xf32> to vector<1x32xf32>
    %353 = vector.broadcast %352 : vector<1x32xf32> to vector<8x32xf32>
    %354 = arith.addf %350, %353 : vector<8x32xf32>
    %355 = arith.addf %255, %354 : vector<8x32xf32>
    %c1_145 = arith.constant 1 : index
    %c0_146 = arith.constant 0 : index
    %c0_147 = arith.constant 0 : index
    %356 = vector.load %arg15[%c1_145, %c0_146, %c0_147] : memref<2x1x32xf32, #tpu.memory_space<vmem>>, vector<1x1x32xf32>
    %357 = vector.shape_cast %356 : vector<1x1x32xf32> to vector<1x32xf32>
    %c1_148 = arith.constant 1 : index
    %c0_149 = arith.constant 0 : index
    %c0_150 = arith.constant 0 : index
    %358 = vector.load %arg16[%c1_148, %c0_149, %c0_150] : memref<2x1x32xf32, #tpu.memory_space<vmem>>, vector<1x1x32xf32>
    %359 = vector.shape_cast %358 : vector<1x1x32xf32> to vector<1x32xf32>
    %cst_151 = arith.constant dense<0.000000e+00> : vector<8xf32>
    %360 = vector.multi_reduction <add>, %355, %cst_151 [1] : vector<8x32xf32> to vector<8xf32>
    %361 = vector.shape_cast %360 : vector<8xf32> to vector<8x1xf32>
    %cst_152 = arith.constant 3.200000e+01 : f32
    %362 = vector.broadcast %cst_152 : f32 to vector<8x1xf32>
    %363 = arith.divf %361, %362 : vector<8x1xf32>
    %364 = vector.broadcast %363 : vector<8x1xf32> to vector<8x32xf32>
    %365 = arith.subf %355, %364 : vector<8x32xf32>
    %366 = arith.mulf %365, %365 : vector<8x32xf32>
    %cst_153 = arith.constant dense<0.000000e+00> : vector<8xf32>
    %367 = vector.multi_reduction <add>, %366, %cst_153 [1] : vector<8x32xf32> to vector<8xf32>
    %368 = vector.shape_cast %367 : vector<8xf32> to vector<8x1xf32>
    %cst_154 = arith.constant 3.200000e+01 : f32
    %369 = vector.broadcast %cst_154 : f32 to vector<8x1xf32>
    %370 = arith.divf %368, %369 : vector<8x1xf32>
    %371 = vector.broadcast %363 : vector<8x1xf32> to vector<8x32xf32>
    %372 = arith.subf %355, %371 : vector<8x32xf32>
    %cst_155 = arith.constant 9.99999974E-6 : f32
    %373 = vector.broadcast %cst_155 : f32 to vector<8x1xf32>
    %374 = arith.addf %370, %373 : vector<8x1xf32>
    %375 = math.rsqrt %374 : vector<8x1xf32>
    %376 = vector.broadcast %375 : vector<8x1xf32> to vector<8x32xf32>
    %377 = arith.mulf %372, %376 : vector<8x32xf32>
    %378 = vector.broadcast %357 : vector<1x32xf32> to vector<8x32xf32>
    %379 = arith.mulf %377, %378 : vector<8x32xf32>
    %380 = vector.broadcast %359 : vector<1x32xf32> to vector<8x32xf32>
    %381 = arith.addf %379, %380 : vector<8x32xf32>
    %c1_156 = arith.constant 1 : index
    %c0_157 = arith.constant 0 : index
    %c0_158 = arith.constant 0 : index
    %382 = vector.load %arg17[%c1_156, %c0_157, %c0_158] : memref<2x32x64xbf16, #tpu.memory_space<vmem>>, vector<1x32x64xbf16>
    %383 = vector.shape_cast %382 : vector<1x32x64xbf16> to vector<32x64xbf16>
    %384 = arith.truncf %381 : vector<8x32xf32> to vector<8x32xbf16>
    %cst_159 = arith.constant dense<0.000000e+00> : vector<8x64xf32>
    %385 = tpu.matmul %384, %383, %cst_159 {dimension_numbers = #tpu.dot_dimension_numbers<[1], [0], [0], [1], [0, 0, 1, 1], [], []>} : vector<8x32xbf16>, vector<32x64xbf16>, vector<8x64xf32> -> vector<8x64xf32>
    %c1_160 = arith.constant 1 : index
    %c0_161 = arith.constant 0 : index
    %c0_162 = arith.constant 0 : index
    %386 = vector.load %arg18[%c1_160, %c0_161, %c0_162] : memref<2x1x64xf32, #tpu.memory_space<vmem>>, vector<1x1x64xf32>
    %387 = vector.shape_cast %386 : vector<1x1x64xf32> to vector<1x64xf32>
    %388 = vector.broadcast %387 : vector<1x64xf32> to vector<8x64xf32>
    %389 = arith.addf %385, %388 : vector<8x64xf32>
    %cst_163 = arith.constant 0.000000e+00 : f32
    %390 = vector.broadcast %cst_163 : f32 to vector<8x64xf32>
    %391 = arith.maximumf %389, %390 : vector<8x64xf32>
    %c1_164 = arith.constant 1 : index
    %c0_165 = arith.constant 0 : index
    %c0_166 = arith.constant 0 : index
    %392 = vector.load %arg19[%c1_164, %c0_165, %c0_166] : memref<2x64x32xbf16, #tpu.memory_space<vmem>>, vector<1x64x32xbf16>
    %393 = vector.shape_cast %392 : vector<1x64x32xbf16> to vector<64x32xbf16>
    %394 = arith.truncf %391 : vector<8x64xf32> to vector<8x64xbf16>
    %cst_167 = arith.constant dense<0.000000e+00> : vector<8x32xf32>
    %395 = tpu.matmul %394, %393, %cst_167 {dimension_numbers = #tpu.dot_dimension_numbers<[1], [0], [0], [1], [0, 0, 1, 1], [], []>} : vector<8x64xbf16>, vector<64x32xbf16>, vector<8x32xf32> -> vector<8x32xf32>
    %c1_168 = arith.constant 1 : index
    %c0_169 = arith.constant 0 : index
    %c0_170 = arith.constant 0 : index
    %396 = vector.load %arg20[%c1_168, %c0_169, %c0_170] : memref<2x1x32xf32, #tpu.memory_space<vmem>>, vector<1x1x32xf32>
    %397 = vector.shape_cast %396 : vector<1x1x32xf32> to vector<1x32xf32>
    %398 = vector.broadcast %397 : vector<1x32xf32> to vector<8x32xf32>
    %399 = arith.addf %395, %398 : vector<8x32xf32>
    %400 = arith.addf %381, %399 : vector<8x32xf32>
    %c1_171 = arith.constant 1 : index
    %c0_172 = arith.constant 0 : index
    %c0_173 = arith.constant 0 : index
    %401 = vector.load %arg21[%c1_171, %c0_172, %c0_173] : memref<2x1x32xf32, #tpu.memory_space<vmem>>, vector<1x1x32xf32>
    %402 = vector.shape_cast %401 : vector<1x1x32xf32> to vector<1x32xf32>
    %c1_174 = arith.constant 1 : index
    %c0_175 = arith.constant 0 : index
    %c0_176 = arith.constant 0 : index
    %403 = vector.load %arg22[%c1_174, %c0_175, %c0_176] : memref<2x1x32xf32, #tpu.memory_space<vmem>>, vector<1x1x32xf32>
    %404 = vector.shape_cast %403 : vector<1x1x32xf32> to vector<1x32xf32>
    %cst_177 = arith.constant dense<0.000000e+00> : vector<8xf32>
    %405 = vector.multi_reduction <add>, %400, %cst_177 [1] : vector<8x32xf32> to vector<8xf32>
    %406 = vector.shape_cast %405 : vector<8xf32> to vector<8x1xf32>
    %cst_178 = arith.constant 3.200000e+01 : f32
    %407 = vector.broadcast %cst_178 : f32 to vector<8x1xf32>
    %408 = arith.divf %406, %407 : vector<8x1xf32>
    %409 = vector.broadcast %408 : vector<8x1xf32> to vector<8x32xf32>
    %410 = arith.subf %400, %409 : vector<8x32xf32>
    %411 = arith.mulf %410, %410 : vector<8x32xf32>
    %cst_179 = arith.constant dense<0.000000e+00> : vector<8xf32>
    %412 = vector.multi_reduction <add>, %411, %cst_179 [1] : vector<8x32xf32> to vector<8xf32>
    %413 = vector.shape_cast %412 : vector<8xf32> to vector<8x1xf32>
    %cst_180 = arith.constant 3.200000e+01 : f32
    %414 = vector.broadcast %cst_180 : f32 to vector<8x1xf32>
    %415 = arith.divf %413, %414 : vector<8x1xf32>
    %416 = vector.broadcast %408 : vector<8x1xf32> to vector<8x32xf32>
    %417 = arith.subf %400, %416 : vector<8x32xf32>
    %cst_181 = arith.constant 9.99999974E-6 : f32
    %418 = vector.broadcast %cst_181 : f32 to vector<8x1xf32>
    %419 = arith.addf %415, %418 : vector<8x1xf32>
    %420 = math.rsqrt %419 : vector<8x1xf32>
    %421 = vector.broadcast %420 : vector<8x1xf32> to vector<8x32xf32>
    %422 = arith.mulf %417, %421 : vector<8x32xf32>
    %423 = vector.broadcast %402 : vector<1x32xf32> to vector<8x32xf32>
    %424 = arith.mulf %422, %423 : vector<8x32xf32>
    %425 = vector.broadcast %404 : vector<1x32xf32> to vector<8x32xf32>
    %426 = arith.addf %424, %425 : vector<8x32xf32>
    %c0_182 = arith.constant 0 : index
    %c0_183 = arith.constant 0 : index
    %427 = vector.load %arg23[%c0_182, %c0_183] : memref<32x16xbf16, #tpu.memory_space<vmem>>, vector<32x16xbf16>
    %428 = arith.truncf %426 : vector<8x32xf32> to vector<8x32xbf16>
    %cst_184 = arith.constant dense<0.000000e+00> : vector<8x16xf32>
    %429 = tpu.matmul %428, %427, %cst_184 {dimension_numbers = #tpu.dot_dimension_numbers<[1], [0], [0], [1], [0, 0, 1, 1], [], []>} : vector<8x32xbf16>, vector<32x16xbf16>, vector<8x16xf32> -> vector<8x16xf32>
    %c0_185 = arith.constant 0 : index
    %c0_186 = arith.constant 0 : index
    %430 = vector.load %arg24[%c0_185, %c0_186] : memref<1x16xf32, #tpu.memory_space<vmem>>, vector<1x16xf32>
    %431 = vector.broadcast %430 : vector<1x16xf32> to vector<8x16xf32>
    %432 = arith.addf %429, %431 : vector<8x16xf32>
    %cst_187 = arith.constant 0.000000e+00 : f32
    %433 = vector.broadcast %cst_187 : f32 to vector<8x16xf32>
    %434 = arith.maximumf %432, %433 : vector<8x16xf32>
    %c0_188 = arith.constant 0 : index
    %c0_189 = arith.constant 0 : index
    %435 = vector.load %arg25[%c0_188, %c0_189] : memref<16x128xbf16, #tpu.memory_space<vmem>>, vector<16x128xbf16>
    %436 = arith.truncf %434 : vector<8x16xf32> to vector<8x16xbf16>
    %cst_190 = arith.constant dense<0.000000e+00> : vector<8x128xf32>
    %437 = tpu.matmul %436, %435, %cst_190 {dimension_numbers = #tpu.dot_dimension_numbers<[1], [0], [0], [1], [0, 0, 1, 1], [], []>} : vector<8x16xbf16>, vector<16x128xbf16>, vector<8x128xf32> -> vector<8x128xf32>
    %c0_191 = arith.constant 0 : index
    %c0_192 = arith.constant 0 : index
    %438 = vector.load %arg26[%c0_191, %c0_192] : memref<1x128xf32, #tpu.memory_space<vmem>>, vector<1x128xf32>
    %439 = vector.broadcast %438 : vector<1x128xf32> to vector<8x128xf32>
    %440 = arith.addf %437, %439 : vector<8x128xf32>
    %441 = vector.shape_cast %440 : vector<8x128xf32> to vector<1x8x128xf32>
    %c0_193 = arith.constant 0 : index
    %c0_194 = arith.constant 0 : index
    %c0_195 = arith.constant 0 : index
    %442 = vector.load %arg27[%c0_193, %c0_194, %c0_195] : memref<1x8x128xf32, #tpu.memory_space<vmem>>, vector<1x8x128xf32>
    tpu.vector_store %arg27[%c0_193, %c0_194, %c0_195], %441 {strides = array<i32>} : memref<1x8x128xf32, #tpu.memory_space<vmem>>, vector<1x8x128xf32>,
    return
  }
  func.func @transform_0(%arg0: i32) -> (i32, i32, i32) {
    %c0_i32 = arith.constant 0 : i32
    %c0_i32_0 = arith.constant 0 : i32
    %c0_i32_1 = arith.constant 0 : i32
    return %arg0, %c0_i32, %c0_i32_0 : i32, i32, i32
  }
  func.func @transform_1(%arg0: i32) -> (i32, i32) {
    %c0_i32 = arith.constant 0 : i32
    %c0_i32_0 = arith.constant 0 : i32
    %c0_i32_1 = arith.constant 0 : i32
    return %c0_i32, %c0_i32_0 : i32, i32
  }
  func.func @transform_2(%arg0: i32) -> (i32, i32) {
    %c0_i32 = arith.constant 0 : i32
    %c0_i32_0 = arith.constant 0 : i32
    %c0_i32_1 = arith.constant 0 : i32
    return %c0_i32, %c0_i32_0 : i32, i32
  }
  func.func @transform_3(%arg0: i32) -> (i32, i32) {
    %c0_i32 = arith.constant 0 : i32
    %c0_i32_0 = arith.constant 0 : i32
    %c0_i32_1 = arith.constant 0 : i32
    return %c0_i32, %c0_i32_0 : i32, i32
  }
  func.func @transform_4(%arg0: i32) -> (i32, i32) {
    %c0_i32 = arith.constant 0 : i32
    %c0_i32_0 = arith.constant 0 : i32
    %c0_i32_1 = arith.constant 0 : i32
    return %c0_i32, %c0_i32_0 : i32, i32
  }
  func.func @transform_5(%arg0: i32) -> (i32, i32) {
    %c0_i32 = arith.constant 0 : i32
    %c0_i32_0 = arith.constant 0 : i32
    %c0_i32_1 = arith.constant 0 : i32
    return %c0_i32, %c0_i32_0 : i32, i32
  }
  func.func @transform_6(%arg0: i32) -> (i32, i32) {
    %c0_i32 = arith.constant 0 : i32
    %c0_i32_0 = arith.constant 0 : i32
    %c0_i32_1 = arith.constant 0 : i32
    return %c0_i32, %c0_i32_0 : i32, i32
  }
  func.func @transform_7(%arg0: i32) -> (i32, i32) {
    %c0_i32 = arith.constant 0 : i32
    %c0_i32_0 = arith.constant 0 : i32
    %c0_i32_1 = arith.constant 0 : i32
    return %c0_i32, %c0_i32_0 : i32, i32
  }
  func.func @transform_8(%arg0: i32) -> (i32, i32) {
    %c0_i32 = arith.constant 0 : i32
    %c0_i32_0 = arith.constant 0 : i32
    %c0_i32_1 = arith.constant 0 : i32
    return %c0_i32, %c0_i32_0 : i32, i32
  }
  func.func @transform_9(%arg0: i32) -> (i32, i32) {
    %c0_i32 = arith.constant 0 : i32
    %c0_i32_0 = arith.constant 0 : i32
    %c0_i32_1 = arith.constant 0 : i32
    return %c0_i32, %c0_i32_0 : i32, i32
  }
  func.func @transform_10(%arg0: i32) -> (i32, i32, i32) {
    %c0_i32 = arith.constant 0 : i32
    %c0_i32_0 = arith.constant 0 : i32
    %c0_i32_1 = arith.constant 0 : i32
    %c0_i32_2 = arith.constant 0 : i32
    return %c0_i32, %c0_i32_0, %c0_i32_1 : i32, i32, i32
  }
  func.func @transform_11(%arg0: i32) -> (i32, i32, i32) {
    %c0_i32 = arith.constant 0 : i32
    %c0_i32_0 = arith.constant 0 : i32
    %c0_i32_1 = arith.constant 0 : i32
    %c0_i32_2 = arith.constant 0 : i32
    return %c0_i32, %c0_i32_0, %c0_i32_1 : i32, i32, i32
  }
  func.func @transform_12(%arg0: i32) -> (i32, i32, i32) {
    %c0_i32 = arith.constant 0 : i32
    %c0_i32_0 = arith.constant 0 : i32
    %c0_i32_1 = arith.constant 0 : i32
    %c0_i32_2 = arith.constant 0 : i32
    return %c0_i32, %c0_i32_0, %c0_i32_1 : i32, i32, i32
  }
  func.func @transform_13(%arg0: i32) -> (i32, i32, i32) {
    %c0_i32 = arith.constant 0 : i32
    %c0_i32_0 = arith.constant 0 : i32
    %c0_i32_1 = arith.constant 0 : i32
    %c0_i32_2 = arith.constant 0 : i32
    return %c0_i32, %c0_i32_0, %c0_i32_1 : i32, i32, i32
  }
  func.func @transform_14(%arg0: i32) -> (i32, i32, i32) {
    %c0_i32 = arith.constant 0 : i32
    %c0_i32_0 = arith.constant 0 : i32
    %c0_i32_1 = arith.constant 0 : i32
    %c0_i32_2 = arith.constant 0 : i32
    return %c0_i32, %c0_i32_0, %c0_i32_1 : i32, i32, i32
  }
  func.func @transform_15(%arg0: i32) -> (i32, i32, i32) {
    %c0_i32 = arith.constant 0 : i32
    %c0_i32_0 = arith.constant 0 : i32
    %c0_i32_1 = arith.constant 0 : i32
    %c0_i32_2 = arith.constant 0 : i32
    return %c0_i32, %c0_i32_0, %c0_i32_1 : i32, i32, i32
  }
  func.func @transform_16(%arg0: i32) -> (i32, i32, i32) {
    %c0_i32 = arith.constant 0 : i32
    %c0_i32_0 = arith.constant 0 : i32
    %c0_i32_1 = arith.constant 0 : i32
    %c0_i32_2 = arith.constant 0 : i32
    return %c0_i32, %c0_i32_0, %c0_i32_1 : i32, i32, i32
  }
  func.func @transform_17(%arg0: i32) -> (i32, i32, i32) {
    %c0_i32 = arith.constant 0 : i32
    %c0_i32_0 = arith.constant 0 : i32
    %c0_i32_1 = arith.constant 0 : i32
    %c0_i32_2 = arith.constant 0 : i32
    return %c0_i32, %c0_i32_0, %c0_i32_1 : i32, i32, i32
  }
  func.func @transform_18(%arg0: i32) -> (i32, i32, i32) {
    %c0_i32 = arith.constant 0 : i32
    %c0_i32_0 = arith.constant 0 : i32
    %c0_i32_1 = arith.constant 0 : i32
    %c0_i32_2 = arith.constant 0 : i32
    return %c0_i32, %c0_i32_0, %c0_i32_1 : i32, i32, i32
  }
  func.func @transform_19(%arg0: i32) -> (i32, i32, i32) {
    %c0_i32 = arith.constant 0 : i32
    %c0_i32_0 = arith.constant 0 : i32
    %c0_i32_1 = arith.constant 0 : i32
    %c0_i32_2 = arith.constant 0 : i32
    return %c0_i32, %c0_i32_0, %c0_i32_1 : i32, i32, i32
  }
  func.func @transform_20(%arg0: i32) -> (i32, i32, i32) {
    %c0_i32 = arith.constant 0 : i32
    %c0_i32_0 = arith.constant 0 : i32
    %c0_i32_1 = arith.constant 0 : i32
    %c0_i32_2 = arith.constant 0 : i32
    return %c0_i32, %c0_i32_0, %c0_i32_1 : i32, i32, i32
  }
  func.func @transform_21(%arg0: i32) -> (i32, i32, i32) {
    %c0_i32 = arith.constant 0 : i32
    %c0_i32_0 = arith.constant 0 : i32
    %c0_i32_1 = arith.constant 0 : i32
    %c0_i32_2 = arith.constant 0 : i32
    return %c0_i32, %c0_i32_0, %c0_i32_1 : i32, i32, i32
  }
  func.func @transform_22(%arg0: i32) -> (i32, i32) {
    %c0_i32 = arith.constant 0 : i32
    %c0_i32_0 = arith.constant 0 : i32
    %c0_i32_1 = arith.constant 0 : i32
    return %c0_i32, %c0_i32_0 : i32, i32
  }
  func.func @transform_23(%arg0: i32) -> (i32, i32) {
    %c0_i32 = arith.constant 0 : i32
    %c0_i32_0 = arith.constant 0 : i32
    %c0_i32_1 = arith.constant 0 : i32
    return %c0_i32, %c0_i32_0 : i32, i32
  }
  func.func @transform_24(%arg0: i32) -> (i32, i32) {
    %c0_i32 = arith.constant 0 : i32
    %c0_i32_0 = arith.constant 0 : i32
    %c0_i32_1 = arith.constant 0 : i32
    return %c0_i32, %c0_i32_0 : i32, i32
  }
  func.func @transform_25(%arg0: i32) -> (i32, i32) {
    %c0_i32 = arith.constant 0 : i32
    %c0_i32_0 = arith.constant 0 : i32
    %c0_i32_1 = arith.constant 0 : i32
    return %c0_i32, %c0_i32_0 : i32, i32
  }
  func.func @transform_26(%arg0: i32) -> (i32, i32, i32) {
    %c0_i32 = arith.constant 0 : i32
    %c0_i32_0 = arith.constant 0 : i32
    %c0_i32_1 = arith.constant 0 : i32
    return %arg0, %c0_i32, %c0_i32_0 : i32, i32, i32
  }
}

</mosaic_0001>

<llo_original>
// kernel: tpu_custom_call.1
$region0: #{tpu_custom_call.1}
  #allocation0 [shape = 'u32[]', space=smem, size = 0x4, offset = 0x4, fixed_abs, tag = 'smem constant byte address 0x4 - core index']
  #allocation1 [shape = 'u32[72,128]{1,0:T(1,128)}', space=vmem, size = 0x9000, scoped, tag = 'internal scratch']
  %s0 = inlined_call_operand.vmem [shape: f32[2,16,4], index: 0, kind: input, shape index: {}]
  %s1 = inlined_call_operand.hbm [shape: bf16[4,32], index: 1, kind: input, shape index: {}]
  %s2 = inlined_call_operand.hbm [shape: f32[1,32], index: 2, kind: input, shape index: {}]
  %s3 = inlined_call_operand.vmem [shape: f32[16,32], index: 3, kind: input, shape index: {}]
  %s4 = inlined_call_operand.vmem [shape: f32[16,32], index: 4, kind: input, shape index: {}]
  %s5 = inlined_call_operand.hbm [shape: bf16[8,16], index: 5, kind: input, shape index: {}]
  %s6 = inlined_call_operand.vmem [shape: f32[8,1], index: 6, kind: input, shape index: {}]
  %s7 = inlined_call_operand.vmem [shape: f32[8,32], index: 7, kind: input, shape index: {}]
  %s8 = inlined_call_operand.vmem [shape: f32[8,32], index: 8, kind: input, shape index: {}]
  %s9 = inlined_call_operand.hbm [shape: f32[8,32], index: 9, kind: input, shape index: {}]
  %s10 = inlined_call_operand.vmem [shape: bf16[2,32,96], index: 10, kind: input, shape index: {}]
  %s11 = inlined_call_operand.hbm [shape: f32[2,1,96], index: 11, kind: input, shape index: {}]
  %s12 = inlined_call_operand.vmem [shape: bf16[2,32,32], index: 12, kind: input, shape index: {}]
  %s13 = inlined_call_operand.hbm [shape: f32[2,1,32], index: 13, kind: input, shape index: {}]
  %s14 = inlined_call_operand.hbm [shape: f32[2,1,32], index: 14, kind: input, shape index: {}]
  %s15 = inlined_call_operand.hbm [shape: f32[2,1,32], index: 15, kind: input, shape index: {}]
  %s16 = inlined_call_operand.vmem [shape: bf16[2,32,64], index: 16, kind: input, shape index: {}]
  %s17 = inlined_call_operand.hbm [shape: f32[2,1,64], index: 17, kind: input, shape index: {}]
  %s18 = inlined_call_operand.vmem [shape: bf16[2,64,32], index: 18, kind: input, shape index: {}]
  %s19 = inlined_call_operand.vmem [shape: f32[2,1,32], index: 19, kind: input, shape index: {}]
  %s20 = inlined_call_operand.vmem [shape: f32[2,1,32], index: 20, kind: input, shape index: {}]
  %s21 = inlined_call_operand.hbm [shape: f32[2,1,32], index: 21, kind: input, shape index: {}]
  %s22 = inlined_call_operand.vmem [shape: bf16[32,16], index: 22, kind: input, shape index: {}]
  %s23 = inlined_call_operand.vmem [shape: f32[1,16], index: 23, kind: input, shape index: {}]
  %s24 = inlined_call_operand.vmem [shape: bf16[16,128], index: 24, kind: input, shape index: {}]
  %s25 = inlined_call_operand.vmem [shape: f32[1,128], index: 25, kind: input, shape index: {}]
  %s26 = inlined_call_operand.hbm [shape: f32[2,8,128], index: 26, kind: output, shape index: {}]
  %s27 = sld [smem:[#allocation0]]
  $region177: #{tpu_custom_call.1} parent=0
    _
  %s29 = ssub.s32 1, %s27
  %s30 = scalar_select 0, %s29, %s27
  $region1: #{tpu_custom_call.1} parent=0
    #allocation2 [shape = 'u8[1024]{0}', space=vmem, size = 0x400, scoped, tag = 'input window, operand 1, single buffered']
    #allocation3 [shape = 's32[2]{0}', space=sflag, size = 0x8, scoped, tag = 'scoped memory for tpu_custom_call.1']
    #allocation4 [shape = 's32[2]{0}', space=sflag, size = 0x8, scoped, tag = 'scoped memory for tpu_custom_call.1']
    #allocation5 [shape = 'u8[512]{0}', space=vmem, size = 0x400, scoped, tag = 'input window, operand 2, single buffered']
    #allocation6 [shape = 's32[1]{0}', space=sflag, size = 0x4, scoped, tag = 'scoped memory for tpu_custom_call.1']
    #allocation7 [shape = 'u8[2048]{0}', space=vmem, size = 0x800, scoped, tag = 'input window, operand 5, single buffered']
    #allocation8 [shape = 'u8[4096]{0}', space=vmem, size = 0x1000, scoped, tag = 'input window, operand 9, single buffered']
    #allocation9 [shape = 's32[1]{0}', space=sflag, size = 0x4, scoped, tag = 'scoped memory for tpu_custom_call.1']
    #allocation10 [shape = 'u8[1024]{0}', space=vmem, size = 0x400, scoped, tag = 'input window, operand 11, single buffered']
    #allocation11 [shape = 'u8[1024]{0}', space=vmem, size = 0x400, scoped, tag = 'input window, operand 13, single buffered']
    #allocation12 [shape = 's32[1]{0}', space=sflag, size = 0x4, scoped, tag = 'scoped memory for tpu_custom_call.1']
    #allocation13 [shape = 'u8[1024]{0}', space=vmem, size = 0x400, scoped, tag = 'input window, operand 14, single buffered']
    #allocation14 [shape = 'u8[1024]{0}', space=vmem, size = 0x400, scoped, tag = 'input window, operand 15, single buffered']
    #allocation15 [shape = 's32[1]{0}', space=sflag, size = 0x4, scoped, tag = 'scoped memory for tpu_custom_call.1']
    #allocation16 [shape = 'u8[1024]{0}', space=vmem, size = 0x400, scoped, tag = 'input window, operand 17, single buffered']
    #allocation17 [shape = 'u8[1024]{0}', space=vmem, size = 0x400, scoped, tag = 'input window, operand 21, single buffered']
    #allocation18 [shape = 's32[1]{0}', space=sflag, size = 0x4, scoped, tag = 'scoped memory for tpu_custom_call.1']
    #allocation19 [shape = 'u8[8192]{0}', space=vmem, size = 0x2000, scoped, tag = 'output window, operand 0']
    %31 = vsyncpa [#allocation3], 0
    %32 = vsyncpa [#allocation6], 0
    %33 = vsyncpa [#allocation9], 0
    %34 = vsyncpa [#allocation12], 0
    %35 = vsyncpa [#allocation15], 0
    %36 = vsyncpa [#allocation18], 0
    %37 = vsyncpa [#allocation4], 0
    %s38 = scalar_lea.sflag [#allocation4], 1
    %39 = vsyncpa %s38, 0
    loop: start=0, step=1, limit=4
    $region2: #{tpu_custom_call.1} parent=1 // loop_pre_header
      _
    $region3: #{tpu_custom_call.1} parent=1 // loop_header
      %s41 = sphi 0, %s45
      %p42 = scmp.ge.s32.totalorder %s41, 4
      %s51 = sphi 0, %s53
      %s54 = sphi 0, %s51
      %s55 = sphi 0, %s54
      %s71 = sphi 0, %s55
      %s75 = sphi 0, %s75
      %s77 = sphi 0, %s75
      %s78 = sphi 0, %s77
      %s92 = sphi 0, %s78
      %s96 = sphi 0, %s96
      %s98 = sphi 0, %s96
      %s99 = sphi 0, %s98
      %s113 = sphi 0, %s99
      %s117 = sphi 0, %s117
      %s119 = sphi 0, %s117
      %s120 = sphi 0, %s119
      %s134 = sphi 0, %s120
      %s138 = sphi 0, %s138
      %s140 = sphi 0, %s138
      %s141 = sphi 0, %s140
      %s155 = sphi 0, %s141
      %s159 = sphi 0, %s159
      %s161 = sphi 0, %s159
      %s162 = sphi 0, %s161
      %s176 = sphi 0, %s162
      %s180 = sphi 0, %s180
      %s182 = sphi 0, %s180
      %s183 = sphi 0, %s182
      %s197 = sphi 0, %s183
      %s201 = sphi 0, %s201
      %s203 = sphi 0, %s201
      %s204 = sphi 0, %s203
      %s218 = sphi 0, %s204
      %s222 = sphi 0, %s222
      %s224 = sphi 0, %s222
      %s225 = sphi 0, %s224
      %s239 = sphi 0, %s225
      %s243 = sphi 0, %s243
      %s245 = sphi 0, %s243
      %s246 = sphi 0, %s245
      %s260 = sphi 0, %s246
      %s264 = sphi 0, %s264
      %s266 = sphi 0, %s264
      %s267 = sphi 0, %s266
      %s281 = sphi 0, %s267
      %s285 = sphi 0, %s285
      %s287 = sphi 0, %s285
      %s288 = sphi 0, %s287
      %s302 = sphi 0, %s288
      %s306 = sphi 0, %s306
      %s308 = sphi 0, %s306
      %s309 = sphi 0, %s308
      %s323 = sphi 0, %s309
      %s327 = sphi 0, %s327
      %s329 = sphi 0, %s327
      %s330 = sphi 0, %s329
      %s344 = sphi 0, %s330
      %s348 = sphi 0, %s348
      %s350 = sphi 0, %s348
      %s351 = sphi 0, %s350
      %s365 = sphi 0, %s351
      %s369 = sphi 0, %s369
      %s371 = sphi 0, %s369
      %s372 = sphi 0, %s371
      %s386 = sphi 0, %s372
      %s390 = sphi 0, %s390
      %s392 = sphi 0, %s390
      %s393 = sphi 0, %s392
      %s407 = sphi 0, %s393
      %s411 = sphi 0, %s411
      %s413 = sphi 0, %s411
      %s414 = sphi 0, %s413
      %s428 = sphi 0, %s414
      %s432 = sphi 0, %s432
      %s434 = sphi 0, %s432
      %s435 = sphi 0, %s434
      %s449 = sphi 0, %s435
      %s453 = sphi 0, %s453
      %s455 = sphi 0, %s453
      %s456 = sphi 0, %s455
      %s470 = sphi 0, %s456
      %s474 = sphi 0, %s474
      %s476 = sphi 0, %s474
      %s477 = sphi 0, %s476
      %s491 = sphi 0, %s477
      %s495 = sphi 0, %s495
      %s497 = sphi 0, %s495
      %s498 = sphi 0, %s497
      %s512 = sphi 0, %s498
      %s516 = sphi 0, %s516
      %s518 = sphi 0, %s516
      %s519 = sphi 0, %s518
      %s533 = sphi 0, %s519
      %s537 = sphi 0, %s537
      %s539 = sphi 0, %s537
      %s540 = sphi 0, %s539
      %s554 = sphi 0, %s540
      %s558 = sphi 0, %s558
      %s560 = sphi 0, %s558
      %s561 = sphi 0, %s560
      %s575 = sphi 0, %s561
      %s579 = sphi 0, %s579
      %s581 = sphi 0, %s579
      %s582 = sphi 0, %s581
      %s596 = sphi 0, %s582
      %s602 = sphi 0, %s604
      %s605 = sphi 0, %s602
      %s606 = sphi 0, %s605
      %s622 = sphi 0, %s606
    $region4: #{tpu_custom_call.1} parent=1 // loop_header_branch
      %44 = sbr.rel (%p42) target = $region8
    $region5: #{tpu_custom_call.1} parent=1 // loop_body
      %s46 = ssub.s32 %s41, 1
      %s47 = ssub.s32 %s41, 2
      %s48 = sadd.s32 %s41, 1
      %s49 = ssub.s32 %s41, %s48
      %p50 = scmp.eq.s32.totalorder %s49, 0
      %s52 = sadd.s32 %s51, 1
      %s53 = scalar_select %p50, %s51, %s52
      %p56 = pneg %p50
      %p57 = scmp.eq.s32.totalorder %s41, 1
      %p58 = por %p56, %p57
      %p59 = scmp.ne.s32.totalorder %s51, %s54
      %p60 = scmp.eq.s32.totalorder %s41, 0
      %p61 = por %p59, %p60
      %p62 = scmp.ne.s32.totalorder %s51, %s54
      %p63 = scmp.eq.s32.totalorder %s46, 1
      %p64 = por %p62, %p63
      %p65 = scmp.ne.s32.totalorder %s54, %s55
      %p66 = scmp.eq.s32.totalorder %s46, 0
      %p67 = por %p65, %p66
      %p68 = scmp.ne.s32.totalorder %s54, %s55
      %p69 = scmp.eq.s32.totalorder %s47, 1
      %p70 = por %p68, %p69
      %p72 = scmp.ne.s32.totalorder %s55, %s71
      %p73 = scmp.eq.s32.totalorder %s47, 0
      %p74 = por %p72, %p73
      %s76 = sadd.s32 %s75, 1
      %p79 = scmp.eq.s32.totalorder %s41, 1
      %p80 = scmp.ne.s32.totalorder %s75, %s77
      %p81 = scmp.eq.s32.totalorder %s41, 0
      %p82 = por %p80, %p81
      %p83 = scmp.ne.s32.totalorder %s75, %s77
      %p84 = scmp.eq.s32.totalorder %s46, 1
      %p85 = por %p83, %p84
      %p86 = scmp.ne.s32.totalorder %s77, %s78
      %p87 = scmp.eq.s32.totalorder %s46, 0
      %p88 = por %p86, %p87
      %p89 = scmp.ne.s32.totalorder %s77, %s78
      %p90 = scmp.eq.s32.totalorder %s47, 1
      %p91 = por %p89, %p90
      %p93 = scmp.ne.s32.totalorder %s78, %s92
      %p94 = scmp.eq.s32.totalorder %s47, 0
      %p95 = por %p93, %p94
      %s97 = sadd.s32 %s96, 1
      %p100 = scmp.eq.s32.totalorder %s41, 1
      %p101 = scmp.ne.s32.totalorder %s96, %s98
      %p102 = scmp.eq.s32.totalorder %s41, 0
      %p103 = por %p101, %p102
      %p104 = scmp.ne.s32.totalorder %s96, %s98
      %p105 = scmp.eq.s32.totalorder %s46, 1
      %p106 = por %p104, %p105
      %p107 = scmp.ne.s32.totalorder %s98, %s99
      %p108 = scmp.eq.s32.totalorder %s46, 0
      %p109 = por %p107, %p108
      %p110 = scmp.ne.s32.totalorder %s98, %s99
      %p111 = scmp.eq.s32.totalorder %s47, 1
      %p112 = por %p110, %p111
      %p114 = scmp.ne.s32.totalorder %s99, %s113
      %p115 = scmp.eq.s32.totalorder %s47, 0
      %p116 = por %p114, %p115
      %s118 = sadd.s32 %s117, 1
      %p121 = scmp.eq.s32.totalorder %s41, 1
      %p122 = scmp.ne.s32.totalorder %s117, %s119
      %p123 = scmp.eq.s32.totalorder %s41, 0
      %p124 = por %p122, %p123
      %p125 = scmp.ne.s32.totalorder %s117, %s119
      %p126 = scmp.eq.s32.totalorder %s46, 1
      %p127 = por %p125, %p126
      %p128 = scmp.ne.s32.totalorder %s119, %s120
      %p129 = scmp.eq.s32.totalorder %s46, 0
      %p130 = por %p128, %p129
      %p131 = scmp.ne.s32.totalorder %s119, %s120
      %p132 = scmp.eq.s32.totalorder %s47, 1
      %p133 = por %p131, %p132
      %p135 = scmp.ne.s32.totalorder %s120, %s134
      %p136 = scmp.eq.s32.totalorder %s47, 0
      %p137 = por %p135, %p136
      %s139 = sadd.s32 %s138, 1
      %p142 = scmp.eq.s32.totalorder %s41, 1
      %p143 = scmp.ne.s32.totalorder %s138, %s140
      %p144 = scmp.eq.s32.totalorder %s41, 0
      %p145 = por %p143, %p144
      %p146 = scmp.ne.s32.totalorder %s138, %s140
      %p147 = scmp.eq.s32.totalorder %s46, 1
      %p148 = por %p146, %p147
      %p149 = scmp.ne.s32.totalorder %s140, %s141
      %p150 = scmp.eq.s32.totalorder %s46, 0
      %p151 = por %p149, %p150
      %p152 = scmp.ne.s32.totalorder %s140, %s141
      %p153 = scmp.eq.s32.totalorder %s47, 1
      %p154 = por %p152, %p153
      %p156 = scmp.ne.s32.totalorder %s141, %s155
      %p157 = scmp.eq.s32.totalorder %s47, 0
      %p158 = por %p156, %p157
      %s160 = sadd.s32 %s159, 1
      %p163 = scmp.eq.s32.totalorder %s41, 1
      %p164 = scmp.ne.s32.totalorder %s159, %s161
      %p165 = scmp.eq.s32.totalorder %s41, 0
      %p166 = por %p164, %p165
      %p167 = scmp.ne.s32.totalorder %s159, %s161
      %p168 = scmp.eq.s32.totalorder %s46, 1
      %p169 = por %p167, %p168
      %p170 = scmp.ne.s32.totalorder %s161, %s162
      %p171 = scmp.eq.s32.totalorder %s46, 0
      %p172 = por %p170, %p171
      %p173 = scmp.ne.s32.totalorder %s161, %s162
      %p174 = scmp.eq.s32.totalorder %s47, 1
      %p175 = por %p173, %p174
      %p177 = scmp.ne.s32.totalorder %s162, %s176
      %p178 = scmp.eq.s32.totalorder %s47, 0
      %p179 = por %p177, %p178
      %s181 = sadd.s32 %s180, 1
      %p184 = scmp.eq.s32.totalorder %s41, 1
      %p185 = scmp.ne.s32.totalorder %s180, %s182
      %p186 = scmp.eq.s32.totalorder %s41, 0
      %p187 = por %p185, %p186
      %p188 = scmp.ne.s32.totalorder %s180, %s182
      %p189 = scmp.eq.s32.totalorder %s46, 1
      %p190 = por %p188, %p189
      %p191 = scmp.ne.s32.totalorder %s182, %s183
      %p192 = scmp.eq.s32.totalorder %s46, 0
      %p193 = por %p191, %p192
      %p194 = scmp.ne.s32.totalorder %s182, %s183
      %p195 = scmp.eq.s32.totalorder %s47, 1
      %p196 = por %p194, %p195
      %p198 = scmp.ne.s32.totalorder %s183, %s197
      %p199 = scmp.eq.s32.totalorder %s47, 0
      %p200 = por %p198, %p199
      %s202 = sadd.s32 %s201, 1
      %p205 = scmp.eq.s32.totalorder %s41, 1
      %p206 = scmp.ne.s32.totalorder %s201, %s203
      %p207 = scmp.eq.s32.totalorder %s41, 0
      %p208 = por %p206, %p207
      %p209 = scmp.ne.s32.totalorder %s201, %s203
      %p210 = scmp.eq.s32.totalorder %s46, 1
      %p211 = por %p209, %p210
      %p212 = scmp.ne.s32.totalorder %s203, %s204
      %p213 = scmp.eq.s32.totalorder %s46, 0
      %p214 = por %p212, %p213
      %p215 = scmp.ne.s32.totalorder %s203, %s204
      %p216 = scmp.eq.s32.totalorder %s47, 1
      %p217 = por %p215, %p216
      %p219 = scmp.ne.s32.totalorder %s204, %s218
      %p220 = scmp.eq.s32.totalorder %s47, 0
      %p221 = por %p219, %p220
      %s223 = sadd.s32 %s222, 1
      %p226 = scmp.eq.s32.totalorder %s41, 1
      %p227 = scmp.ne.s32.totalorder %s222, %s224
      %p228 = scmp.eq.s32.totalorder %s41, 0
      %p229 = por %p227, %p228
      %p230 = scmp.ne.s32.totalorder %s222, %s224
      %p231 = scmp.eq.s32.totalorder %s46, 1
      %p232 = por %p230, %p231
      %p233 = scmp.ne.s32.totalorder %s224, %s225
      %p234 = scmp.eq.s32.totalorder %s46, 0
      %p235 = por %p233, %p234
      %p236 = scmp.ne.s32.totalorder %s224, %s225
      %p237 = scmp.eq.s32.totalorder %s47, 1
      %p238 = por %p236, %p237
      %p240 = scmp.ne.s32.totalorder %s225, %s239
      %p241 = scmp.eq.s32.totalorder %s47, 0
      %p242 = por %p240, %p241
      %s244 = sadd.s32 %s243, 1
      %p247 = scmp.eq.s32.totalorder %s41, 1
      %p248 = scmp.ne.s32.totalorder %s243, %s245
      %p249 = scmp.eq.s32.totalorder %s41, 0
      %p250 = por %p248, %p249
      %p251 = scmp.ne.s32.totalorder %s243, %s245
      %p252 = scmp.eq.s32.totalorder %s46, 1
      %p253 = por %p251, %p252
      %p254 = scmp.ne.s32.totalorder %s245, %s246
      %p255 = scmp.eq.s32.totalorder %s46, 0
      %p256 = por %p254, %p255
      %p257 = scmp.ne.s32.totalorder %s245, %s246
      %p258 = scmp.eq.s32.totalorder %s47, 1
      %p259 = por %p257, %p258
      %p261 = scmp.ne.s32.totalorder %s246, %s260
      %p262 = scmp.eq.s32.totalorder %s47, 0
      %p263 = por %p261, %p262
      %s265 = sadd.s32 %s264, 1
      %p268 = scmp.eq.s32.totalorder %s41, 1
      %p269 = scmp.ne.s32.totalorder %s264, %s266
      %p270 = scmp.eq.s32.totalorder %s41, 0
      %p271 = por %p269, %p270
      %p272 = scmp.ne.s32.totalorder %s264, %s266
      %p273 = scmp.eq.s32.totalorder %s46, 1
      %p274 = por %p272, %p273
      %p275 = scmp.ne.s32.totalorder %s266, %s267
      %p276 = scmp.eq.s32.totalorder %s46, 0
      %p277 = por %p275, %p276
      %p278 = scmp.ne.s32.totalorder %s266, %s267
      %p279 = scmp.eq.s32.totalorder %s47, 1
      %p280 = por %p278, %p279
      %p282 = scmp.ne.s32.totalorder %s267, %s281
      %p283 = scmp.eq.s32.totalorder %s47, 0
      %p284 = por %p282, %p283
      %s286 = sadd.s32 %s285, 1
      %p289 = scmp.eq.s32.totalorder %s41, 1
      %p290 = scmp.ne.s32.totalorder %s285, %s287
      %p291 = scmp.eq.s32.totalorder %s41, 0
      %p292 = por %p290, %p291
      %p293 = scmp.ne.s32.totalorder %s285, %s287
      %p294 = scmp.eq.s32.totalorder %s46, 1
      %p295 = por %p293, %p294
      %p296 = scmp.ne.s32.totalorder %s287, %s288
      %p297 = scmp.eq.s32.totalorder %s46, 0
      %p298 = por %p296, %p297
      %p299 = scmp.ne.s32.totalorder %s287, %s288
      %p300 = scmp.eq.s32.totalorder %s47, 1
      %p301 = por %p299, %p300
      %p303 = scmp.ne.s32.totalorder %s288, %s302
      %p304 = scmp.eq.s32.totalorder %s47, 0
      %p305 = por %p303, %p304
      %s307 = sadd.s32 %s306, 1
      %p310 = scmp.eq.s32.totalorder %s41, 1
      %p311 = scmp.ne.s32.totalorder %s306, %s308
      %p312 = scmp.eq.s32.totalorder %s41, 0
      %p313 = por %p311, %p312
      %p314 = scmp.ne.s32.totalorder %s306, %s308
      %p315 = scmp.eq.s32.totalorder %s46, 1
      %p316 = por %p314, %p315
      %p317 = scmp.ne.s32.totalorder %s308, %s309
      %p318 = scmp.eq.s32.totalorder %s46, 0
      %p319 = por %p317, %p318
      %p320 = scmp.ne.s32.totalorder %s308, %s309
      %p321 = scmp.eq.s32.totalorder %s47, 1
      %p322 = por %p320, %p321
      %p324 = scmp.ne.s32.totalorder %s309, %s323
      %p325 = scmp.eq.s32.totalorder %s47, 0
      %p326 = por %p324, %p325
      %s328 = sadd.s32 %s327, 1
      %p331 = scmp.eq.s32.totalorder %s41, 1
      %p332 = scmp.ne.s32.totalorder %s327, %s329
      %p333 = scmp.eq.s32.totalorder %s41, 0
      %p334 = por %p332, %p333
      %p335 = scmp.ne.s32.totalorder %s327, %s329
      %p336 = scmp.eq.s32.totalorder %s46, 1
      %p337 = por %p335, %p336
      %p338 = scmp.ne.s32.totalorder %s329, %s330
      %p339 = scmp.eq.s32.totalorder %s46, 0
      %p340 = por %p338, %p339
      %p341 = scmp.ne.s32.totalorder %s329, %s330
      %p342 = scmp.eq.s32.totalorder %s47, 1
      %p343 = por %p341, %p342
      %p345 = scmp.ne.s32.totalorder %s330, %s344
      %p346 = scmp.eq.s32.totalorder %s47, 0
      %p347 = por %p345, %p346
      %s349 = sadd.s32 %s348, 1
      %p352 = scmp.eq.s32.totalorder %s41, 1
      %p353 = scmp.ne.s32.totalorder %s348, %s350
      %p354 = scmp.eq.s32.totalorder %s41, 0
      %p355 = por %p353, %p354
      %p356 = scmp.ne.s32.totalorder %s348, %s350
      %p357 = scmp.eq.s32.totalorder %s46, 1
      %p358 = por %p356, %p357
      %p359 = scmp.ne.s32.totalorder %s350, %s351
      %p360 = scmp.eq.s32.totalorder %s46, 0
      %p361 = por %p359, %p360
      %p362 = scmp.ne.s32.totalorder %s350, %s351
      %p363 = scmp.eq.s32.totalorder %s47, 1
      %p364 = por %p362, %p363
      %p366 = scmp.ne.s32.totalorder %s351, %s365
      %p367 = scmp.eq.s32.totalorder %s47, 0
      %p368 = por %p366, %p367
      %s370 = sadd.s32 %s369, 1
      %p373 = scmp.eq.s32.totalorder %s41, 1
      %p374 = scmp.ne.s32.totalorder %s369, %s371
      %p375 = scmp.eq.s32.totalorder %s41, 0
      %p376 = por %p374, %p375
      %p377 = scmp.ne.s32.totalorder %s369, %s371
      %p378 = scmp.eq.s32.totalorder %s46, 1
      %p379 = por %p377, %p378
      %p380 = scmp.ne.s32.totalorder %s371, %s372
      %p381 = scmp.eq.s32.totalorder %s46, 0
      %p382 = por %p380, %p381
      %p383 = scmp.ne.s32.totalorder %s371, %s372
      %p384 = scmp.eq.s32.totalorder %s47, 1
      %p385 = por %p383, %p384
      %p387 = scmp.ne.s32.totalorder %s372, %s386
      %p388 = scmp.eq.s32.totalorder %s47, 0
      %p389 = por %p387, %p388
      %s391 = sadd.s32 %s390, 1
      %p394 = scmp.eq.s32.totalorder %s41, 1
      %p395 = scmp.ne.s32.totalorder %s390, %s392
      %p396 = scmp.eq.s32.totalorder %s41, 0
      %p397 = por %p395, %p396
      %p398 = scmp.ne.s32.totalorder %s390, %s392
      %p399 = scmp.eq.s32.totalorder %s46, 1
      %p400 = por %p398, %p399
      %p401 = scmp.ne.s32.totalorder %s392, %s393
      %p402 = scmp.eq.s32.totalorder %s46, 0
      %p403 = por %p401, %p402
      %p404 = scmp.ne.s32.totalorder %s392, %s393
      %p405 = scmp.eq.s32.totalorder %s47, 1
      %p406 = por %p404, %p405
      %p408 = scmp.ne.s32.totalorder %s393, %s407
      %p409 = scmp.eq.s32.totalorder %s47, 0
      %p410 = por %p408, %p409
      %s412 = sadd.s32 %s411, 1
      %p415 = scmp.eq.s32.totalorder %s41, 1
      %p416 = scmp.ne.s32.totalorder %s411, %s413
      %p417 = scmp.eq.s32.totalorder %s41, 0
      %p418 = por %p416, %p417
      %p419 = scmp.ne.s32.totalorder %s411, %s413
      %p420 = scmp.eq.s32.totalorder %s46, 1
      %p421 = por %p419, %p420
      %p422 = scmp.ne.s32.totalorder %s413, %s414
      %p423 = scmp.eq.s32.totalorder %s46, 0
      %p424 = por %p422, %p423
      %p425 = scmp.ne.s32.totalorder %s413, %s414
      %p426 = scmp.eq.s32.totalorder %s47, 1
      %p427 = por %p425, %p426
      %p429 = scmp.ne.s32.totalorder %s414, %s428
      %p430 = scmp.eq.s32.totalorder %s47, 0
      %p431 = por %p429, %p430
      %s433 = sadd.s32 %s432, 1
      %p436 = scmp.eq.s32.totalorder %s41, 1
      %p437 = scmp.ne.s32.totalorder %s432, %s434
      %p438 = scmp.eq.s32.totalorder %s41, 0
      %p439 = por %p437, %p438
      %p440 = scmp.ne.s32.totalorder %s432, %s434
      %p441 = scmp.eq.s32.totalorder %s46, 1
      %p442 = por %p440, %p441
      %p443 = scmp.ne.s32.totalorder %s434, %s435
      %p444 = scmp.eq.s32.totalorder %s46, 0
      %p445 = por %p443, %p444
      %p446 = scmp.ne.s32.totalorder %s434, %s435
      %p447 = scmp.eq.s32.totalorder %s47, 1
      %p448 = por %p446, %p447
      %p450 = scmp.ne.s32.totalorder %s435, %s449
      %p451 = scmp.eq.s32.totalorder %s47, 0
      %p452 = por %p450, %p451
      %s454 = sadd.s32 %s453, 1
      %p457 = scmp.eq.s32.totalorder %s41, 1
      %p458 = scmp.ne.s32.totalorder %s453, %s455
      %p459 = scmp.eq.s32.totalorder %s41, 0
      %p460 = por %p458, %p459
      %p461 = scmp.ne.s32.totalorder %s453, %s455
      %p462 = scmp.eq.s32.totalorder %s46, 1
      %p463 = por %p461, %p462
      %p464 = scmp.ne.s32.totalorder %s455, %s456
      %p465 = scmp.eq.s32.totalorder %s46, 0
      %p466 = por %p464, %p465
      %p467 = scmp.ne.s32.totalorder %s455, %s456
      %p468 = scmp.eq.s32.totalorder %s47, 1
      %p469 = por %p467, %p468
      %p471 = scmp.ne.s32.totalorder %s456, %s470
      %p472 = scmp.eq.s32.totalorder %s47, 0
      %p473 = por %p471, %p472
      %s475 = sadd.s32 %s474, 1
      %p478 = scmp.eq.s32.totalorder %s41, 1
      %p479 = scmp.ne.s32.totalorder %s474, %s476
      %p480 = scmp.eq.s32.totalorder %s41, 0
      %p481 = por %p479, %p480
      %p482 = scmp.ne.s32.totalorder %s474, %s476
      %p483 = scmp.eq.s32.totalorder %s46, 1
      %p484 = por %p482, %p483
      %p485 = scmp.ne.s32.totalorder %s476, %s477
      %p486 = scmp.eq.s32.totalorder %s46, 0
      %p487 = por %p485, %p486
      %p488 = scmp.ne.s32.totalorder %s476, %s477
      %p489 = scmp.eq.s32.totalorder %s47, 1
      %p490 = por %p488, %p489
      %p492 = scmp.ne.s32.totalorder %s477, %s491
      %p493 = scmp.eq.s32.totalorder %s47, 0
      %p494 = por %p492, %p493
      %s496 = sadd.s32 %s495, 1
      %p499 = scmp.eq.s32.totalorder %s41, 1
      %p500 = scmp.ne.s32.totalorder %s495, %s497
      %p501 = scmp.eq.s32.totalorder %s41, 0
      %p502 = por %p500, %p501
      %p503 = scmp.ne.s32.totalorder %s495, %s497
      %p504 = scmp.eq.s32.totalorder %s46, 1
      %p505 = por %p503, %p504
      %p506 = scmp.ne.s32.totalorder %s497, %s498
      %p507 = scmp.eq.s32.totalorder %s46, 0
      %p508 = por %p506, %p507
      %p509 = scmp.ne.s32.totalorder %s497, %s498
      %p510 = scmp.eq.s32.totalorder %s47, 1
      %p511 = por %p509, %p510
      %p513 = scmp.ne.s32.totalorder %s498, %s512
      %p514 = scmp.eq.s32.totalorder %s47, 0
      %p515 = por %p513, %p514
      %s517 = sadd.s32 %s516, 1
      %p520 = scmp.eq.s32.totalorder %s41, 1
      %p521 = scmp.ne.s32.totalorder %s516, %s518
      %p522 = scmp.eq.s32.totalorder %s41, 0
      %p523 = por %p521, %p522
      %p524 = scmp.ne.s32.totalorder %s516, %s518
      %p525 = scmp.eq.s32.totalorder %s46, 1
      %p526 = por %p524, %p525
      %p527 = scmp.ne.s32.totalorder %s518, %s519
      %p528 = scmp.eq.s32.totalorder %s46, 0
      %p529 = por %p527, %p528
      %p530 = scmp.ne.s32.totalorder %s518, %s519
      %p531 = scmp.eq.s32.totalorder %s47, 1
      %p532 = por %p530, %p531
      %p534 = scmp.ne.s32.totalorder %s519, %s533
      %p535 = scmp.eq.s32.totalorder %s47, 0
      %p536 = por %p534, %p535
      %s538 = sadd.s32 %s537, 1
      %p541 = scmp.eq.s32.totalorder %s41, 1
      %p542 = scmp.ne.s32.totalorder %s537, %s539
      %p543 = scmp.eq.s32.totalorder %s41, 0
      %p544 = por %p542, %p543
      %p545 = scmp.ne.s32.totalorder %s537, %s539
      %p546 = scmp.eq.s32.totalorder %s46, 1
      %p547 = por %p545, %p546
      %p548 = scmp.ne.s32.totalorder %s539, %s540
      %p549 = scmp.eq.s32.totalorder %s46, 0
      %p550 = por %p548, %p549
      %p551 = scmp.ne.s32.totalorder %s539, %s540
      %p552 = scmp.eq.s32.totalorder %s47, 1
      %p553 = por %p551, %p552
      %p555 = scmp.ne.s32.totalorder %s540, %s554
      %p556 = scmp.eq.s32.totalorder %s47, 0
      %p557 = por %p555, %p556
      %s559 = sadd.s32 %s558, 1
      %p562 = scmp.eq.s32.totalorder %s41, 1
      %p563 = scmp.ne.s32.totalorder %s558, %s560
      %p564 = scmp.eq.s32.totalorder %s41, 0
      %p565 = por %p563, %p564
      %p566 = scmp.ne.s32.totalorder %s558, %s560
      %p567 = scmp.eq.s32.totalorder %s46, 1
      %p568 = por %p566, %p567
      %p569 = scmp.ne.s32.totalorder %s560, %s561
      %p570 = scmp.eq.s32.totalorder %s46, 0
      %p571 = por %p569, %p570
      %p572 = scmp.ne.s32.totalorder %s560, %s561
      %p573 = scmp.eq.s32.totalorder %s47, 1
      %p574 = por %p572, %p573
      %p576 = scmp.ne.s32.totalorder %s561, %s575
      %p577 = scmp.eq.s32.totalorder %s47, 0
      %p578 = por %p576, %p577
      %s580 = sadd.s32 %s579, 1
      %p583 = scmp.eq.s32.totalorder %s41, 1
      %p584 = scmp.ne.s32.totalorder %s579, %s581
      %p585 = scmp.eq.s32.totalorder %s41, 0
      %p586 = por %p584, %p585
      %p587 = scmp.ne.s32.totalorder %s579, %s581
      %p588 = scmp.eq.s32.totalorder %s46, 1
      %p589 = por %p587, %p588
      %p590 = scmp.ne.s32.totalorder %s581, %s582
      %p591 = scmp.eq.s32.totalorder %s46, 0
      %p592 = por %p590, %p591
      %p593 = scmp.ne.s32.totalorder %s581, %s582
      %p594 = scmp.eq.s32.totalorder %s47, 1
      %p595 = por %p593, %p594
      %p597 = scmp.ne.s32.totalorder %s582, %s596
      %p598 = scmp.eq.s32.totalorder %s47, 0
      %p599 = por %p597, %p598
      %s600 = ssub.s32 %s41, %s48
      %p601 = scmp.eq.s32.totalorder %s600, 0
      %s603 = sadd.s32 %s602, 1
      %s604 = scalar_select %p601, %s602, %s603
      %p607 = pneg %p601
      %p608 = scmp.eq.s32.totalorder %s41, 1
      %p609 = por %p607, %p608
      %p610 = scmp.ne.s32.totalorder %s602, %s605
      %p611 = scmp.eq.s32.totalorder %s41, 0
      %p612 = por %p610, %p611
      %p613 = scmp.ne.s32.totalorder %s602, %s605
      %p614 = scmp.eq.s32.totalorder %s46, 1
      %p615 = por %p613, %p614
      %p616 = scmp.ne.s32.totalorder %s605, %s606
      %p617 = scmp.eq.s32.totalorder %s46, 0
      %p618 = por %p616, %p617
      %p619 = scmp.ne.s32.totalorder %s605, %s606
      %p620 = scmp.eq.s32.totalorder %s47, 1
      %p621 = por %p619, %p620
      %p623 = scmp.ne.s32.totalorder %s606, %s622
      %p624 = scmp.eq.s32.totalorder %s47, 0
      %p625 = por %p623, %p624
      %p626 = scmp.le.s32.totalorder 1, %s41
      %p627 = scmp.lt.s32.totalorder %s41, 3
      %p628 = pnand %p626, %p627
      %p629 = pneg %p628
      // Predicated region
      $region9: #{tpu_custom_call.1} parent=5 // pred_check
        _
      $region10: #{tpu_custom_call.1} parent=5 // pred_check_branch
        %631 = sbr.rel (%p628) target = $region12
      $region11: #{tpu_custom_call.1} parent=5 // pred_region
        %s632 = ssub.s32 %s41, 1
        // Predicated region
        $region13: #{tpu_custom_call.1} parent=11 // pred_check
          %p633 = pneg %p88
        $region14: #{tpu_custom_call.1} parent=11 // pred_check_branch
          %635 = sbr.rel (%p633) target = $region16
        $region15: #{tpu_custom_call.1} parent=11 // pred_region
          %637 = vsyncadd [#allocation3], 0
          %s639 = sshll.u32 %s1, 4
          %s640 = int_to_ptr.hbm [resolvable:$true] %s639
          %s641 = sshll.u32 [#allocation2], 4
          %s642 = int_to_ptr.vmem [resolvable:$true] %s641
          %644 = dma.hbm_to_vmem [thread:$0]  %s640, 32, %s642, [#allocation3]
        $region16: #{tpu_custom_call.1} parent=11 // pred_fallthru
          _
        // Predicated region
        $region17: #{tpu_custom_call.1} parent=11 // pred_check
          %p645 = pneg %p109
        $region18: #{tpu_custom_call.1} parent=11 // pred_check_branch
          %647 = sbr.rel (%p645) target = $region20
        $region19: #{tpu_custom_call.1} parent=11 // pred_region
          %649 = vsyncadd [#allocation6], 0
          %s651 = sshll.u32 %s2, 4
          %s652 = int_to_ptr.hbm [resolvable:$true] %s651
          %s653 = sshll.u32 [#allocation5], 4
          %s654 = int_to_ptr.vmem [resolvable:$true] %s653
          %656 = dma.hbm_to_vmem [thread:$0]  %s652, 16, %s654, [#allocation6]
        $region20: #{tpu_custom_call.1} parent=11 // pred_fallthru
          _
        // Predicated region
        $region21: #{tpu_custom_call.1} parent=11 // pred_check
          %p657 = pneg %p130
        $region22: #{tpu_custom_call.1} parent=11 // pred_check_branch
          %659 = sbr.rel (%p657) target = $region24
        $region23: #{tpu_custom_call.1} parent=11 // pred_region
          _
        $region24: #{tpu_custom_call.1} parent=11 // pred_fallthru
          _
        // Predicated region
        $region25: #{tpu_custom_call.1} parent=11 // pred_check
          %p660 = pneg %p151
        $region26: #{tpu_custom_call.1} parent=11 // pred_check_branch
          %662 = sbr.rel (%p660) target = $region28
        $region27: #{tpu_custom_call.1} parent=11 // pred_region
          _
        $region28: #{tpu_custom_call.1} parent=11 // pred_fallthru
          _
        // Predicated region
        $region29: #{tpu_custom_call.1} parent=11 // pred_check
          %p663 = pneg %p172
        $region30: #{tpu_custom_call.1} parent=11 // pred_check_branch
          %665 = sbr.rel (%p663) target = $region32
        $region31: #{tpu_custom_call.1} parent=11 // pred_region
          %667 = vsyncadd [#allocation6], 0
          %s669 = sshll.u32 %s5, 4
          %s670 = int_to_ptr.hbm [resolvable:$true] %s669
          %s671 = sshll.u32 [#allocation7], 4
          %s672 = int_to_ptr.vmem [resolvable:$true] %s671
          %674 = dma.hbm_to_vmem [thread:$0]  %s670, 64, %s672, [#allocation6]
        $region32: #{tpu_custom_call.1} parent=11 // pred_fallthru
          _
        // Predicated region
        $region33: #{tpu_custom_call.1} parent=11 // pred_check
          %p675 = pneg %p193
        $region34: #{tpu_custom_call.1} parent=11 // pred_check_branch
          %677 = sbr.rel (%p675) target = $region36
        $region35: #{tpu_custom_call.1} parent=11 // pred_region
          _
        $region36: #{tpu_custom_call.1} parent=11 // pred_fallthru
          _
        // Predicated region
        $region37: #{tpu_custom_call.1} parent=11 // pred_check
          %p678 = pneg %p214
        $region38: #{tpu_custom_call.1} parent=11 // pred_check_branch
          %680 = sbr.rel (%p678) target = $region40
        $region39: #{tpu_custom_call.1} parent=11 // pred_region
          _
        $region40: #{tpu_custom_call.1} parent=11 // pred_fallthru
          _
        // Predicated region
        $region41: #{tpu_custom_call.1} parent=11 // pred_check
          %p681 = pneg %p235
        $region42: #{tpu_custom_call.1} parent=11 // pred_check_branch
          %683 = sbr.rel (%p681) target = $region44
        $region43: #{tpu_custom_call.1} parent=11 // pred_region
          _
        $region44: #{tpu_custom_call.1} parent=11 // pred_fallthru
          _
        // Predicated region
        $region45: #{tpu_custom_call.1} parent=11 // pred_check
          %p684 = pneg %p256
        $region46: #{tpu_custom_call.1} parent=11 // pred_check_branch
          %686 = sbr.rel (%p684) target = $region48
        $region47: #{tpu_custom_call.1} parent=11 // pred_region
          %688 = vsyncadd [#allocation9], 0
          %s690 = sshll.u32 %s9, 4
          %s691 = int_to_ptr.hbm [resolvable:$true] %s690
          %s692 = sshll.u32 [#allocation8], 4
          %s693 = int_to_ptr.vmem [resolvable:$true] %s692
          %695 = dma.hbm_to_vmem [thread:$0]  %s691, 128, %s693, [#allocation9]
        $region48: #{tpu_custom_call.1} parent=11 // pred_fallthru
          _
        // Predicated region
        $region49: #{tpu_custom_call.1} parent=11 // pred_check
          %p696 = pneg %p277
        $region50: #{tpu_custom_call.1} parent=11 // pred_check_branch
          %698 = sbr.rel (%p696) target = $region52
        $region51: #{tpu_custom_call.1} parent=11 // pred_region
          _
        $region52: #{tpu_custom_call.1} parent=11 // pred_fallthru
          _
        // Predicated region
        $region53: #{tpu_custom_call.1} parent=11 // pred_check
          %p699 = pneg %p298
        $region54: #{tpu_custom_call.1} parent=11 // pred_check_branch
          %701 = sbr.rel (%p699) target = $region56
        $region55: #{tpu_custom_call.1} parent=11 // pred_region
          %703 = vsyncadd [#allocation9], 0
          %s704 = sshll.u32 %s11, 4
          %s705 = int_to_ptr.hbm [resolvable:$true] %s704
          %s706 = sshll.u32 [#allocation10], 4
          %s707 = int_to_ptr.vmem [resolvable:$true] %s706
          %712 = dma.hbm_to_vmem [thread:$0]  %s705, 32, %s707, [#allocation9], 16, 16, 1
        $region56: #{tpu_custom_call.1} parent=11 // pred_fallthru
          _
        // Predicated region
        $region57: #{tpu_custom_call.1} parent=11 // pred_check
          %p713 = pneg %p319
        $region58: #{tpu_custom_call.1} parent=11 // pred_check_branch
          %715 = sbr.rel (%p713) target = $region60
        $region59: #{tpu_custom_call.1} parent=11 // pred_region
          _
        $region60: #{tpu_custom_call.1} parent=11 // pred_fallthru
          _
        // Predicated region
        $region61: #{tpu_custom_call.1} parent=11 // pred_check
          %p716 = pneg %p340
        $region62: #{tpu_custom_call.1} parent=11 // pred_check_branch
          %718 = sbr.rel (%p716) target = $region64
        $region63: #{tpu_custom_call.1} parent=11 // pred_region
          %720 = vsyncadd [#allocation12], 0
          %s721 = sshll.u32 %s13, 4
          %s722 = int_to_ptr.hbm [resolvable:$true] %s721
          %s723 = sshll.u32 [#allocation11], 4
          %s724 = int_to_ptr.vmem [resolvable:$true] %s723
          %729 = dma.hbm_to_vmem [thread:$0]  %s722, 32, %s724, [#allocation12], 16, 16, 1
        $region64: #{tpu_custom_call.1} parent=11 // pred_fallthru
          _
        // Predicated region
        $region65: #{tpu_custom_call.1} parent=11 // pred_check
          %p730 = pneg %p361
        $region66: #{tpu_custom_call.1} parent=11 // pred_check_branch
          %732 = sbr.rel (%p730) target = $region68
        $region67: #{tpu_custom_call.1} parent=11 // pred_region
          %734 = vsyncadd [#allocation12], 0
          %s735 = sshll.u32 %s14, 4
          %s736 = int_to_ptr.hbm [resolvable:$true] %s735
          %s737 = sshll.u32 [#allocation13], 4
          %s738 = int_to_ptr.vmem [resolvable:$true] %s737
          %743 = dma.hbm_to_vmem [thread:$0]  %s736, 32, %s738, [#allocation12], 16, 16, 1
        $region68: #{tpu_custom_call.1} parent=11 // pred_fallthru
          _
        // Predicated region
        $region69: #{tpu_custom_call.1} parent=11 // pred_check
          %p744 = pneg %p382
        $region70: #{tpu_custom_call.1} parent=11 // pred_check_branch
          %746 = sbr.rel (%p744) target = $region72
        $region71: #{tpu_custom_call.1} parent=11 // pred_region
          %748 = vsyncadd [#allocation15], 0
          %s749 = sshll.u32 %s15, 4
          %s750 = int_to_ptr.hbm [resolvable:$true] %s749
          %s751 = sshll.u32 [#allocation14], 4
          %s752 = int_to_ptr.vmem [resolvable:$true] %s751
          %757 = dma.hbm_to_vmem [thread:$0]  %s750, 32, %s752, [#allocation15], 16, 16, 1
        $region72: #{tpu_custom_call.1} parent=11 // pred_fallthru
          _
        // Predicated region
        $region73: #{tpu_custom_call.1} parent=11 // pred_check
          %p758 = pneg %p403
        $region74: #{tpu_custom_call.1} parent=11 // pred_check_branch
          %760 = sbr.rel (%p758) target = $region76
        $region75: #{tpu_custom_call.1} parent=11 // pred_region
          _
        $region76: #{tpu_custom_call.1} parent=11 // pred_fallthru
          _
        // Predicated region
        $region77: #{tpu_custom_call.1} parent=11 // pred_check
          %p761 = pneg %p424
        $region78: #{tpu_custom_call.1} parent=11 // pred_check_branch
          %763 = sbr.rel (%p761) target = $region80
        $region79: #{tpu_custom_call.1} parent=11 // pred_region
          %765 = vsyncadd [#allocation15], 0
          %s766 = sshll.u32 %s17, 4
          %s767 = int_to_ptr.hbm [resolvable:$true] %s766
          %s768 = sshll.u32 [#allocation16], 4
          %s769 = int_to_ptr.vmem [resolvable:$true] %s768
          %774 = dma.hbm_to_vmem [thread:$0]  %s767, 32, %s769, [#allocation15], 16, 16, 1
        $region80: #{tpu_custom_call.1} parent=11 // pred_fallthru
          _
        // Predicated region
        $region81: #{tpu_custom_call.1} parent=11 // pred_check
          %p775 = pneg %p445
        $region82: #{tpu_custom_call.1} parent=11 // pred_check_branch
          %777 = sbr.rel (%p775) target = $region84
        $region83: #{tpu_custom_call.1} parent=11 // pred_region
          _
        $region84: #{tpu_custom_call.1} parent=11 // pred_fallthru
          _
        // Predicated region
        $region85: #{tpu_custom_call.1} parent=11 // pred_check
          %p778 = pneg %p466
        $region86: #{tpu_custom_call.1} parent=11 // pred_check_branch
          %780 = sbr.rel (%p778) target = $region88
        $region87: #{tpu_custom_call.1} parent=11 // pred_region
          _
        $region88: #{tpu_custom_call.1} parent=11 // pred_fallthru
          _
        // Predicated region
        $region89: #{tpu_custom_call.1} parent=11 // pred_check
          %p781 = pneg %p487
        $region90: #{tpu_custom_call.1} parent=11 // pred_check_branch
          %783 = sbr.rel (%p781) target = $region92
        $region91: #{tpu_custom_call.1} parent=11 // pred_region
          _
        $region92: #{tpu_custom_call.1} parent=11 // pred_fallthru
          _
        // Predicated region
        $region93: #{tpu_custom_call.1} parent=11 // pred_check
          %p784 = pneg %p508
        $region94: #{tpu_custom_call.1} parent=11 // pred_check_branch
          %786 = sbr.rel (%p784) target = $region96
        $region95: #{tpu_custom_call.1} parent=11 // pred_region
          %788 = vsyncadd [#allocation18], 0
          %s789 = sshll.u32 %s21, 4
          %s790 = int_to_ptr.hbm [resolvable:$true] %s789
          %s791 = sshll.u32 [#allocation17], 4
          %s792 = int_to_ptr.vmem [resolvable:$true] %s791
          %797 = dma.hbm_to_vmem [thread:$0]  %s790, 32, %s792, [#allocation18], 16, 16, 1
        $region96: #{tpu_custom_call.1} parent=11 // pred_fallthru
          _
        // Predicated region
        $region97: #{tpu_custom_call.1} parent=11 // pred_check
          %p798 = pneg %p529
        $region98: #{tpu_custom_call.1} parent=11 // pred_check_branch
          %800 = sbr.rel (%p798) target = $region100
        $region99: #{tpu_custom_call.1} parent=11 // pred_region
          _
        $region100: #{tpu_custom_call.1} parent=11 // pred_fallthru
          _
        // Predicated region
        $region101: #{tpu_custom_call.1} parent=11 // pred_check
          %p801 = pneg %p550
        $region102: #{tpu_custom_call.1} parent=11 // pred_check_branch
          %803 = sbr.rel (%p801) target = $region104
        $region103: #{tpu_custom_call.1} parent=11 // pred_region
          _
        $region104: #{tpu_custom_call.1} parent=11 // pred_fallthru
          _
        // Predicated region
        $region105: #{tpu_custom_call.1} parent=11 // pred_check
          %p804 = pneg %p571
        $region106: #{tpu_custom_call.1} parent=11 // pred_check_branch
          %806 = sbr.rel (%p804) target = $region108
        $region107: #{tpu_custom_call.1} parent=11 // pred_region
          _
        $region108: #{tpu_custom_call.1} parent=11 // pred_fallthru
          _
        // Predicated region
        $region109: #{tpu_custom_call.1} parent=11 // pred_check
          %p807 = pneg %p592
        $region110: #{tpu_custom_call.1} parent=11 // pred_check_branch
          %809 = sbr.rel (%p807) target = $region112
        $region111: #{tpu_custom_call.1} parent=11 // pred_region
          _
        $region112: #{tpu_custom_call.1} parent=11 // pred_fallthru
          _
      $region12: #{tpu_custom_call.1} parent=5 // pred_fallthru
        _
      %p810 = scmp.lt.s32.totalorder %s41, 2
      // Predicated region
      $region113: #{tpu_custom_call.1} parent=5 // pred_check
        %p811 = pneg %p810
      $region114: #{tpu_custom_call.1} parent=5 // pred_check_branch
        %813 = sbr.rel (%p811) target = $region116
      $region115: #{tpu_custom_call.1} parent=5 // pred_region
        // Predicated region
        $region117: #{tpu_custom_call.1} parent=115 // pred_check
          %p814 = pneg %p61
        $region118: #{tpu_custom_call.1} parent=115 // pred_check_branch
          %816 = sbr.rel (%p814) target = $region120
        $region119: #{tpu_custom_call.1} parent=115 // pred_region
          %p817 = scmp.lt.s32.totalorder %s41, 1
          %s818 = scalar_select %p817, %s41, 1
          %s819 = smul.addr %s818, 2
          %s820 = smul.addr %s819, 8
          %s821 = scalar_lea.vmem %s0, %s820
        $region120: #{tpu_custom_call.1} parent=115 // pred_fallthru
          _
      $region116: #{tpu_custom_call.1} parent=5 // pred_fallthru
        _
      %p822 = scmp.le.s32.totalorder 1, %s41
      %p823 = scmp.lt.s32.totalorder %s41, 3
      %p824 = pnand %p822, %p823
      %p825 = pneg %p824
      // Predicated region
      $region121: #{tpu_custom_call.1} parent=5 // pred_check
        _
      $region122: #{tpu_custom_call.1} parent=5 // pred_check_branch
        %827 = sbr.rel (%p824) target = $region124
      $region123: #{tpu_custom_call.1} parent=5 // pred_region
        %s828 = ssub.s32 %s41, 1
        // Predicated region
        $region125: #{tpu_custom_call.1} parent=123 // pred_check
          %p829 = pneg %p88
        $region126: #{tpu_custom_call.1} parent=123 // pred_check_branch
          %831 = sbr.rel (%p829) target = $region128
        $region127: #{tpu_custom_call.1} parent=123 // pred_region
          %833 = dma.done [#allocation3], 32
        $region128: #{tpu_custom_call.1} parent=123 // pred_fallthru
          _
        // Predicated region
        $region129: #{tpu_custom_call.1} parent=123 // pred_check
          %p834 = pneg %p109
        $region130: #{tpu_custom_call.1} parent=123 // pred_check_branch
          %836 = sbr.rel (%p834) target = $region132
        $region131: #{tpu_custom_call.1} parent=123 // pred_region
          %838 = dma.done [#allocation6], 16
        $region132: #{tpu_custom_call.1} parent=123 // pred_fallthru
          _
        // Predicated region
        $region133: #{tpu_custom_call.1} parent=123 // pred_check
          %p839 = pneg %p172
        $region134: #{tpu_custom_call.1} parent=123 // pred_check_branch
          %841 = sbr.rel (%p839) target = $region136
        $region135: #{tpu_custom_call.1} parent=123 // pred_region
          %843 = dma.done [#allocation6], 64
        $region136: #{tpu_custom_call.1} parent=123 // pred_fallthru
          _
        // Predicated region
        $region137: #{tpu_custom_call.1} parent=123 // pred_check
          %p844 = pneg %p256
        $region138: #{tpu_custom_call.1} parent=123 // pred_check_branch
          %846 = sbr.rel (%p844) target = $region140
        $region139: #{tpu_custom_call.1} parent=123 // pred_region
          %848 = dma.done [#allocation9], 128
        $region140: #{tpu_custom_call.1} parent=123 // pred_fallthru
          _
        // Predicated region
        $region141: #{tpu_custom_call.1} parent=123 // pred_check
          %p849 = pneg %p298
        $region142: #{tpu_custom_call.1} parent=123 // pred_check_branch
          %851 = sbr.rel (%p849) target = $region144
        $region143: #{tpu_custom_call.1} parent=123 // pred_region
          %853 = dma.done [#allocation9], 32
        $region144: #{tpu_custom_call.1} parent=123 // pred_fallthru
          _
        // Predicated region
        $region145: #{tpu_custom_call.1} parent=123 // pred_check
          %p854 = pneg %p340
        $region146: #{tpu_custom_call.1} parent=123 // pred_check_branch
          %856 = sbr.rel (%p854) target = $region148
        $region147: #{tpu_custom_call.1} parent=123 // pred_region
          %858 = dma.done [#allocation12], 32
        $region148: #{tpu_custom_call.1} parent=123 // pred_fallthru
          _
        // Predicated region
        $region149: #{tpu_custom_call.1} parent=123 // pred_check
          %p859 = pneg %p361
        $region150: #{tpu_custom_call.1} parent=123 // pred_check_branch
          %861 = sbr.rel (%p859) target = $region152
        $region151: #{tpu_custom_call.1} parent=123 // pred_region
          %863 = dma.done [#allocation12], 32
        $region152: #{tpu_custom_call.1} parent=123 // pred_fallthru
          _
        // Predicated region
        $region153: #{tpu_custom_call.1} parent=123 // pred_check
          %p864 = pneg %p382
        $region154: #{tpu_custom_call.1} parent=123 // pred_check_branch
          %866 = sbr.rel (%p864) target = $region156
        $region155: #{tpu_custom_call.1} parent=123 // pred_region
          %868 = dma.done [#allocation15], 32
        $region156: #{tpu_custom_call.1} parent=123 // pred_fallthru
          _
        // Predicated region
        $region157: #{tpu_custom_call.1} parent=123 // pred_check
          %p869 = pneg %p424
        $region158: #{tpu_custom_call.1} parent=123 // pred_check_branch
          %871 = sbr.rel (%p869) target = $region160
        $region159: #{tpu_custom_call.1} parent=123 // pred_region
          %873 = dma.done [#allocation15], 32
        $region160: #{tpu_custom_call.1} parent=123 // pred_fallthru
          _
        // Predicated region
        $region161: #{tpu_custom_call.1} parent=123 // pred_check
          %p874 = pneg %p508
        $region162: #{tpu_custom_call.1} parent=123 // pred_check_branch
          %876 = sbr.rel (%p874) target = $region164
        $region163: #{tpu_custom_call.1} parent=123 // pred_region
          %878 = dma.done [#allocation18], 32
        $region164: #{tpu_custom_call.1} parent=123 // pred_fallthru
          _
        %p879 = scmp.lt.s32.totalorder %s46, 1
        %s880 = scalar_select %p879, %s46, 1
        %s881 = smul.addr %s880, 2
        %s882 = smul.addr %s881, 8
        %s883 = scalar_lea.vmem %s0, %s882
        %p884 = pneg %p67
        %p885 = pneg %p64
        %p886 = pneg %p88
        %p887 = pneg %p85
        %p888 = pneg %p109
        %p889 = pneg %p106
        %p890 = pneg %p130
        %p891 = pneg %p127
        %p892 = pneg %p151
        %p893 = pneg %p148
        %p894 = pneg %p172
        %p895 = pneg %p169
        %p896 = pneg %p193
        %p897 = pneg %p190
        %p898 = pneg %p214
        %p899 = pneg %p211
        %p900 = pneg %p235
        %p901 = pneg %p232
        %p902 = pneg %p256
        %p903 = pneg %p253
        %p904 = pneg %p277
        %p905 = pneg %p274
        %p906 = pneg %p298
        %p907 = pneg %p295
        %p908 = pneg %p319
        %p909 = pneg %p316
        %p910 = pneg %p340
        %p911 = pneg %p337
        %p912 = pneg %p361
        %p913 = pneg %p358
        %p914 = pneg %p382
        %p915 = pneg %p379
        %p916 = pneg %p403
        %p917 = pneg %p400
        %p918 = pneg %p424
        %p919 = pneg %p421
        %p920 = pneg %p445
        %p921 = pneg %p442
        %p922 = pneg %p466
        %p923 = pneg %p463
        %p924 = pneg %p487
        %p925 = pneg %p484
        %p926 = pneg %p508
        %p927 = pneg %p505
        %p928 = pneg %p529
        %p929 = pneg %p526
        %p930 = pneg %p550
        %p931 = pneg %p547
        %p932 = pneg %p571
        %p933 = pneg %p568
        %p934 = pneg %p592
        %p935 = pneg %p589
        %p936 = pneg %p618
        %p937 = pneg %p615
        %s938 = sand.u32 %s605, 1
        %s939 = scalar_lea.sflag [#allocation4], %s938
        %s940 = sand.u32 %s605, 1
        %s941 = smul.addr %s940, 8
        %s942 = scalar_lea.vmem [#allocation19], %s941
        %p943 = scmp.lt.s32.totalorder %s46, 1
        %s944 = scalar_select %p943, %s46, 1
        %s945 = smul.addr %s944, 2
        %s946 = smul.addr %s945, 8
        %s947 = scalar_lea.vmem %s0, %s946
        %v949 = vld [vmem:[%s947] sm:$0xff]
        %v950 = vld [vmem:[%s947 + $0x8] sm:$0xff]
        %v951 = vld [vmem:[#allocation2] sm:$0x3]
        %v952 = vpack.c.bf16 %v950, %v949
        %v953 = vld [vmem:[#allocation5] sm:$0x1]
        %v955 = vperm.slane %v953, 0
        %vm957 = vcmask 31744
        %v959 = vsel %vm957, %v952, 0
        %vm961 = vcmask 1041408
        %v963 = vsel %vm961, %v951, 0
        %965 = vmatpush.bf16.msra.mxu0 0
        %966 = vmatpush.bf16.msra.mxu0 0
        %967 = vmatpush.bf16.msra.mxu0 0
        %968 = vmatpush.bf16.msra.mxu0 0
        %969 = vmatpush.bf16.msra.mxu0 0
        %970 = vmatpush.bf16.msra.mxu0 0
        %971 = vmatpush.bf16.msra.mxu0 0
        %972 = vmatpush.bf16.msra.mxu0 %v963
        %973 = vmatmul.bf16.gmra.mxu0 %v959
        %v974 = vpop.f32.mrf.mxu0
        %v975 = vadd.f32 %v955, %v974
        %v976 = vpop.f32.mrf.mxu0
        %v977 = vadd.f32 %v955, %v976
        %978 = vdwg.mxu0
        %v979 = vld [vmem:[%s3] sm:$0xff]
        %v980 = vld [vmem:[%s3 + $0x8] sm:$0xff]
        %v981 = vld [vmem:[%s4] sm:$0xff]
        %v982 = vld [vmem:[%s4 + $0x8] sm:$0xff]
        %vm983 = vcmask 261120
        %v984 = vsel %vm983, %v975, 0.0
        %985 = vadd.xlane.f32.xlu0 %v984
        %v986 = vpop.xlane.xlu0 %985
        %v987 = vsel %vm983, %v977, 0.0
        %988 = vadd.xlane.f32.xlu0 %v987
        %v989 = vpop.xlane.xlu0 %988
        %v990 = vrcp.pop 32.0
        %v991 = vmul.f32 32.0, %v990
        %v992 = vsub.f32 1.0, %v991
        %v993 = vmul.f32 %v990, %v992
        %v994 = vadd.f32 %v990, %v993
        %vm995 = vweird.f32 %v990
        %v996 = vsel %vm995, %v990, %v994
        %v997 = vmul.f32 %v986, %v996
        %v998 = vmul.f32 %v989, %v996
        %v999 = vadd.f32 %v997, %v998
        %v1000 = vrot.slane %v999, 4
        %v1001 = vadd.f32 %v999, %v1000
        %v1002 = vrot.slane %v1001, 2
        %v1003 = vadd.f32 %v1001, %v1002
        %v1004 = vrot.slane %v1003, 1
        %v1005 = vadd.f32 %v1003, %v1004
        %v1006 = vrcp.pop 16.0
        %v1007 = vmul.f32 16.0, %v1006
        %v1008 = vsub.f32 1.0, %v1007
        %v1009 = vmul.f32 %v1006, %v1008
        %v1010 = vadd.f32 %v1006, %v1009
        %vm1011 = vweird.f32 %v1006
        %v1012 = vsel %vm1011, %v1006, %v1010
        %v1013 = vmul.f32 %v1005, %v1012
        %v1014 = vsub.f32 %v975, %v1013
        %v1015 = vsub.f32 %v977, %v1013
        %v1016 = vmul.f32 %v1014, %v1014
        %v1017 = vmul.f32 %v1015, %v1015
        %v1018 = vsel %vm983, %v1016, 0.0
        %1019 = vadd.xlane.f32.xlu0 %v1018
        %v1020 = vpop.xlane.xlu0 %1019
        %v1021 = vsel %vm983, %v1017, 0.0
        %1022 = vadd.xlane.f32.xlu0 %v1021
        %v1023 = vpop.xlane.xlu0 %1022
        %v1024 = vmul.f32 %v1020, %v996
        %v1025 = vmul.f32 %v1023, %v996
        %v1026 = vadd.f32 %v1024, %v1025
        %v1027 = vrot.slane %v1026, 4
        %v1028 = vadd.f32 %v1026, %v1027
        %v1029 = vrot.slane %v1028, 2
        %v1030 = vadd.f32 %v1028, %v1029
        %v1031 = vrot.slane %v1030, 1
        %v1032 = vadd.f32 %v1030, %v1031
        %v1033 = vmul.f32 %v1032, %v1012
        %v1034 = vadd.f32 %v1033, 1e-05
        %v1035 = vrsqrt.pop %v1034
        %v1036 = vmul.f32 %v1035, %v1034
        %v1037 = vmul.f32 %v1036, %v1035
        %v1038 = vmul.f32 0.5, %v1037
        %v1039 = vsub.f32 1.5, %v1038
        %v1040 = vmul.f32 %v1035, %v1039
        %vm1041 = vweird.f32 %v1034
        %vm1042 = vweird.f32 %v1035
        %vm1043 = vmor %vm1041, %vm1042
        %v1044 = vsel %vm1043, %v1035, %v1040
        %v1045 = vmul.f32 %v1014, %v1044
        %v1046 = vmul.f32 %v1015, %v1044
        %v1047 = vmul.f32 %v1045, %v979
        %v1048 = vmul.f32 %v1046, %v980
        %v1049 = vadd.f32 %v1047, %v981
        %v1050 = vadd.f32 %v1048, %v982
        %v1051 = vmax.f32 %v1049, 0.0
        %v1052 = vmax.f32 %v1050, 0.0
        %v1053 = vld [vmem:[#allocation7] sm:$0xf]
        %v1054 = vpack.c.bf16 %v1052, %v1051
        %v1055 = vld [vmem:[%s6] sm:$0xff]
        %1057 = vset.pattern.permute.xlu0 0
        %1058 = vperm.xlu0 %1057, %v1055
        %v1059 = vpop.permute.xlu0 %1058
        %vm1061 = vcmask 130048
        %v1063 = vsel %vm1061, %v1053, 0
        %1065 = vmatpush.bf16.msra.mxu0 0
        %1066 = vmatpush.bf16.msra.mxu0 0
        %1067 = vmatpush.bf16.msra.mxu0 0
        %1068 = vmatpush.bf16.msra.mxu0 0
        %1069 = vmatpush.bf16.msra.mxu0 0
        %1070 = vmatpush.bf16.msra.mxu0 0
        %1071 = vmatpush.bf16.msra.mxu0 0
        %1072 = vmatpush.bf16.msra.mxu0 %v1054
        %1073 = vmatmul.bf16.gmra.mxu0 %v1063
        %v1074 = vpop.f32.mrf.mxu0
        %v1075 = vadd.f32 %v1059, %v1074
        %v1076 = vpop.f32.mrf.mxu0
        %1077 = vdwg.mxu0
        %v1078 = vld [vmem:[%s7] sm:$0xff]
        %v1079 = vld [vmem:[%s8] sm:$0xff]
        %v1080 = vsel %vm983, %v1075, 0.0
        %1081 = vadd.xlane.f32.xlu0 %v1080
        %v1082 = vpop.xlane.xlu0 %1081
        %v1083 = vmul.f32 %v1082, %v996
        %v1084 = vrot.slane %v1083, 4
        %v1085 = vadd.f32 %v1083, %v1084
        %v1086 = vrot.slane %v1085, 2
        %v1087 = vadd.f32 %v1085, %v1086
        %v1088 = vrot.slane %v1087, 1
        %v1089 = vadd.f32 %v1087, %v1088
        %v1090 = vrcp.pop 8.0
        %v1091 = vmul.f32 8.0, %v1090
        %v1092 = vsub.f32 1.0, %v1091
        %v1093 = vmul.f32 %v1090, %v1092
        %v1094 = vadd.f32 %v1090, %v1093
        %vm1095 = vweird.f32 %v1090
        %v1096 = vsel %vm1095, %v1090, %v1094
        %v1097 = vmul.f32 %v1089, %v1096
        %v1098 = vsub.f32 %v1075, %v1097
        %v1099 = vmul.f32 %v1098, %v1098
        %v1100 = vsel %vm983, %v1099, 0.0
        %1101 = vadd.xlane.f32.xlu0 %v1100
        %v1102 = vpop.xlane.xlu0 %1101
        %v1103 = vmul.f32 %v1102, %v996
        %v1104 = vrot.slane %v1103, 4
        %v1105 = vadd.f32 %v1103, %v1104
        %v1106 = vrot.slane %v1105, 2
        %v1107 = vadd.f32 %v1105, %v1106
        %v1108 = vrot.slane %v1107, 1
        %v1109 = vadd.f32 %v1107, %v1108
        %v1110 = vmul.f32 %v1109, %v1096
        %v1111 = vadd.f32 %v1110, 1e-05
        %v1112 = vrsqrt.pop %v1111
        %v1113 = vmul.f32 %v1112, %v1111
        %v1114 = vmul.f32 %v1113, %v1112
        %v1115 = vmul.f32 0.5, %v1114
        %v1116 = vsub.f32 1.5, %v1115
        %v1117 = vmul.f32 %v1112, %v1116
        %vm1118 = vweird.f32 %v1111
        %vm1119 = vweird.f32 %v1112
        %vm1120 = vmor %vm1118, %vm1119
        %v1121 = vsel %vm1120, %v1112, %v1117
        %v1122 = vmul.f32 %v1098, %v1121
        %v1123 = vmul.f32 %v1122, %v1078
        %v1124 = vadd.f32 %v1123, %v1079
        %v1125 = vmax.f32 %v1124, 0.0
        %v1126 = vld [vmem:[#allocation8] sm:$0xff]
        %v1127 = vadd.f32 %v1125, %v1126
        %v1128 = vld [vmem:[%s10] sm:$0xf]
        %v1129 = vld [vmem:[%s10 + $0x4] sm:$0xf]
        %v1130 = vld [vmem:[%s10 + $0x8] sm:$0xf]
        %v1131 = vld [vmem:[%s10 + $0xc] sm:$0xf]
        %v1132 = vpack.c.bf16 %v1127, %v1127
        %v1133 = vld [vmem:[#allocation10] sm:$0x1]
        %v1135 = vperm.slane %v1133, 0
        %v1141 = vunpack.c.l.b16 %v1128
        %v1142 = vunpack.c.l.b16 %v1129
        %v1143 = vunpack.c.l.b16 %v1130
        %v1144 = vunpack.c.l.b16 %v1131
        %v1145 = vpack.c.b16 %v1142, %v1141
        %v1146 = vpack.c.b16 %v1144, %v1143
        %v1150 = vsel %vm983, %v1132, 0
        %1152 = vmatpush.bf16.msra.mxu0 0
        %1153 = vmatpush.bf16.msra.mxu0 0
        %1154 = vmatpush.bf16.msra.mxu0 0
        %1155 = vmatpush.bf16.msra.mxu0 0
        %1156 = vmatpush.bf16.msra.mxu0 0
        %1157 = vmatpush.bf16.msra.mxu0 0
        %1158 = vmatpush.bf16.msra.mxu0 %v1146
        %1159 = vmatpush.bf16.msra.mxu0 %v1145
        %1160 = vmatmul.bf16.gmra.mxu0 %v1150
        %v1161 = vpop.f32.mrf.mxu0
        %v1162 = vadd.f32 %v1135, %v1161
        %v1163 = vpop.f32.mrf.mxu0
        %1164 = vdwg.mxu0
        %v1165 = vpack.c.bf16 %v1162, %v1162
        %v1167 = vunpack.c.l.b16 %v1165
        %v1168 = vpack.c.b16 %v1167, %v1167
        %1169 = vrot.lane.b32.xlu0 %v1168, 96
        %v1170 = vpop.permute.xlu0 %1169
        %vm1171 = vcmask 64512
        %v1173 = vsel %vm1171, %v1165, 0
        %v1176 = vsel %vm1171, %v1170, 0
        %1178 = vmatpush.bf16.xpose.msra.mxu0 0
        %1179 = vmatpush.bf16.xpose.msra.mxu0 0
        %1180 = vmatpush.bf16.xpose.msra.mxu0 0
        %1181 = vmatpush.bf16.xpose.msra.mxu0 0
        %1182 = vmatpush.bf16.xpose.msra.mxu0 0
        %1183 = vmatpush.bf16.xpose.msra.mxu0 0
        %1184 = vmatpush.bf16.xpose.msra.mxu0 0
        %1185 = vmatpush.bf16.xpose.msra.mxu0 %v1176
        %1186 = vmatmul.bf16.gmra.mxu0 %v1173
        %v1187 = vpop.f32.mrf.mxu0
        %v1188 = vadd.f32 0.0, %v1187
        %v1189 = vpop.f32.mrf.mxu0
        %1190 = vdwg.mxu0
        %v1191 = vmul.f32 %v1188, 0.35355338
        %v1192 = vsel %vm1171, %v1191, -inf
        %1193 = vmax.xlane.f32.xlu0 %v1192
        %v1194 = vpop.xlane.xlu0 %1193
        %v1195 = vsub.f32 %v1191, %v1194
        %v1196 = vmul.f32 %v1195, 1.442695
        %v1197 = vpow.pop %v1196
        %v1198 = vsel %vm1171, %v1197, 0.0
        %1199 = vadd.xlane.f32.xlu0 %v1198
        %v1200 = vpop.xlane.xlu0 %1199
        %v1201 = vrcp.pop %v1200
        %v1202 = vmul.f32 %v1200, %v1201
        %v1203 = vsub.f32 1.0, %v1202
        %v1204 = vmul.f32 %v1201, %v1203
        %v1205 = vadd.f32 %v1201, %v1204
        %vm1206 = vweird.f32 %v1200
        %vm1207 = vweird.f32 %v1201
        %vm1208 = vmor %vm1206, %vm1207
        %v1209 = vsel %vm1208, %v1201, %v1205
        %v1210 = vand.u32 2147483647, %v1200
        %vm1211 = vcmp.eq.f32.partialorder %v1210, 8.507059e+37
        %v1212 = vand.u32 %v1200, 2147483648
        %v1213 = vor.u32 1.1754944e-38, %v1212
        %v1214 = vsel %vm1211, %v1213, %v1209
        %v1215 = vmul.f32 %v1197, %v1214
        %v1216 = vpack.c.bf16 %v1215, %v1215
        %1217 = vrot.lane.b32.xlu0 %v1168, 64
        %v1218 = vpop.permute.xlu0 %1217
        %v1220 = vsel %vm1171, %v1216, 0
        %vm1222 = vcmask 1043456
        %v1224 = vsel %vm1222, %v1218, 0
        %1226 = vmatpush.bf16.msra.mxu0 0
        %1227 = vmatpush.bf16.msra.mxu0 0
        %1228 = vmatpush.bf16.msra.mxu0 0
        %1229 = vmatpush.bf16.msra.mxu0 0
        %1230 = vmatpush.bf16.msra.mxu0 0
        %1231 = vmatpush.bf16.msra.mxu0 0
        %1232 = vmatpush.bf16.msra.mxu0 0
        %1233 = vmatpush.bf16.msra.mxu0 %v1224
        %1234 = vmatmul.bf16.gmra.mxu0 %v1220
        %v1235 = vpop.f32.mrf.mxu0
        %v1236 = vadd.f32 0.0, %v1235
        %v1237 = vpop.f32.mrf.mxu0
        %1238 = vdwg.mxu0
        %1239 = vrot.lane.b32.xlu0 %v1168, 120
        %v1240 = vpop.permute.xlu0 %1239
        %1241 = vrot.lane.b32.xlu0 %v1168, 88
        %v1242 = vpop.permute.xlu0 %1241
        %v1244 = vsel %vm1171, %v1240, 0
        %v1247 = vsel %vm1171, %v1242, 0
        %1249 = vmatpush.bf16.xpose.msra.mxu0 0
        %1250 = vmatpush.bf16.xpose.msra.mxu0 0
        %1251 = vmatpush.bf16.xpose.msra.mxu0 0
        %1252 = vmatpush.bf16.xpose.msra.mxu0 0
        %1253 = vmatpush.bf16.xpose.msra.mxu0 0
        %1254 = vmatpush.bf16.xpose.msra.mxu0 0
        %1255 = vmatpush.bf16.xpose.msra.mxu0 0
        %1256 = vmatpush.bf16.xpose.msra.mxu0 %v1247
        %1257 = vmatmul.bf16.gmra.mxu0 %v1244
        %v1258 = vpop.f32.mrf.mxu0
        %v1259 = vadd.f32 0.0, %v1258
        %v1260 = vpop.f32.mrf.mxu0
        %1261 = vdwg.mxu0
        %v1262 = vmul.f32 %v1259, 0.35355338
        %v1263 = vsel %vm1171, %v1262, -inf
        %1264 = vmax.xlane.f32.xlu0 %v1263
        %v1265 = vpop.xlane.xlu0 %1264
        %v1266 = vsub.f32 %v1262, %v1265
        %v1267 = vmul.f32 %v1266, 1.442695
        %v1268 = vpow.pop %v1267
        %v1269 = vsel %vm1171, %v1268, 0.0
        %1270 = vadd.xlane.f32.xlu0 %v1269
        %v1271 = vpop.xlane.xlu0 %1270
        %v1272 = vrcp.pop %v1271
        %v1273 = vmul.f32 %v1271, %v1272
        %v1274 = vsub.f32 1.0, %v1273
        %v1275 = vmul.f32 %v1272, %v1274
        %v1276 = vadd.f32 %v1272, %v1275
        %vm1277 = vweird.f32 %v1271
        %vm1278 = vweird.f32 %v1272
        %vm1279 = vmor %vm1277, %vm1278
        %v1280 = vsel %vm1279, %v1272, %v1276
        %v1281 = vand.u32 2147483647, %v1271
        %vm1282 = vcmp.eq.f32.partialorder %v1281, 8.507059e+37
        %v1283 = vand.u32 %v1271, 2147483648
        %v1284 = vor.u32 1.1754944e-38, %v1283
        %v1285 = vsel %vm1282, %v1284, %v1280
        %v1286 = vmul.f32 %v1268, %v1285
        %v1287 = vpack.c.bf16 %v1286, %v1286
        %1288 = vrot.lane.b32.xlu0 %v1168, 56
        %v1289 = vpop.permute.xlu0 %1288
        %v1291 = vsel %vm1171, %v1287, 0
        %v1294 = vsel %vm1222, %v1289, 0
        %1296 = vmatpush.bf16.msra.mxu0 0
        %1297 = vmatpush.bf16.msra.mxu0 0
        %1298 = vmatpush.bf16.msra.mxu0 0
        %1299 = vmatpush.bf16.msra.mxu0 0
        %1300 = vmatpush.bf16.msra.mxu0 0
        %1301 = vmatpush.bf16.msra.mxu0 0
        %1302 = vmatpush.bf16.msra.mxu0 0
        %1303 = vmatpush.bf16.msra.mxu0 %v1294
        %1304 = vmatmul.bf16.gmra.mxu0 %v1291
        %v1305 = vpop.f32.mrf.mxu0
        %v1306 = vadd.f32 0.0, %v1305
        %v1307 = vpop.f32.mrf.mxu0
        %1308 = vdwg.mxu0
        %1309 = vrot.lane.b32.xlu0 %v1168, 112
        %v1310 = vpop.permute.xlu0 %1309
        %1311 = vrot.lane.b32.xlu0 %v1168, 80
        %v1312 = vpop.permute.xlu0 %1311
        %v1314 = vsel %vm1171, %v1310, 0
        %v1317 = vsel %vm1171, %v1312, 0
        %1319 = vmatpush.bf16.xpose.msra.mxu0 0
        %1320 = vmatpush.bf16.xpose.msra.mxu0 0
        %1321 = vmatpush.bf16.xpose.msra.mxu0 0
        %1322 = vmatpush.bf16.xpose.msra.mxu0 0
        %1323 = vmatpush.bf16.xpose.msra.mxu0 0
        %1324 = vmatpush.bf16.xpose.msra.mxu0 0
        %1325 = vmatpush.bf16.xpose.msra.mxu0 0
        %1326 = vmatpush.bf16.xpose.msra.mxu0 %v1317
        %1327 = vmatmul.bf16.gmra.mxu0 %v1314
        %v1328 = vpop.f32.mrf.mxu0
        %v1329 = vadd.f32 0.0, %v1328
        %v1330 = vpop.f32.mrf.mxu0
        %1331 = vdwg.mxu0
        %v1332 = vmul.f32 %v1329, 0.35355338
        %v1333 = vsel %vm1171, %v1332, -inf
        %1334 = vmax.xlane.f32.xlu0 %v1333
        %v1335 = vpop.xlane.xlu0 %1334
        %v1336 = vsub.f32 %v1332, %v1335
        %v1337 = vmul.f32 %v1336, 1.442695
        %v1338 = vpow.pop %v1337
        %v1339 = vsel %vm1171, %v1338, 0.0
        %1340 = vadd.xlane.f32.xlu0 %v1339
        %v1341 = vpop.xlane.xlu0 %1340
        %v1342 = vrcp.pop %v1341
        %v1343 = vmul.f32 %v1341, %v1342
        %v1344 = vsub.f32 1.0, %v1343
        %v1345 = vmul.f32 %v1342, %v1344
        %v1346 = vadd.f32 %v1342, %v1345
        %vm1347 = vweird.f32 %v1341
        %vm1348 = vweird.f32 %v1342
        %vm1349 = vmor %vm1347, %vm1348
        %v1350 = vsel %vm1349, %v1342, %v1346
        %v1351 = vand.u32 2147483647, %v1341
        %vm1352 = vcmp.eq.f32.partialorder %v1351, 8.507059e+37
        %v1353 = vand.u32 %v1341, 2147483648
        %v1354 = vor.u32 1.1754944e-38, %v1353
        %v1355 = vsel %vm1352, %v1354, %v1350
        %v1356 = vmul.f32 %v1338, %v1355
        %v1357 = vpack.c.bf16 %v1356, %v1356
        %1358 = vrot.lane.b32.xlu0 %v1168, 48
        %v1359 = vpop.permute.xlu0 %1358
        %v1361 = vsel %vm1171, %v1357, 0
        %v1364 = vsel %vm1222, %v1359, 0
        %1366 = vmatpush.bf16.msra.mxu0 0
        %1367 = vmatpush.bf16.msra.mxu0 0
        %1368 = vmatpush.bf16.msra.mxu0 0
        %1369 = vmatpush.bf16.msra.mxu0 0
        %1370 = vmatpush.bf16.msra.mxu0 0
        %1371 = vmatpush.bf16.msra.mxu0 0
        %1372 = vmatpush.bf16.msra.mxu0 0
        %1373 = vmatpush.bf16.msra.mxu0 %v1364
        %1374 = vmatmul.bf16.gmra.mxu0 %v1361
        %v1375 = vpop.f32.mrf.mxu0
        %v1376 = vadd.f32 0.0, %v1375
        %v1377 = vpop.f32.mrf.mxu0
        %1378 = vdwg.mxu0
        %1379 = vrot.lane.b32.xlu0 %v1168, 104
        %v1380 = vpop.permute.xlu0 %1379
        %1381 = vrot.lane.b32.xlu0 %v1168, 72
        %v1382 = vpop.permute.xlu0 %1381
        %v1384 = vsel %vm1171, %v1380, 0
        %v1387 = vsel %vm1171, %v1382, 0
        %1389 = vmatpush.bf16.xpose.msra.mxu0 0
        %1390 = vmatpush.bf16.xpose.msra.mxu0 0
        %1391 = vmatpush.bf16.xpose.msra.mxu0 0
        %1392 = vmatpush.bf16.xpose.msra.mxu0 0
        %1393 = vmatpush.bf16.xpose.msra.mxu0 0
        %1394 = vmatpush.bf16.xpose.msra.mxu0 0
        %1395 = vmatpush.bf16.xpose.msra.mxu0 0
        %1396 = vmatpush.bf16.xpose.msra.mxu0 %v1387
        %1397 = vmatmul.bf16.gmra.mxu0 %v1384
        %v1398 = vpop.f32.mrf.mxu0
        %v1399 = vadd.f32 0.0, %v1398
        %v1400 = vpop.f32.mrf.mxu0
        %1401 = vdwg.mxu0
        %v1402 = vmul.f32 %v1399, 0.35355338
        %v1403 = vsel %vm1171, %v1402, -inf
        %1404 = vmax.xlane.f32.xlu0 %v1403
        %v1405 = vpop.xlane.xlu0 %1404
        %v1406 = vsub.f32 %v1402, %v1405
        %v1407 = vmul.f32 %v1406, 1.442695
        %v1408 = vpow.pop %v1407
        %v1409 = vsel %vm1171, %v1408, 0.0
        %1410 = vadd.xlane.f32.xlu0 %v1409
        %v1411 = vpop.xlane.xlu0 %1410
        %v1412 = vrcp.pop %v1411
        %v1413 = vmul.f32 %v1411, %v1412
        %v1414 = vsub.f32 1.0, %v1413
        %v1415 = vmul.f32 %v1412, %v1414
        %v1416 = vadd.f32 %v1412, %v1415
        %vm1417 = vweird.f32 %v1411
        %vm1418 = vweird.f32 %v1412
        %vm1419 = vmor %vm1417, %vm1418
        %v1420 = vsel %vm1419, %v1412, %v1416
        %v1421 = vand.u32 2147483647, %v1411
        %vm1422 = vcmp.eq.f32.partialorder %v1421, 8.507059e+37
        %v1423 = vand.u32 %v1411, 2147483648
        %v1424 = vor.u32 1.1754944e-38, %v1423
        %v1425 = vsel %vm1422, %v1424, %v1420
        %v1426 = vmul.f32 %v1408, %v1425
        %v1427 = vpack.c.bf16 %v1426, %v1426
        %1428 = vrot.lane.b32.xlu0 %v1168, 40
        %v1429 = vpop.permute.xlu0 %1428
        %v1431 = vsel %vm1171, %v1427, 0
        %v1434 = vsel %vm1222, %v1429, 0
        %1436 = vmatpush.bf16.msra.mxu0 0
        %1437 = vmatpush.bf16.msra.mxu0 0
        %1438 = vmatpush.bf16.msra.mxu0 0
        %1439 = vmatpush.bf16.msra.mxu0 0
        %1440 = vmatpush.bf16.msra.mxu0 0
        %1441 = vmatpush.bf16.msra.mxu0 0
        %1442 = vmatpush.bf16.msra.mxu0 0
        %1443 = vmatpush.bf16.msra.mxu0 %v1434
        %1444 = vmatmul.bf16.gmra.mxu0 %v1431
        %v1445 = vpop.f32.mrf.mxu0
        %v1446 = vadd.f32 0.0, %v1445
        %v1447 = vpop.f32.mrf.mxu0
        %1448 = vdwg.mxu0
        %1450 = vrot.lane.b32.xlu0 %v1306, 8
        %v1451 = vpop.permute.xlu0 %1450
        %1454 = vrot.lane.b32.xlu0 %v1376, 16
        %v1455 = vpop.permute.xlu0 %1454
        %1458 = vrot.lane.b32.xlu0 %v1446, 24
        %v1459 = vpop.permute.xlu0 %1458
        %v1461 = vsel %vm1171, %v1236, %v1451
        %v1462 = vsel %vm1061, %v1461, %v1455
        %vm1463 = vcmask 195584
        %v1464 = vsel %vm1463, %v1462, %v1459
        %v1465 = vld [vmem:[%s12] sm:$0xf]
        %v1466 = vld [vmem:[%s12 + $0x4] sm:$0xf]
        %v1467 = vld [vmem:[%s12 + $0x8] sm:$0xf]
        %v1468 = vld [vmem:[%s12 + $0xc] sm:$0xf]
        %v1469 = vpack.c.bf16 %v1464, %v1464
        %v1470 = vld [vmem:[#allocation11] sm:$0x1]
        %v1472 = vperm.slane %v1470, 0
        %v1478 = vunpack.c.l.b16 %v1465
        %v1479 = vunpack.c.l.b16 %v1466
        %v1480 = vunpack.c.l.b16 %v1467
        %v1481 = vunpack.c.l.b16 %v1468
        %v1482 = vpack.c.b16 %v1479, %v1478
        %v1483 = vpack.c.b16 %v1481, %v1480
        %v1487 = vsel %vm983, %v1469, 0
        %1489 = vmatpush.bf16.msra.mxu0 0
        %1490 = vmatpush.bf16.msra.mxu0 0
        %1491 = vmatpush.bf16.msra.mxu0 0
        %1492 = vmatpush.bf16.msra.mxu0 0
        %1493 = vmatpush.bf16.msra.mxu0 0
        %1494 = vmatpush.bf16.msra.mxu0 0
        %1495 = vmatpush.bf16.msra.mxu0 %v1483
        %1496 = vmatpush.bf16.msra.mxu0 %v1482
        %1497 = vmatmul.bf16.gmra.mxu0 %v1487
        %v1498 = vpop.f32.mrf.mxu0
        %v1499 = vadd.f32 %v1472, %v1498
        %v1500 = vpop.f32.mrf.mxu0
        %1501 = vdwg.mxu0
        %v1502 = vadd.f32 %v1127, %v1499
        %v1503 = vld [vmem:[#allocation13] sm:$0x1]
        %v1504 = vld [vmem:[#allocation14] sm:$0x1]
        %v1505 = vsel %vm983, %v1502, 0.0
        %1506 = vadd.xlane.f32.xlu0 %v1505
        %v1507 = vpop.xlane.xlu0 %1506
        %v1508 = vmul.f32 %v1507, %v996
        %v1509 = vsub.f32 %v1502, %v1508
        %v1510 = vmul.f32 %v1509, %v1509
        %v1511 = vsel %vm983, %v1510, 0.0
        %1512 = vadd.xlane.f32.xlu0 %v1511
        %v1513 = vpop.xlane.xlu0 %1512
        %v1514 = vmul.f32 %v1513, %v996
        %v1515 = vadd.f32 %v1514, 1e-05
        %v1516 = vrsqrt.pop %v1515
        %v1517 = vmul.f32 %v1516, %v1515
        %v1518 = vmul.f32 %v1517, %v1516
        %v1519 = vmul.f32 0.5, %v1518
        %v1520 = vsub.f32 1.5, %v1519
        %v1521 = vmul.f32 %v1516, %v1520
        %vm1522 = vweird.f32 %v1515
        %vm1523 = vweird.f32 %v1516
        %vm1524 = vmor %vm1522, %vm1523
        %v1525 = vsel %vm1524, %v1516, %v1521
        %v1526 = vmul.f32 %v1509, %v1525
        %v1528 = vperm.slane %v1503, 0
        %v1530 = vmul.f32 %v1526, %v1528
        %v1532 = vperm.slane %v1504, 0
        %v1534 = vadd.f32 %v1530, %v1532
        %v1535 = vld [vmem:[%s16] sm:$0xf]
        %v1536 = vld [vmem:[%s16 + $0x4] sm:$0xf]
        %v1537 = vld [vmem:[%s16 + $0x8] sm:$0xf]
        %v1538 = vld [vmem:[%s16 + $0xc] sm:$0xf]
        %v1539 = vpack.c.bf16 %v1534, %v1534
        %v1540 = vld [vmem:[#allocation16] sm:$0x1]
        %v1542 = vperm.slane %v1540, 0
        %v1548 = vunpack.c.l.b16 %v1535
        %v1549 = vunpack.c.l.b16 %v1536
        %v1550 = vunpack.c.l.b16 %v1537
        %v1551 = vunpack.c.l.b16 %v1538
        %v1552 = vpack.c.b16 %v1549, %v1548
        %v1553 = vpack.c.b16 %v1551, %v1550
        %v1557 = vsel %vm983, %v1539, 0
        %1559 = vmatpush.bf16.msra.mxu0 0
        %1560 = vmatpush.bf16.msra.mxu0 0
        %1561 = vmatpush.bf16.msra.mxu0 0
        %1562 = vmatpush.bf16.msra.mxu0 0
        %1563 = vmatpush.bf16.msra.mxu0 0
        %1564 = vmatpush.bf16.msra.mxu0 0
        %1565 = vmatpush.bf16.msra.mxu0 %v1553
        %1566 = vmatpush.bf16.msra.mxu0 %v1552
        %1567 = vmatmul.bf16.gmra.mxu0 %v1557
        %v1568 = vpop.f32.mrf.mxu0
        %v1569 = vadd.f32 %v1542, %v1568
        %v1570 = vpop.f32.mrf.mxu0
        %1571 = vdwg.mxu0
        %v1572 = vmax.f32 %v1569, 0.0
        %v1573 = vld [vmem:[%s18] sm:$0xf]
        %v1574 = vld [vmem:[%s18 + $0x4] sm:$0xf]
        %v1575 = vld [vmem:[%s18 + $0x8] sm:$0xf]
        %v1576 = vld [vmem:[%s18 + $0xc] sm:$0xf]
        %v1577 = vld [vmem:[%s18 + $0x10] sm:$0xf]
        %v1578 = vld [vmem:[%s18 + $0x14] sm:$0xf]
        %v1579 = vld [vmem:[%s18 + $0x18] sm:$0xf]
        %v1580 = vld [vmem:[%s18 + $0x1c] sm:$0xf]
        %v1581 = vpack.c.bf16 %v1572, %v1572
        %v1582 = vld [vmem:[%s19] sm:$0x1]
        %v1584 = vperm.slane %v1582, 0
        %v1594 = vunpack.c.l.b16 %v1573
        %v1595 = vunpack.c.l.b16 %v1574
        %v1596 = vunpack.c.l.b16 %v1575
        %v1597 = vunpack.c.l.b16 %v1576
        %v1598 = vunpack.c.l.b16 %v1577
        %v1599 = vunpack.c.l.b16 %v1578
        %v1600 = vunpack.c.l.b16 %v1579
        %v1601 = vunpack.c.l.b16 %v1580
        %v1602 = vpack.c.b16 %v1595, %v1594
        %v1603 = vpack.c.b16 %v1597, %v1596
        %v1604 = vpack.c.b16 %v1599, %v1598
        %v1605 = vpack.c.b16 %v1601, %v1600
        %vm1610 = vcmask 523264
        %v1612 = vsel %vm1610, %v1581, 0
        %1614 = vmatpush.bf16.msra.mxu0 0
        %1615 = vmatpush.bf16.msra.mxu0 0
        %1616 = vmatpush.bf16.msra.mxu0 0
        %1617 = vmatpush.bf16.msra.mxu0 0
        %1618 = vmatpush.bf16.msra.mxu0 %v1605
        %1619 = vmatpush.bf16.msra.mxu0 %v1604
        %1620 = vmatpush.bf16.msra.mxu0 %v1603
        %1621 = vmatpush.bf16.msra.mxu0 %v1602
        %1622 = vmatmul.bf16.gmra.mxu0 %v1612
        %v1623 = vpop.f32.mrf.mxu0
        %v1624 = vadd.f32 %v1584, %v1623
        %v1625 = vpop.f32.mrf.mxu0
        %1626 = vdwg.mxu0
        %v1627 = vadd.f32 %v1534, %v1624
        %v1628 = vld [vmem:[%s20] sm:$0x1]
        %v1629 = vld [vmem:[#allocation17] sm:$0x1]
        %v1630 = vsel %vm983, %v1627, 0.0
        %1631 = vadd.xlane.f32.xlu0 %v1630
        %v1632 = vpop.xlane.xlu0 %1631
        %v1633 = vmul.f32 %v1632, %v996
        %v1634 = vsub.f32 %v1627, %v1633
        %v1635 = vmul.f32 %v1634, %v1634
        %v1636 = vsel %vm983, %v1635, 0.0
        %1637 = vadd.xlane.f32.xlu0 %v1636
        %v1638 = vpop.xlane.xlu0 %1637
        %v1639 = vmul.f32 %v1638, %v996
        %v1640 = vadd.f32 %v1639, 1e-05
        %v1641 = vrsqrt.pop %v1640
        %v1642 = vmul.f32 %v1641, %v1640
        %v1643 = vmul.f32 %v1642, %v1641
        %v1644 = vmul.f32 0.5, %v1643
        %v1645 = vsub.f32 1.5, %v1644
        %v1646 = vmul.f32 %v1641, %v1645
        %vm1647 = vweird.f32 %v1640
        %vm1648 = vweird.f32 %v1641
        %vm1649 = vmor %vm1647, %vm1648
        %v1650 = vsel %vm1649, %v1641, %v1646
        %v1651 = vmul.f32 %v1634, %v1650
        %v1653 = vperm.slane %v1628, 0
        %v1655 = vmul.f32 %v1651, %v1653
        %v1657 = vperm.slane %v1629, 0
        %v1659 = vadd.f32 %v1655, %v1657
        %s1660 = scalar_lea.vmem %s10, 16
        %v1661 = vld [vmem:[%s1660] sm:$0xf]
        %v1662 = vld [vmem:[%s1660 + $0x4] sm:$0xf]
        %v1663 = vld [vmem:[%s1660 + $0x8] sm:$0xf]
        %v1664 = vld [vmem:[%s1660 + $0xc] sm:$0xf]
        %v1665 = vpack.c.bf16 %v1659, %v1659
        %s1666 = scalar_lea.vmem [#allocation10], 1
        %v1667 = vld [vmem:[%s1666] sm:$0x1]
        %v1669 = vperm.slane %v1667, 0
        %v1675 = vunpack.c.l.b16 %v1661
        %v1676 = vunpack.c.l.b16 %v1662
        %v1677 = vunpack.c.l.b16 %v1663
        %v1678 = vunpack.c.l.b16 %v1664
        %v1679 = vpack.c.b16 %v1676, %v1675
        %v1680 = vpack.c.b16 %v1678, %v1677
        %v1684 = vsel %vm983, %v1665, 0
        %1686 = vmatpush.bf16.msra.mxu0 0
        %1687 = vmatpush.bf16.msra.mxu0 0
        %1688 = vmatpush.bf16.msra.mxu0 0
        %1689 = vmatpush.bf16.msra.mxu0 0
        %1690 = vmatpush.bf16.msra.mxu0 0
        %1691 = vmatpush.bf16.msra.mxu0 0
        %1692 = vmatpush.bf16.msra.mxu0 %v1680
        %1693 = vmatpush.bf16.msra.mxu0 %v1679
        %1694 = vmatmul.bf16.gmra.mxu0 %v1684
        %v1695 = vpop.f32.mrf.mxu0
        %v1696 = vadd.f32 %v1669, %v1695
        %v1697 = vpop.f32.mrf.mxu0
        %1698 = vdwg.mxu0
        %v1699 = vpack.c.bf16 %v1696, %v1696
        %v1701 = vunpack.c.l.b16 %v1699
        %v1702 = vpack.c.b16 %v1701, %v1701
        %1703 = vrot.lane.b32.xlu0 %v1702, 96
        %v1704 = vpop.permute.xlu0 %1703
        %v1706 = vsel %vm1171, %v1699, 0
        %v1709 = vsel %vm1171, %v1704, 0
        %1711 = vmatpush.bf16.xpose.msra.mxu0 0
        %1712 = vmatpush.bf16.xpose.msra.mxu0 0
        %1713 = vmatpush.bf16.xpose.msra.mxu0 0
        %1714 = vmatpush.bf16.xpose.msra.mxu0 0
        %1715 = vmatpush.bf16.xpose.msra.mxu0 0
        %1716 = vmatpush.bf16.xpose.msra.mxu0 0
        %1717 = vmatpush.bf16.xpose.msra.mxu0 0
        %1718 = vmatpush.bf16.xpose.msra.mxu0 %v1709
        %1719 = vmatmul.bf16.gmra.mxu0 %v1706
        %v1720 = vpop.f32.mrf.mxu0
        %v1721 = vadd.f32 0.0, %v1720
        %v1722 = vpop.f32.mrf.mxu0
        %1723 = vdwg.mxu0
        %v1724 = vmul.f32 %v1721, 0.35355338
        %v1725 = vsel %vm1171, %v1724, -inf
        %1726 = vmax.xlane.f32.xlu0 %v1725
        %v1727 = vpop.xlane.xlu0 %1726
        %v1728 = vsub.f32 %v1724, %v1727
        %v1729 = vmul.f32 %v1728, 1.442695
        %v1730 = vpow.pop %v1729
        %v1731 = vsel %vm1171, %v1730, 0.0
        %1732 = vadd.xlane.f32.xlu0 %v1731
        %v1733 = vpop.xlane.xlu0 %1732
        %v1734 = vrcp.pop %v1733
        %v1735 = vmul.f32 %v1733, %v1734
        %v1736 = vsub.f32 1.0, %v1735
        %v1737 = vmul.f32 %v1734, %v1736
        %v1738 = vadd.f32 %v1734, %v1737
        %vm1739 = vweird.f32 %v1733
        %vm1740 = vweird.f32 %v1734
        %vm1741 = vmor %vm1739, %vm1740
        %v1742 = vsel %vm1741, %v1734, %v1738
        %v1743 = vand.u32 2147483647, %v1733
        %vm1744 = vcmp.eq.f32.partialorder %v1743, 8.507059e+37
        %v1745 = vand.u32 %v1733, 2147483648
        %v1746 = vor.u32 1.1754944e-38, %v1745
        %v1747 = vsel %vm1744, %v1746, %v1742
        %v1748 = vmul.f32 %v1730, %v1747
        %v1749 = vpack.c.bf16 %v1748, %v1748
        %1750 = vrot.lane.b32.xlu0 %v1702, 64
        %v1751 = vpop.permute.xlu0 %1750
        %v1753 = vsel %vm1171, %v1749, 0
        %v1756 = vsel %vm1222, %v1751, 0
        %1758 = vmatpush.bf16.msra.mxu0 0
        %1759 = vmatpush.bf16.msra.mxu0 0
        %1760 = vmatpush.bf16.msra.mxu0 0
        %1761 = vmatpush.bf16.msra.mxu0 0
        %1762 = vmatpush.bf16.msra.mxu0 0
        %1763 = vmatpush.bf16.msra.mxu0 0
        %1764 = vmatpush.bf16.msra.mxu0 0
        %1765 = vmatpush.bf16.msra.mxu0 %v1756
        %1766 = vmatmul.bf16.gmra.mxu0 %v1753
        %v1767 = vpop.f32.mrf.mxu0
        %v1768 = vadd.f32 0.0, %v1767
        %v1769 = vpop.f32.mrf.mxu0
        %1770 = vdwg.mxu0
        %1771 = vrot.lane.b32.xlu0 %v1702, 120
        %v1772 = vpop.permute.xlu0 %1771
        %1773 = vrot.lane.b32.xlu0 %v1702, 88
        %v1774 = vpop.permute.xlu0 %1773
        %v1776 = vsel %vm1171, %v1772, 0
        %v1779 = vsel %vm1171, %v1774, 0
        %1781 = vmatpush.bf16.xpose.msra.mxu0 0
        %1782 = vmatpush.bf16.xpose.msra.mxu0 0
        %1783 = vmatpush.bf16.xpose.msra.mxu0 0
        %1784 = vmatpush.bf16.xpose.msra.mxu0 0
        %1785 = vmatpush.bf16.xpose.msra.mxu0 0
        %1786 = vmatpush.bf16.xpose.msra.mxu0 0
        %1787 = vmatpush.bf16.xpose.msra.mxu0 0
        %1788 = vmatpush.bf16.xpose.msra.mxu0 %v1779
        %1789 = vmatmul.bf16.gmra.mxu0 %v1776
        %v1790 = vpop.f32.mrf.mxu0
        %v1791 = vadd.f32 0.0, %v1790
        %v1792 = vpop.f32.mrf.mxu0
        %1793 = vdwg.mxu0
        %v1794 = vmul.f32 %v1791, 0.35355338
        %v1795 = vsel %vm1171, %v1794, -inf
        %1796 = vmax.xlane.f32.xlu0 %v1795
        %v1797 = vpop.xlane.xlu0 %1796
        %v1798 = vsub.f32 %v1794, %v1797
        %v1799 = vmul.f32 %v1798, 1.442695
        %v1800 = vpow.pop %v1799
        %v1801 = vsel %vm1171, %v1800, 0.0
        %1802 = vadd.xlane.f32.xlu0 %v1801
        %v1803 = vpop.xlane.xlu0 %1802
        %v1804 = vrcp.pop %v1803
        %v1805 = vmul.f32 %v1803, %v1804
        %v1806 = vsub.f32 1.0, %v1805
        %v1807 = vmul.f32 %v1804, %v1806
        %v1808 = vadd.f32 %v1804, %v1807
        %vm1809 = vweird.f32 %v1803
        %vm1810 = vweird.f32 %v1804
        %vm1811 = vmor %vm1809, %vm1810
        %v1812 = vsel %vm1811, %v1804, %v1808
        %v1813 = vand.u32 2147483647, %v1803
        %vm1814 = vcmp.eq.f32.partialorder %v1813, 8.507059e+37
        %v1815 = vand.u32 %v1803, 2147483648
        %v1816 = vor.u32 1.1754944e-38, %v1815
        %v1817 = vsel %vm1814, %v1816, %v1812
        %v1818 = vmul.f32 %v1800, %v1817
        %v1819 = vpack.c.bf16 %v1818, %v1818
        %1820 = vrot.lane.b32.xlu0 %v1702, 56
        %v1821 = vpop.permute.xlu0 %1820
        %v1823 = vsel %vm1171, %v1819, 0
        %v1826 = vsel %vm1222, %v1821, 0
        %1828 = vmatpush.bf16.msra.mxu0 0
        %1829 = vmatpush.bf16.msra.mxu0 0
        %1830 = vmatpush.bf16.msra.mxu0 0
        %1831 = vmatpush.bf16.msra.mxu0 0
        %1832 = vmatpush.bf16.msra.mxu0 0
        %1833 = vmatpush.bf16.msra.mxu0 0
        %1834 = vmatpush.bf16.msra.mxu0 0
        %1835 = vmatpush.bf16.msra.mxu0 %v1826
        %1836 = vmatmul.bf16.gmra.mxu0 %v1823
        %v1837 = vpop.f32.mrf.mxu0
        %v1838 = vadd.f32 0.0, %v1837
        %v1839 = vpop.f32.mrf.mxu0
        %1840 = vdwg.mxu0
        %1841 = vrot.lane.b32.xlu0 %v1702, 112
        %v1842 = vpop.permute.xlu0 %1841
        %1843 = vrot.lane.b32.xlu0 %v1702, 80
        %v1844 = vpop.permute.xlu0 %1843
        %v1846 = vsel %vm1171, %v1842, 0
        %v1849 = vsel %vm1171, %v1844, 0
        %1851 = vmatpush.bf16.xpose.msra.mxu0 0
        %1852 = vmatpush.bf16.xpose.msra.mxu0 0
        %1853 = vmatpush.bf16.xpose.msra.mxu0 0
        %1854 = vmatpush.bf16.xpose.msra.mxu0 0
        %1855 = vmatpush.bf16.xpose.msra.mxu0 0
        %1856 = vmatpush.bf16.xpose.msra.mxu0 0
        %1857 = vmatpush.bf16.xpose.msra.mxu0 0
        %1858 = vmatpush.bf16.xpose.msra.mxu0 %v1849
        %1859 = vmatmul.bf16.gmra.mxu0 %v1846
        %v1860 = vpop.f32.mrf.mxu0
        %v1861 = vadd.f32 0.0, %v1860
        %v1862 = vpop.f32.mrf.mxu0
        %1863 = vdwg.mxu0
        %v1864 = vmul.f32 %v1861, 0.35355338
        %v1865 = vsel %vm1171, %v1864, -inf
        %1866 = vmax.xlane.f32.xlu0 %v1865
        %v1867 = vpop.xlane.xlu0 %1866
        %v1868 = vsub.f32 %v1864, %v1867
        %v1869 = vmul.f32 %v1868, 1.442695
        %v1870 = vpow.pop %v1869
        %v1871 = vsel %vm1171, %v1870, 0.0
        %1872 = vadd.xlane.f32.xlu0 %v1871
        %v1873 = vpop.xlane.xlu0 %1872
        %v1874 = vrcp.pop %v1873
        %v1875 = vmul.f32 %v1873, %v1874
        %v1876 = vsub.f32 1.0, %v1875
        %v1877 = vmul.f32 %v1874, %v1876
        %v1878 = vadd.f32 %v1874, %v1877
        %vm1879 = vweird.f32 %v1873
        %vm1880 = vweird.f32 %v1874
        %vm1881 = vmor %vm1879, %vm1880
        %v1882 = vsel %vm1881, %v1874, %v1878
        %v1883 = vand.u32 2147483647, %v1873
        %vm1884 = vcmp.eq.f32.partialorder %v1883, 8.507059e+37
        %v1885 = vand.u32 %v1873, 2147483648
        %v1886 = vor.u32 1.1754944e-38, %v1885
        %v1887 = vsel %vm1884, %v1886, %v1882
        %v1888 = vmul.f32 %v1870, %v1887
        %v1889 = vpack.c.bf16 %v1888, %v1888
        %1890 = vrot.lane.b32.xlu0 %v1702, 48
        %v1891 = vpop.permute.xlu0 %1890
        %v1893 = vsel %vm1171, %v1889, 0
        %v1896 = vsel %vm1222, %v1891, 0
        %1898 = vmatpush.bf16.msra.mxu0 0
        %1899 = vmatpush.bf16.msra.mxu0 0
        %1900 = vmatpush.bf16.msra.mxu0 0
        %1901 = vmatpush.bf16.msra.mxu0 0
        %1902 = vmatpush.bf16.msra.mxu0 0
        %1903 = vmatpush.bf16.msra.mxu0 0
        %1904 = vmatpush.bf16.msra.mxu0 0
        %1905 = vmatpush.bf16.msra.mxu0 %v1896
        %1906 = vmatmul.bf16.gmra.mxu0 %v1893
        %v1907 = vpop.f32.mrf.mxu0
        %v1908 = vadd.f32 0.0, %v1907
        %v1909 = vpop.f32.mrf.mxu0
        %1910 = vdwg.mxu0
        %1911 = vrot.lane.b32.xlu0 %v1702, 104
        %v1912 = vpop.permute.xlu0 %1911
        %1913 = vrot.lane.b32.xlu0 %v1702, 72
        %v1914 = vpop.permute.xlu0 %1913
        %v1916 = vsel %vm1171, %v1912, 0
        %v1919 = vsel %vm1171, %v1914, 0
        %1921 = vmatpush.bf16.xpose.msra.mxu0 0
        %1922 = vmatpush.bf16.xpose.msra.mxu0 0
        %1923 = vmatpush.bf16.xpose.msra.mxu0 0
        %1924 = vmatpush.bf16.xpose.msra.mxu0 0
        %1925 = vmatpush.bf16.xpose.msra.mxu0 0
        %1926 = vmatpush.bf16.xpose.msra.mxu0 0
        %1927 = vmatpush.bf16.xpose.msra.mxu0 0
        %1928 = vmatpush.bf16.xpose.msra.mxu0 %v1919
        %1929 = vmatmul.bf16.gmra.mxu0 %v1916
        %v1930 = vpop.f32.mrf.mxu0
        %v1931 = vadd.f32 0.0, %v1930
        %v1932 = vpop.f32.mrf.mxu0
        %1933 = vdwg.mxu0
        %v1934 = vmul.f32 %v1931, 0.35355338
        %v1935 = vsel %vm1171, %v1934, -inf
        %1936 = vmax.xlane.f32.xlu0 %v1935
        %v1937 = vpop.xlane.xlu0 %1936
        %v1938 = vsub.f32 %v1934, %v1937
        %v1939 = vmul.f32 %v1938, 1.442695
        %v1940 = vpow.pop %v1939
        %v1941 = vsel %vm1171, %v1940, 0.0
        %1942 = vadd.xlane.f32.xlu0 %v1941
        %v1943 = vpop.xlane.xlu0 %1942
        %v1944 = vrcp.pop %v1943
        %v1945 = vmul.f32 %v1943, %v1944
        %v1946 = vsub.f32 1.0, %v1945
        %v1947 = vmul.f32 %v1944, %v1946
        %v1948 = vadd.f32 %v1944, %v1947
        %vm1949 = vweird.f32 %v1943
        %vm1950 = vweird.f32 %v1944
        %vm1951 = vmor %vm1949, %vm1950
        %v1952 = vsel %vm1951, %v1944, %v1948
        %v1953 = vand.u32 2147483647, %v1943
        %vm1954 = vcmp.eq.f32.partialorder %v1953, 8.507059e+37
        %v1955 = vand.u32 %v1943, 2147483648
        %v1956 = vor.u32 1.1754944e-38, %v1955
        %v1957 = vsel %vm1954, %v1956, %v1952
        %v1958 = vmul.f32 %v1940, %v1957
        %v1959 = vpack.c.bf16 %v1958, %v1958
        %1960 = vrot.lane.b32.xlu0 %v1702, 40
        %v1961 = vpop.permute.xlu0 %1960
        %v1963 = vsel %vm1171, %v1959, 0
        %v1966 = vsel %vm1222, %v1961, 0
        %1968 = vmatpush.bf16.msra.mxu0 0
        %1969 = vmatpush.bf16.msra.mxu0 0
        %1970 = vmatpush.bf16.msra.mxu0 0
        %1971 = vmatpush.bf16.msra.mxu0 0
        %1972 = vmatpush.bf16.msra.mxu0 0
        %1973 = vmatpush.bf16.msra.mxu0 0
        %1974 = vmatpush.bf16.msra.mxu0 0
        %1975 = vmatpush.bf16.msra.mxu0 %v1966
        %1976 = vmatmul.bf16.gmra.mxu0 %v1963
        %v1977 = vpop.f32.mrf.mxu0
        %v1978 = vadd.f32 0.0, %v1977
        %v1979 = vpop.f32.mrf.mxu0
        %1980 = vdwg.mxu0
        %1982 = vrot.lane.b32.xlu0 %v1838, 8
        %v1983 = vpop.permute.xlu0 %1982
        %1986 = vrot.lane.b32.xlu0 %v1908, 16
        %v1987 = vpop.permute.xlu0 %1986
        %1990 = vrot.lane.b32.xlu0 %v1978, 24
        %v1991 = vpop.permute.xlu0 %1990
        %v1993 = vsel %vm1171, %v1768, %v1983
        %v1994 = vsel %vm1061, %v1993, %v1987
        %v1995 = vsel %vm1463, %v1994, %v1991
        %s1996 = scalar_lea.vmem %s12, 16
        %v1997 = vld [vmem:[%s1996] sm:$0xf]
        %v1998 = vld [vmem:[%s1996 + $0x4] sm:$0xf]
        %v1999 = vld [vmem:[%s1996 + $0x8] sm:$0xf]
        %v2000 = vld [vmem:[%s1996 + $0xc] sm:$0xf]
        %v2001 = vpack.c.bf16 %v1995, %v1995
        %s2002 = scalar_lea.vmem [#allocation11], 1
        %v2003 = vld [vmem:[%s2002] sm:$0x1]
        %v2005 = vperm.slane %v2003, 0
        %v2011 = vunpack.c.l.b16 %v1997
        %v2012 = vunpack.c.l.b16 %v1998
        %v2013 = vunpack.c.l.b16 %v1999
        %v2014 = vunpack.c.l.b16 %v2000
        %v2015 = vpack.c.b16 %v2012, %v2011
        %v2016 = vpack.c.b16 %v2014, %v2013
        %v2020 = vsel %vm983, %v2001, 0
        %2022 = vmatpush.bf16.msra.mxu0 0
        %2023 = vmatpush.bf16.msra.mxu0 0
        %2024 = vmatpush.bf16.msra.mxu0 0
        %2025 = vmatpush.bf16.msra.mxu0 0
        %2026 = vmatpush.bf16.msra.mxu0 0
        %2027 = vmatpush.bf16.msra.mxu0 0
        %2028 = vmatpush.bf16.msra.mxu0 %v2016
        %2029 = vmatpush.bf16.msra.mxu0 %v2015
        %2030 = vmatmul.bf16.gmra.mxu0 %v2020
        %v2031 = vpop.f32.mrf.mxu0
        %v2032 = vadd.f32 %v2005, %v2031
        %v2033 = vpop.f32.mrf.mxu0
        %2034 = vdwg.mxu0
        %v2035 = vadd.f32 %v1659, %v2032
        %s2036 = scalar_lea.vmem [#allocation13], 1
        %v2037 = vld [vmem:[%s2036] sm:$0x1]
        %s2038 = scalar_lea.vmem [#allocation14], 1
        %v2039 = vld [vmem:[%s2038] sm:$0x1]
        %v2040 = vsel %vm983, %v2035, 0.0
        %2041 = vadd.xlane.f32.xlu0 %v2040
        %v2042 = vpop.xlane.xlu0 %2041
        %v2043 = vmul.f32 %v2042, %v996
        %v2044 = vsub.f32 %v2035, %v2043
        %v2045 = vmul.f32 %v2044, %v2044
        %v2046 = vsel %vm983, %v2045, 0.0
        %2047 = vadd.xlane.f32.xlu0 %v2046
        %v2048 = vpop.xlane.xlu0 %2047
        %v2049 = vmul.f32 %v2048, %v996
        %v2050 = vadd.f32 %v2049, 1e-05
        %v2051 = vrsqrt.pop %v2050
        %v2052 = vmul.f32 %v2051, %v2050
        %v2053 = vmul.f32 %v2052, %v2051
        %v2054 = vmul.f32 0.5, %v2053
        %v2055 = vsub.f32 1.5, %v2054
        %v2056 = vmul.f32 %v2051, %v2055
        %vm2057 = vweird.f32 %v2050
        %vm2058 = vweird.f32 %v2051
        %vm2059 = vmor %vm2057, %vm2058
        %v2060 = vsel %vm2059, %v2051, %v2056
        %v2061 = vmul.f32 %v2044, %v2060
        %v2063 = vperm.slane %v2037, 0
        %v2065 = vmul.f32 %v2061, %v2063
        %v2067 = vperm.slane %v2039, 0
        %v2069 = vadd.f32 %v2065, %v2067
        %s2070 = scalar_lea.vmem %s16, 16
        %v2071 = vld [vmem:[%s2070] sm:$0xf]
        %v2072 = vld [vmem:[%s2070 + $0x4] sm:$0xf]
        %v2073 = vld [vmem:[%s2070 + $0x8] sm:$0xf]
        %v2074 = vld [vmem:[%s2070 + $0xc] sm:$0xf]
        %v2075 = vpack.c.bf16 %v2069, %v2069
        %s2076 = scalar_lea.vmem [#allocation16], 1
        %v2077 = vld [vmem:[%s2076] sm:$0x1]
        %v2079 = vperm.slane %v2077, 0
        %v2085 = vunpack.c.l.b16 %v2071
        %v2086 = vunpack.c.l.b16 %v2072
        %v2087 = vunpack.c.l.b16 %v2073
        %v2088 = vunpack.c.l.b16 %v2074
        %v2089 = vpack.c.b16 %v2086, %v2085
        %v2090 = vpack.c.b16 %v2088, %v2087
        %v2094 = vsel %vm983, %v2075, 0
        %2096 = vmatpush.bf16.msra.mxu0 0
        %2097 = vmatpush.bf16.msra.mxu0 0
        %2098 = vmatpush.bf16.msra.mxu0 0
        %2099 = vmatpush.bf16.msra.mxu0 0
        %2100 = vmatpush.bf16.msra.mxu0 0
        %2101 = vmatpush.bf16.msra.mxu0 0
        %2102 = vmatpush.bf16.msra.mxu0 %v2090
        %2103 = vmatpush.bf16.msra.mxu0 %v2089
        %2104 = vmatmul.bf16.gmra.mxu0 %v2094
        %v2105 = vpop.f32.mrf.mxu0
        %v2106 = vadd.f32 %v2079, %v2105
        %v2107 = vpop.f32.mrf.mxu0
        %2108 = vdwg.mxu0
        %v2109 = vmax.f32 %v2106, 0.0
        %s2110 = scalar_lea.vmem %s18, 32
        %v2111 = vld [vmem:[%s2110] sm:$0xf]
        %v2112 = vld [vmem:[%s2110 + $0x4] sm:$0xf]
        %v2113 = vld [vmem:[%s2110 + $0x8] sm:$0xf]
        %v2114 = vld [vmem:[%s2110 + $0xc] sm:$0xf]
        %v2115 = vld [vmem:[%s2110 + $0x10] sm:$0xf]
        %v2116 = vld [vmem:[%s2110 + $0x14] sm:$0xf]
        %v2117 = vld [vmem:[%s2110 + $0x18] sm:$0xf]
        %v2118 = vld [vmem:[%s2110 + $0x1c] sm:$0xf]
        %v2119 = vpack.c.bf16 %v2109, %v2109
        %s2120 = scalar_lea.vmem %s19, 1
        %v2121 = vld [vmem:[%s2120] sm:$0x1]
        %v2123 = vperm.slane %v2121, 0
        %v2133 = vunpack.c.l.b16 %v2111
        %v2134 = vunpack.c.l.b16 %v2112
        %v2135 = vunpack.c.l.b16 %v2113
        %v2136 = vunpack.c.l.b16 %v2114
        %v2137 = vunpack.c.l.b16 %v2115
        %v2138 = vunpack.c.l.b16 %v2116
        %v2139 = vunpack.c.l.b16 %v2117
        %v2140 = vunpack.c.l.b16 %v2118
        %v2141 = vpack.c.b16 %v2134, %v2133
        %v2142 = vpack.c.b16 %v2136, %v2135
        %v2143 = vpack.c.b16 %v2138, %v2137
        %v2144 = vpack.c.b16 %v2140, %v2139
        %v2150 = vsel %vm1610, %v2119, 0
        %2152 = vmatpush.bf16.msra.mxu0 0
        %2153 = vmatpush.bf16.msra.mxu0 0
        %2154 = vmatpush.bf16.msra.mxu0 0
        %2155 = vmatpush.bf16.msra.mxu0 0
        %2156 = vmatpush.bf16.msra.mxu0 %v2144
        %2157 = vmatpush.bf16.msra.mxu0 %v2143
        %2158 = vmatpush.bf16.msra.mxu0 %v2142
        %2159 = vmatpush.bf16.msra.mxu0 %v2141
        %2160 = vmatmul.bf16.gmra.mxu0 %v2150
        %v2161 = vpop.f32.mrf.mxu0
        %v2162 = vadd.f32 %v2123, %v2161
        %v2163 = vpop.f32.mrf.mxu0
        %2164 = vdwg.mxu0
        %v2165 = vadd.f32 %v2069, %v2162
        %s2166 = scalar_lea.vmem %s20, 1
        %v2167 = vld [vmem:[%s2166] sm:$0x1]
        %s2168 = scalar_lea.vmem [#allocation17], 1
        %v2169 = vld [vmem:[%s2168] sm:$0x1]
        %v2170 = vsel %vm983, %v2165, 0.0
        %2171 = vadd.xlane.f32.xlu0 %v2170
        %v2172 = vpop.xlane.xlu0 %2171
        %v2173 = vmul.f32 %v2172, %v996
        %v2174 = vsub.f32 %v2165, %v2173
        %v2175 = vmul.f32 %v2174, %v2174
        %v2176 = vsel %vm983, %v2175, 0.0
        %2177 = vadd.xlane.f32.xlu0 %v2176
        %v2178 = vpop.xlane.xlu0 %2177
        %v2179 = vmul.f32 %v2178, %v996
        %v2180 = vadd.f32 %v2179, 1e-05
        %v2181 = vrsqrt.pop %v2180
        %v2182 = vmul.f32 %v2181, %v2180
        %v2183 = vmul.f32 %v2182, %v2181
        %v2184 = vmul.f32 0.5, %v2183
        %v2185 = vsub.f32 1.5, %v2184
        %v2186 = vmul.f32 %v2181, %v2185
        %vm2187 = vweird.f32 %v2180
        %vm2188 = vweird.f32 %v2181
        %vm2189 = vmor %vm2187, %vm2188
        %v2190 = vsel %vm2189, %v2181, %v2186
        %v2191 = vmul.f32 %v2174, %v2190
        %v2193 = vperm.slane %v2167, 0
        %v2195 = vmul.f32 %v2191, %v2193
        %v2197 = vperm.slane %v2169, 0
        %v2199 = vadd.f32 %v2195, %v2197
        %v2200 = vld [vmem:[%s22] sm:$0xf]
        %v2201 = vld [vmem:[%s22 + $0x4] sm:$0xf]
        %v2202 = vld [vmem:[%s22 + $0x8] sm:$0xf]
        %v2203 = vld [vmem:[%s22 + $0xc] sm:$0xf]
        %v2204 = vpack.c.bf16 %v2199, %v2199
        %v2205 = vld [vmem:[%s23] sm:$0x1]
        %v2207 = vperm.slane %v2205, 0
        %v2213 = vunpack.c.l.b16 %v2200
        %v2214 = vunpack.c.l.b16 %v2201
        %v2215 = vunpack.c.l.b16 %v2202
        %v2216 = vunpack.c.l.b16 %v2203
        %v2217 = vpack.c.b16 %v2214, %v2213
        %v2218 = vpack.c.b16 %v2216, %v2215
        %v2222 = vsel %vm983, %v2204, 0
        %2224 = vmatpush.bf16.msra.mxu0 0
        %2225 = vmatpush.bf16.msra.mxu0 0
        %2226 = vmatpush.bf16.msra.mxu0 0
        %2227 = vmatpush.bf16.msra.mxu0 0
        %2228 = vmatpush.bf16.msra.mxu0 0
        %2229 = vmatpush.bf16.msra.mxu0 0
        %2230 = vmatpush.bf16.msra.mxu0 %v2218
        %2231 = vmatpush.bf16.msra.mxu0 %v2217
        %2232 = vmatmul.bf16.gmra.mxu0 %v2222
        %v2233 = vpop.f32.mrf.mxu0
        %v2234 = vadd.f32 %v2207, %v2233
        %v2235 = vpop.f32.mrf.mxu0
        %2236 = vdwg.mxu0
        %v2237 = vmax.f32 %v2234, 0.0
        %v2238 = vld [vmem:[%s24] sm:$0xf]
        %v2239 = vld [vmem:[%s24 + $0x4] sm:$0xf]
        %v2240 = vpack.c.bf16 %v2237, %v2237
        %v2241 = vld [vmem:[%s25] sm:$0x1]
        %v2243 = vperm.slane %v2241, 0
        %v2247 = vunpack.c.l.b16 %v2238
        %v2248 = vunpack.c.l.b16 %v2239
        %v2249 = vpack.c.b16 %v2248, %v2247
        %v2252 = vsel %vm1061, %v2240, 0
        %2254 = vmatpush.bf16.msra.mxu0 0
        %2255 = vmatpush.bf16.msra.mxu0 0
        %2256 = vmatpush.bf16.msra.mxu0 0
        %2257 = vmatpush.bf16.msra.mxu0 0
        %2258 = vmatpush.bf16.msra.mxu0 0
        %2259 = vmatpush.bf16.msra.mxu0 0
        %2260 = vmatpush.bf16.msra.mxu0 0
        %2261 = vmatpush.bf16.msra.mxu0 %v2249
        %2262 = vmatmul.bf16.gmra.mxu0 %v2252
        %v2263 = vpop.f32.mrf.mxu0
        %v2264 = vadd.f32 %v2243, %v2263
        %v2265 = vpop.f32.mrf.mxu0
        %2266 = vdwg.mxu0
        %2267 = vst [vmem:[%s942] sm:$0xff] %v2264
        %s2268 = sand.u32 %s605, 1
        %s2269 = scalar_lea.sflag [#allocation4], %s2268
        %s2270 = sand.u32 %s605, 1
        %s2271 = smul.addr %s2270, 8
        %s2272 = scalar_lea.vmem [#allocation19], %s2271
        // Predicated region
        $region165: #{tpu_custom_call.1} parent=123 // pred_check
          %p2273 = pneg %p615
        $region166: #{tpu_custom_call.1} parent=123 // pred_check_branch
          %2275 = sbr.rel (%p2273) target = $region168
        $region167: #{tpu_custom_call.1} parent=123 // pred_region
          %2277 = vsyncadd %s2269, 0
          %s2278 = smul.addr %s46, 8
          %s2279 = scalar_lea.hbm %s26, %s2278
          %s2281 = sshll.u32 %s2272, 4
          %s2282 = int_to_ptr.vmem [resolvable:$true] %s2281
          %s2283 = sshll.u32 %s2279, 4
          %s2284 = int_to_ptr.hbm [resolvable:$true] %s2283
          %2286 = dma.vmem_to_hbm [thread:$0]  %s2282, 128, %s2284, %s2269
        $region168: #{tpu_custom_call.1} parent=123 // pred_fallthru
          _
      $region124: #{tpu_custom_call.1} parent=5 // pred_fallthru
        _
      %p2287 = scmp.le.s32.totalorder 2, %s41
      // Predicated region
      $region169: #{tpu_custom_call.1} parent=5 // pred_check
        %p2288 = pneg %p2287
      $region170: #{tpu_custom_call.1} parent=5 // pred_check_branch
        %2290 = sbr.rel (%p2288) target = $region172
      $region171: #{tpu_custom_call.1} parent=5 // pred_region
        %s2291 = ssub.s32 %s41, 2
        // Predicated region
        $region173: #{tpu_custom_call.1} parent=171 // pred_check
          %p2292 = pneg %p621
        $region174: #{tpu_custom_call.1} parent=171 // pred_check_branch
          %2294 = sbr.rel (%p2292) target = $region176
        $region175: #{tpu_custom_call.1} parent=171 // pred_region
          %s2295 = sand.u32 %s606, 1
          %s2296 = scalar_lea.sflag [#allocation4], %s2295
          %s2297 = sand.u32 %s606, 1
          %s2298 = smul.addr %s2297, 8
          %s2299 = scalar_lea.vmem [#allocation19], %s2298
          %2301 = dma.done %s2296, 128
        $region176: #{tpu_custom_call.1} parent=171 // pred_fallthru
          _
      $region172: #{tpu_custom_call.1} parent=5 // pred_fallthru
        _
    $region6: #{tpu_custom_call.1} parent=1 // loop_footer
      %s45 = sadd.s32 1, %s41
    $region7: #{tpu_custom_call.1} parent=1 // loop_footer_branch
      %40 = sbr.rel target = $region3
    $region8: #{tpu_custom_call.1} parent=1 // loop_exit
      _
    %2302 = vsyncpa [#allocation3], 1
    %s2303 = scalar_lea.sflag [#allocation3], 1
    %2304 = vsyncpa %s2303, 1
    %2305 = vsyncpa [#allocation6], 1
    %2306 = vsyncpa [#allocation9], 1
    %2307 = vsyncpa [#allocation12], 1
    %2308 = vsyncpa [#allocation15], 1
    %2309 = vsyncpa [#allocation18], 1
    %2310 = vsyncpa [#allocation4], 1
    %s2311 = scalar_lea.sflag [#allocation4], 1
    %2312 = vsyncpa %s2311, 1

</llo_original>
